<compile_context>
chip_gen: v6e
topology: v6e:2x2x1
jax: 0.10.0
libtpu: 0.0.40
codegen_flags: <defaults>
</compile_context>

<pallas_src>
import functools

import jax
import jax.numpy as jnp
from jax.experimental import pallas as pl
from jax.experimental.pallas import tpu as pltpu

LRELU_SLOPE = 0.2
IN_EPS = 1e-5

_MAX_TM = 512                    # row tile for the generic matmul path
_MAX_TK = 512                    # contraction tile (multiple of 256 -> full v6e/v7x MXU width)
_MAX_TN = 256                    # output-channel tile
_FUSED_VMEM_CUTOFF = 24 * 1024 * 1024


def _vmem_limit(est_bytes):
    # explicit scoped-VMEM budget: tiles + headroom, capped to stay safe on v7x (64 MiB physical)
    return int(min(max(est_bytes + (4 << 20), 16 << 20), 32 << 20))


# --------------------------------------------------------------------------------------
# Pallas kernels
# --------------------------------------------------------------------------------------
def _conv_mm_kernel(p_ref, w_ref, b_ref, o_ref, acc_ref, *, apply_lrelu):
    """One (tm, tn) output tile: accumulate bf16 matmuls over K tiles into an f32 scratch
    accumulator; bias (+ optional LeakyReLU) epilogue on the last K step."""
    @pl.when(pl.program_id(2) == 0)
    def _init():
        acc_ref[...] = jnp.zeros_like(acc_ref)

    acc_ref[...] += jnp.dot(p_ref[...], w_ref[...], preferred_element_type=jnp.float32)

    @pl.when(pl.program_id(2) == pl.num_programs(2) - 1)
    def _epilogue():
        out = acc_ref[...] + b_ref[...]
        if apply_lrelu:
            out = jnp.where(out >= 0.0, out, LRELU_SLOPE * out)
        o_ref[...] = out.astype(o_ref.dtype)


def _conv_in_lrelu_kernel(p_ref, w_ref, o_ref, acc_ref):
    """Fused Conv + InstanceNorm2d(affine=False) + LeakyReLU for one (sample, OC-tile).

    p_ref: (OHW, tk) bf16 patches of one sample; w_ref: (tk, tn) bf16; o_ref: (OHW, tn).
    The full-spatial f32 accumulator lives in scratch so per-channel spatial statistics can be
    computed in the epilogue (sublane/XLU reduction).  The conv bias is omitted on purpose: a
    per-channel constant cancels exactly under the instance-norm mean subtraction."""
    @pl.when(pl.program_id(2) == 0)
    def _init():
        acc_ref[...] = jnp.zeros_like(acc_ref)

    acc_ref[...] += jnp.dot(p_ref[...], w_ref[...], preferred_element_type=jnp.float32)

    @pl.when(pl.program_id(2) == pl.num_programs(2) - 1)
    def _epilogue():
        acc = acc_ref[...]
        mean = jnp.mean(acc, axis=0, keepdims=True)
        xc = acc - mean
        var = jnp.mean(xc * xc, axis=0, keepdims=True)        # biased variance (PyTorch InstanceNorm)
        y = xc * jax.lax.rsqrt(var + IN_EPS)
        o_ref[...] = jnp.where(y >= 0.0, y, LRELU_SLOPE * y).astype(o_ref.dtype)


def _inorm_lrelu_kernel(x_ref, o_ref):
    """Standalone InstanceNorm + LeakyReLU fallback; block (HW, C) with lane-dense C."""
    x = x_ref[...].astype(jnp.float32)
    mean = jnp.mean(x, axis=0, keepdims=True)
    xc = x - mean
    var = jnp.mean(xc * xc, axis=0, keepdims=True)
    y = xc * jax.lax.rsqrt(var + IN_EPS)
    o_ref[...] = jnp.where(y >= 0.0, y, LRELU_SLOPE * y).astype(o_ref.dtype)


# --------------------------------------------------------------------------------------
# Glue: im2col (NHWC), weight reshape, tile selection
# --------------------------------------------------------------------------------------
def _im2col_nhwc(x, k, stride, pad):
    """x: (N, H, W, C) -> bf16 patches (N, OH, OW, k*k*C); flatten order (kh, kw, c), matching
    weight.transpose(2, 3, 1, 0).reshape(k*k*C_in, OC)."""
    N, H, W, C = x.shape
    xp = jnp.pad(x, ((0, 0), (pad, pad), (pad, pad), (0, 0))).astype(jnp.bfloat16)
    OH = (H + 2 * pad - k) // stride + 1
    OW = (W + 2 * pad - k) // stride + 1
    cols = []
    for kh in range(k):
        for kw in range(k):
            cols.append(xp[:, kh:kh + stride * OH:stride, kw:kw + stride * OW:stride, :])
    col = jnp.stack(cols, axis=3)                  # (N, OH, OW, k*k, C)
    col = col.reshape(N, OH, OW, k * k * C)
    return col, OH, OW


def _reshape_weight(w):
    OC, IC, KH, KW = w.shape
    return jnp.transpose(w, (2, 3, 1, 0)).reshape(KH * KW * IC, OC).astype(jnp.bfloat16)


def _pick_tiles(M, K, OC):
    tm = M if M <= _MAX_TM else _MAX_TM
    tk = _MAX_TK if K % _MAX_TK == 0 else K        # keep K exactly tiled (reduction axis)
    tn = min(OC, _MAX_TN)
    if OC % tn != 0:
        tn = OC
    return tm, tk, tn


# --------------------------------------------------------------------------------------
# pallas_call wrappers
# --------------------------------------------------------------------------------------
def _conv_matmul(patches, w2, b2, *, apply_lrelu, out_dtype):
    """(M, K) bf16 @ (K, OC) bf16 + bias, optional fused LeakyReLU.  Tiled MXU matmul."""
    M, K = patches.shape
    OC = w2.shape[1]
    tm, tk, tn = _pick_tiles(M, K, OC)
    grid = (pl.cdiv(M, tm), pl.cdiv(OC, tn), K // tk)
    out_bytes = jnp.dtype(out_dtype).itemsize

    est = (2 * (tm * tk + tk * tn) * 2            # double-buffered bf16 inputs
           + 2 * tm * tn * out_bytes              # double-buffered output
           + tm * tn * 4                          # f32 accumulator
           + 2 * tn * 4)                          # bias
    kern = functools.partial(_conv_mm_kernel, apply_lrelu=apply_lrelu)
    return pl.pallas_call(
        kern,
        out_shape=jax.ShapeDtypeStruct((M, OC), out_dtype),
        grid_spec=pltpu.PrefetchScalarGridSpec(
            num_scalar_prefetch=0,
            grid=grid,
            in_specs=[
                pl.BlockSpec((tm, tk), lambda i, j, k: (i, k)),
                pl.BlockSpec((tk, tn), lambda i, j, k: (k, j)),
                pl.BlockSpec((1, tn), lambda i, j, k: (0, j)),
            ],
            out_specs=pl.BlockSpec((tm, tn), lambda i, j, k: (i, j)),
            scratch_shapes=[pltpu.VMEM((tm, tn), jnp.float32)],
        ),
        compiler_params=pltpu.CompilerParams(
            dimension_semantics=("parallel", "parallel", "arbitrary"),
            vmem_limit_bytes=_vmem_limit(est),
        ),
    )(patches, w2, b2)


def _instance_norm_lrelu(x, *, out_dtype):
    """Fallback: x (N, HW, C) -> per-(sample, channel) InstanceNorm over HW + LeakyReLU."""
    N, HW, C = x.shape
    est = 2 * HW * C * (4 + jnp.dtype(out_dtype).itemsize)
    return pl.pallas_call(
        _inorm_lrelu_kernel,
        out_shape=jax.ShapeDtypeStruct((N, HW, C), out_dtype),
        grid_spec=pltpu.PrefetchScalarGridSpec(
            num_scalar_prefetch=0,
            grid=(N,),
            in_specs=[pl.BlockSpec((None, HW, C), lambda n: (n, 0, 0))],
            out_specs=pl.BlockSpec((None, HW, C), lambda n: (n, 0, 0)),
        ),
        compiler_params=pltpu.CompilerParams(
            dimension_semantics=("parallel",),
            vmem_limit_bytes=_vmem_limit(est),
        ),
    )(x)


def conv2d_lrelu(x, w, b, *, stride, pad, apply_lrelu=True, out_dtype=jnp.bfloat16):
    """Conv2d on NHWC input + optional fused LeakyReLU (no norm)."""
    N = x.shape[0]
    OC = w.shape[0]
    col, OH, OW = _im2col_nhwc(x, w.shape[2], stride, pad)
    K = col.shape[-1]
    out = _conv_matmul(col.reshape(N * OH * OW, K), _reshape_weight(w),
                       b.reshape(1, OC).astype(jnp.float32),
                       apply_lrelu=apply_lrelu, out_dtype=out_dtype)
    return out.reshape(N, OH, OW, OC)


def conv2d_in_lrelu(x, w, b, *, stride, pad, out_dtype=jnp.bfloat16):
    """Conv2d + InstanceNorm2d(affine=False) + LeakyReLU(0.2), fused into one kernel whenever
    a whole sample's spatial extent fits in VMEM; otherwise tiled conv + standalone norm.
    The conv bias is mathematically a no-op under instance normalization and is elided."""
    N = x.shape[0]
    OC = w.shape[0]
    col, OH, OW = _im2col_nhwc(x, w.shape[2], stride, pad)
    K = col.shape[-1]
    OHW = OH * OW
    w2 = _reshape_weight(w)

    tk = _MAX_TK if K % _MAX_TK == 0 else K
    tn = min(OC, _MAX_TN)
    if OC % tn != 0:
        tn = OC
    out_bytes = jnp.dtype(out_dtype).itemsize
    fused_est = (2 * OHW * tk * 2 + 2 * tk * tn * 2       # double-buffered bf16 inputs
                 + 2 * OHW * tn * out_bytes               # double-buffered output
                 + OHW * tn * 4)                          # f32 accumulator

    if fused_est > _FUSED_VMEM_CUTOFF:
        # bias still passed but cancels exactly under the mean subtraction below
        y = _conv_matmul(col.reshape(N * OHW, K), w2,
                         b.reshape(1, OC).astype(jnp.float32),
                         apply_lrelu=False, out_dtype=jnp.float32)
        y = _instance_norm_lrelu(y.reshape(N, OHW, OC), out_dtype=out_dtype)
        return y.reshape(N, OH, OW, OC)

    patches = col.reshape(N, OHW, K)
    out = pl.pallas_call(
        _conv_in_lrelu_kernel,
        out_shape=jax.ShapeDtypeStruct((N, OHW, OC), out_dtype),
        grid_spec=pltpu.PrefetchScalarGridSpec(
            num_scalar_prefetch=0,
            grid=(N, pl.cdiv(OC, tn), K // tk),
            in_specs=[
                pl.BlockSpec((None, OHW, tk), lambda n, j, k: (n, 0, k)),
                pl.BlockSpec((tk, tn), lambda n, j, k: (k, j)),
            ],
            out_specs=pl.BlockSpec((None, OHW, tn), lambda n, j, k: (n, 0, j)),
            scratch_shapes=[pltpu.VMEM((OHW, tn), jnp.float32)],
        ),
        compiler_params=pltpu.CompilerParams(
            dimension_semantics=("parallel", "parallel", "arbitrary"),
            vmem_limit_bytes=_vmem_limit(fused_est),
        ),
    )(patches, w2)
    return out.reshape(N, OH, OW, OC)


def conv2d_final(x, w, b, *, stride, pad):
    """Final Conv2d with OC=1: pad OC to 128 so the matmul output is lane-dense, then slice
    channel 0 (padded weights/bias are zero, so the result is exact).  Output stays float32."""
    OC = w.shape[0]
    oc_pad = max(128, OC)
    w_p = jnp.zeros((oc_pad,) + w.shape[1:], w.dtype).at[:OC].set(w)
    b_p = jnp.zeros((oc_pad,), b.dtype).at[:OC].set(b)
    y = conv2d_lrelu(x, w_p, b_p, stride=stride, pad=pad, apply_lrelu=False,
                     out_dtype=jnp.float32)
    return y[..., :OC]


# --------------------------------------------------------------------------------------
# Model: parameters + forward pass
# --------------------------------------------------------------------------------------
def init_params(key, input_channels=3):
    """Deterministic synthetic init (same shapes as the PyTorch module)."""
    specs = [
        (64, input_channels, 4),
        (128, 64, 4),
        (256, 128, 4),
        (512, 256, 4),
        (1, 512, 4),
    ]
    params = []
    for oc, ic, k in specs:
        key, kw, kb = jax.random.split(key, 3)
        fan_in = ic * k * k
        bound = 1.0 / (fan_in ** 0.5)
        w = jax.random.uniform(kw, (oc, ic, k, k), jnp.float32, -bound, bound)
        b = jax.random.uniform(kb, (oc,), jnp.float32, -bound, bound)
        params.append((w, b))
    return params


def discriminator_forward(params, x):
    """x: (N, C, H, W) float32 (PyTorch NCHW convention); returns (N, 1, OH, OW) float32."""
    (w1, b1), (w2, b2), (w3, b3), (w4, b4), (w5, b5) = params
    h = jnp.transpose(x, (0, 2, 3, 1))                    # NCHW -> NHWC once

    h = conv2d_lrelu(h, w1, b1, stride=2, pad=1)          # Conv(3->64, s2) + LeakyReLU
    h = conv2d_in_lrelu(h, w2, b2, stride=2, pad=1)       # Conv(64->128, s2) + IN + LReLU
    h = conv2d_in_lrelu(h, w3, b3, stride=2, pad=1)       # Conv(128->256, s2) + IN + LReLU
    h = conv2d_in_lrelu(h, w4, b4, stride=1, pad=1)       # Conv(256->512, s1) + IN + LReLU
    h = conv2d_final(h, w5, b5, stride=1, pad=1)          # Conv(512->1, s1)
    return jnp.transpose(h, (0, 3, 1, 2))                 # back to NCHW


if __name__ == "__main__":
    key = jax.random.PRNGKey(0)
    kp, kx = jax.random.split(key)

    params = init_params(kp, input_channels=3)
    # 32x32 is the smallest spatial size that survives all 5 convs (-> output (N, 1, 2, 2)).
    x = jax.random.normal(kx, (2, 3, 32, 32), dtype=jnp.float32)

    fwd = jax.jit(discriminator_forward)
    out = fwd(params, x)
    jax.block_until_ready(out)

    assert out.shape == (2, 1, 2, 2), out.shape
    assert out.dtype == jnp.float32, out.dtype
    assert bool(jnp.all(jnp.isfinite(out))), "non-finite output"
    print("KERNEL_OK")
</pallas_src>

<mosaic_0001>
module attributes {stable_mosaic.version = 11 : i64} {
  func.func @_conv_mm_kernel(%arg0: i32, %arg1: i32, %arg2: i32, %arg3: memref<512x48xbf16, #tpu.memory_space<vmem>>, %arg4: memref<48x64xbf16, #tpu.memory_space<vmem>>, %arg5: memref<1x64xf32, #tpu.memory_space<vmem>>, %arg6: memref<512x64xbf16, #tpu.memory_space<vmem>>, %arg7: memref<512x64xf32, #tpu.memory_space<vmem>>) attributes {dimension_semantics = [#tpu.dimension_semantics<parallel>, #tpu.dimension_semantics<parallel>, #tpu.dimension_semantics<arbitrary>], iteration_bounds = array<i64: 1, 1, 1>, scalar_prefetch = 0 : i64, scratch_operands = 1 : i64, tpu.core_type = #tpu.core_type<tc>, window_params = [{transform_indices = @transform_0, window_bounds = array<i64: 512, 48>}, {transform_indices = @transform_1, window_bounds = array<i64: 48, 64>}, {transform_indices = @transform_2, window_bounds = array<i64: 1, 64>}, {transform_indices = @transform_3, window_bounds = array<i64: 512, 64>}]} {
    %c0_i32 = arith.constant 0 : i32
    %0 = arith.cmpi eq, %arg2, %c0_i32 : i32
    %1 = arith.extui %0 : i1 to i32
    %c0_i32_0 = arith.constant 0 : i32
    %2 = arith.cmpi ne, %1, %c0_i32_0 : i32
    scf.if %2 {
      %cst_10 = arith.constant 0.000000e+00 : f32
      %12 = vector.broadcast %cst_10 : f32 to vector<512x64xf32>
      %c0_11 = arith.constant 0 : index
      %c0_12 = arith.constant 0 : index
      %13 = vector.load %arg7[%c0_11, %c0_12] : memref<512x64xf32, #tpu.memory_space<vmem>>, vector<512x64xf32>
      tpu.vector_store %arg7[%c0_11, %c0_12], %12 {strides = array<i32>} : memref<512x64xf32, #tpu.memory_space<vmem>>, vector<512x64xf32>,
    } else {
    }
    %c0 = arith.constant 0 : index
    %c0_1 = arith.constant 0 : index
    %3 = vector.load %arg7[%c0, %c0_1] : memref<512x64xf32, #tpu.memory_space<vmem>>, vector<512x64xf32>
    %c0_2 = arith.constant 0 : index
    %c0_3 = arith.constant 0 : index
    %4 = vector.load %arg3[%c0_2, %c0_3] : memref<512x48xbf16, #tpu.memory_space<vmem>>, vector<512x48xbf16>
    %c0_4 = arith.constant 0 : index
    %c0_5 = arith.constant 0 : index
    %5 = vector.load %arg4[%c0_4, %c0_5] : memref<48x64xbf16, #tpu.memory_space<vmem>>, vector<48x64xbf16>
    %cst = arith.constant dense<0.000000e+00> : vector<512x64xf32>
    %6 = tpu.matmul %4, %5, %cst {dimension_numbers = #tpu.dot_dimension_numbers<[1], [0], [0], [1], [0, 0, 1, 1], [], []>} : vector<512x48xbf16>, vector<48x64xbf16>, vector<512x64xf32> -> vector<512x64xf32>
    %7 = arith.addf %3, %6 : vector<512x64xf32>
    %c0_6 = arith.constant 0 : index
    %c0_7 = arith.constant 0 : index
    %8 = vector.load %arg7[%c0_6, %c0_7] : memref<512x64xf32, #tpu.memory_space<vmem>>, vector<512x64xf32>
    tpu.vector_store %arg7[%c0_6, %c0_7], %7 {strides = array<i32>} : memref<512x64xf32, #tpu.memory_space<vmem>>, vector<512x64xf32>,
    %c0_i32_8 = arith.constant 0 : i32
    %9 = arith.cmpi eq, %arg2, %c0_i32_8 : i32
    %10 = arith.extui %9 : i1 to i32
    %c0_i32_9 = arith.constant 0 : i32
    %11 = arith.cmpi ne, %10, %c0_i32_9 : i32
    scf.if %11 {
      %c0_10 = arith.constant 0 : index
      %c0_11 = arith.constant 0 : index
      %12 = vector.load %arg7[%c0_10, %c0_11] : memref<512x64xf32, #tpu.memory_space<vmem>>, vector<512x64xf32>
      %c0_12 = arith.constant 0 : index
      %c0_13 = arith.constant 0 : index
      %13 = vector.load %arg5[%c0_12, %c0_13] : memref<1x64xf32, #tpu.memory_space<vmem>>, vector<1x64xf32>
      %14 = vector.broadcast %13 : vector<1x64xf32> to vector<512x64xf32>
      %15 = arith.addf %12, %14 : vector<512x64xf32>
      %cst_14 = arith.constant 0.000000e+00 : f32
      %16 = vector.broadcast %cst_14 : f32 to vector<512x64xf32>
      %17 = arith.cmpf oge, %15, %16 : vector<512x64xf32>
      %cst_15 = arith.constant 2.000000e-01 : f32
      %18 = vector.broadcast %cst_15 : f32 to vector<512x64xf32>
      %19 = arith.mulf %18, %15 : vector<512x64xf32>
      %20 = arith.select %17, %15, %19 : vector<512x64xi1>, vector<512x64xf32>
      %21 = arith.truncf %20 : vector<512x64xf32> to vector<512x64xbf16>
      %c0_16 = arith.constant 0 : index
      %c0_17 = arith.constant 0 : index
      %22 = vector.load %arg6[%c0_16, %c0_17] : memref<512x64xbf16, #tpu.memory_space<vmem>>, vector<512x64xbf16>
      tpu.vector_store %arg6[%c0_16, %c0_17], %21 {strides = array<i32>} : memref<512x64xbf16, #tpu.memory_space<vmem>>, vector<512x64xbf16>,
    } else {
    }
    return
  }
  func.func @transform_0(%arg0: i32, %arg1: i32, %arg2: i32) -> (i32, i32) {
    %c0_i32 = arith.constant 0 : i32
    return %arg0, %arg2 : i32, i32
  }
  func.func @transform_1(%arg0: i32, %arg1: i32, %arg2: i32) -> (i32, i32) {
    %c0_i32 = arith.constant 0 : i32
    return %arg2, %arg1 : i32, i32
  }
  func.func @transform_2(%arg0: i32, %arg1: i32, %arg2: i32) -> (i32, i32) {
    %c0_i32 = arith.constant 0 : i32
    %c0_i32_0 = arith.constant 0 : i32
    return %c0_i32, %arg1 : i32, i32
  }
  func.func @transform_3(%arg0: i32, %arg1: i32, %arg2: i32) -> (i32, i32) {
    %c0_i32 = arith.constant 0 : i32
    return %arg0, %arg1 : i32, i32
  }
}

module attributes {stable_mosaic.version = 11 : i64} {
  func.func @_conv_in_lrelu_kernel(%arg0: i32, %arg1: i32, %arg2: i32, %arg3: memref<1x64x512xbf16, #tpu.memory_space<vmem>>, %arg4: memref<512x128xbf16, #tpu.memory_space<vmem>>, %arg5: memref<1x64x128xbf16, #tpu.memory_space<vmem>>, %arg6: memref<64x128xf32, #tpu.memory_space<vmem>>) attributes {dimension_semantics = [#tpu.dimension_semantics<parallel>, #tpu.dimension_semantics<parallel>, #tpu.dimension_semantics<arbitrary>], iteration_bounds = array<i64: 2, 1, 2>, scalar_prefetch = 0 : i64, scratch_operands = 1 : i64, tpu.core_type = #tpu.core_type<tc>, window_params = [{transform_indices = @transform_0, window_bounds = array<i64: 1, 64, 512>}, {transform_indices = @transform_1, window_bounds = array<i64: 512, 128>}, {transform_indices = @transform_2, window_bounds = array<i64: 1, 64, 128>}]} {
    %c0_i32 = arith.constant 0 : i32
    %0 = arith.cmpi eq, %arg2, %c0_i32 : i32
    %1 = arith.extui %0 : i1 to i32
    %c0_i32_0 = arith.constant 0 : i32
    %2 = arith.cmpi ne, %1, %c0_i32_0 : i32
    scf.if %2 {
      %cst_10 = arith.constant 0.000000e+00 : f32
      %13 = vector.broadcast %cst_10 : f32 to vector<64x128xf32>
      %c0_11 = arith.constant 0 : index
      %c0_12 = arith.constant 0 : index
      %14 = vector.load %arg6[%c0_11, %c0_12] : memref<64x128xf32, #tpu.memory_space<vmem>>, vector<64x128xf32>
      tpu.vector_store %arg6[%c0_11, %c0_12], %13 {strides = array<i32>} : memref<64x128xf32, #tpu.memory_space<vmem>>, vector<64x128xf32>,
    } else {
    }
    %c0 = arith.constant 0 : index
    %c0_1 = arith.constant 0 : index
    %3 = vector.load %arg6[%c0, %c0_1] : memref<64x128xf32, #tpu.memory_space<vmem>>, vector<64x128xf32>
    %c0_2 = arith.constant 0 : index
    %c0_3 = arith.constant 0 : index
    %c0_4 = arith.constant 0 : index
    %4 = vector.load %arg3[%c0_2, %c0_3, %c0_4] : memref<1x64x512xbf16, #tpu.memory_space<vmem>>, vector<1x64x512xbf16>
    %5 = vector.shape_cast %4 : vector<1x64x512xbf16> to vector<64x512xbf16>
    %c0_5 = arith.constant 0 : index
    %c0_6 = arith.constant 0 : index
    %6 = vector.load %arg4[%c0_5, %c0_6] : memref<512x128xbf16, #tpu.memory_space<vmem>>, vector<512x128xbf16>
    %cst = arith.constant dense<0.000000e+00> : vector<64x128xf32>
    %7 = tpu.matmul %5, %6, %cst {dimension_numbers = #tpu.dot_dimension_numbers<[1], [0], [0], [1], [0, 0, 1, 1], [], []>} : vector<64x512xbf16>, vector<512x128xbf16>, vector<64x128xf32> -> vector<64x128xf32>
    %8 = arith.addf %3, %7 : vector<64x128xf32>
    %c0_7 = arith.constant 0 : index
    %c0_8 = arith.constant 0 : index
    %9 = vector.load %arg6[%c0_7, %c0_8] : memref<64x128xf32, #tpu.memory_space<vmem>>, vector<64x128xf32>
    tpu.vector_store %arg6[%c0_7, %c0_8], %8 {strides = array<i32>} : memref<64x128xf32, #tpu.memory_space<vmem>>, vector<64x128xf32>,
    %c1_i32 = arith.constant 1 : i32
    %10 = arith.cmpi eq, %arg2, %c1_i32 : i32
    %11 = arith.extui %10 : i1 to i32
    %c0_i32_9 = arith.constant 0 : i32
    %12 = arith.cmpi ne, %11, %c0_i32_9 : i32
    scf.if %12 {
      %c0_10 = arith.constant 0 : index
      %c0_11 = arith.constant 0 : index
      %13 = vector.load %arg6[%c0_10, %c0_11] : memref<64x128xf32, #tpu.memory_space<vmem>>, vector<64x128xf32>
      %cst_12 = arith.constant dense<0.000000e+00> : vector<128xf32>
      %14 = vector.multi_reduction <add>, %13, %cst_12 [0] : vector<64x128xf32> to vector<128xf32>
      %15 = vector.shape_cast %14 : vector<128xf32> to vector<1x128xf32>
      %cst_13 = arith.constant 6.400000e+01 : f32
      %16 = vector.broadcast %cst_13 : f32 to vector<1x128xf32>
      %17 = arith.divf %15, %16 : vector<1x128xf32>
      %18 = vector.broadcast %17 : vector<1x128xf32> to vector<64x128xf32>
      %19 = arith.subf %13, %18 : vector<64x128xf32>
      %20 = arith.mulf %19, %19 : vector<64x128xf32>
      %cst_14 = arith.constant dense<0.000000e+00> : vector<128xf32>
      %21 = vector.multi_reduction <add>, %20, %cst_14 [0] : vector<64x128xf32> to vector<128xf32>
      %22 = vector.shape_cast %21 : vector<128xf32> to vector<1x128xf32>
      %cst_15 = arith.constant 6.400000e+01 : f32
      %23 = vector.broadcast %cst_15 : f32 to vector<1x128xf32>
      %24 = arith.divf %22, %23 : vector<1x128xf32>
      %cst_16 = arith.constant 9.99999974E-6 : f32
      %25 = vector.broadcast %cst_16 : f32 to vector<1x128xf32>
      %26 = arith.addf %24, %25 : vector<1x128xf32>
      %27 = math.rsqrt %26 : vector<1x128xf32>
      %28 = vector.broadcast %27 : vector<1x128xf32> to vector<64x128xf32>
      %29 = arith.mulf %19, %28 : vector<64x128xf32>
      %cst_17 = arith.constant 0.000000e+00 : f32
      %30 = vector.broadcast %cst_17 : f32 to vector<64x128xf32>
      %31 = arith.cmpf oge, %29, %30 : vector<64x128xf32>
      %cst_18 = arith.constant 2.000000e-01 : f32
      %32 = vector.broadcast %cst_18 : f32 to vector<64x128xf32>
      %33 = arith.mulf %32, %29 : vector<64x128xf32>
      %34 = arith.select %31, %29, %33 : vector<64x128xi1>, vector<64x128xf32>
      %35 = arith.truncf %34 : vector<64x128xf32> to vector<64x128xbf16>
      %c0_19 = arith.constant 0 : index
      %c0_20 = arith.constant 0 : index
      %c0_21 = arith.constant 0 : index
      %36 = vector.load %arg5[%c0_19, %c0_20, %c0_21] : memref<1x64x128xbf16, #tpu.memory_space<vmem>>, vector<1x64x128xbf16>
      %37 = vector.shape_cast %36 : vector<1x64x128xbf16> to vector<64x128xbf16>
      %38 = vector.shape_cast %35 : vector<64x128xbf16> to vector<1x64x128xbf16>
      tpu.vector_store %arg5[%c0_19, %c0_20, %c0_21], %38 {strides = array<i32>} : memref<1x64x128xbf16, #tpu.memory_space<vmem>>, vector<1x64x128xbf16>,
    } else {
    }
    return
  }
  func.func @transform_0(%arg0: i32, %arg1: i32, %arg2: i32) -> (i32, i32, i32) {
    %c0_i32 = arith.constant 0 : i32
    %c0_i32_0 = arith.constant 0 : i32
    return %arg0, %c0_i32, %arg2 : i32, i32, i32
  }
  func.func @transform_1(%arg0: i32, %arg1: i32, %arg2: i32) -> (i32, i32) {
    %c0_i32 = arith.constant 0 : i32
    return %arg2, %arg1 : i32, i32
  }
  func.func @transform_2(%arg0: i32, %arg1: i32, %arg2: i32) -> (i32, i32, i32) {
    %c0_i32 = arith.constant 0 : i32
    %c0_i32_0 = arith.constant 0 : i32
    return %arg0, %c0_i32, %arg1 : i32, i32, i32
  }
}

module attributes {stable_mosaic.version = 11 : i64} {
  func.func @_conv_in_lrelu_kernel(%arg0: i32, %arg1: i32, %arg2: i32, %arg3: memref<1x16x512xbf16, #tpu.memory_space<vmem>>, %arg4: memref<512x256xbf16, #tpu.memory_space<vmem>>, %arg5: memref<1x16x256xbf16, #tpu.memory_space<vmem>>, %arg6: memref<16x256xf32, #tpu.memory_space<vmem>>) attributes {dimension_semantics = [#tpu.dimension_semantics<parallel>, #tpu.dimension_semantics<parallel>, #tpu.dimension_semantics<arbitrary>], iteration_bounds = array<i64: 2, 1, 4>, scalar_prefetch = 0 : i64, scratch_operands = 1 : i64, tpu.core_type = #tpu.core_type<tc>, window_params = [{transform_indices = @transform_0, window_bounds = array<i64: 1, 16, 512>}, {transform_indices = @transform_1, window_bounds = array<i64: 512, 256>}, {transform_indices = @transform_2, window_bounds = array<i64: 1, 16, 256>}]} {
    %c0_i32 = arith.constant 0 : i32
    %0 = arith.cmpi eq, %arg2, %c0_i32 : i32
    %1 = arith.extui %0 : i1 to i32
    %c0_i32_0 = arith.constant 0 : i32
    %2 = arith.cmpi ne, %1, %c0_i32_0 : i32
    scf.if %2 {
      %cst_10 = arith.constant 0.000000e+00 : f32
      %13 = vector.broadcast %cst_10 : f32 to vector<16x256xf32>
      %c0_11 = arith.constant 0 : index
      %c0_12 = arith.constant 0 : index
      %14 = vector.load %arg6[%c0_11, %c0_12] : memref<16x256xf32, #tpu.memory_space<vmem>>, vector<16x256xf32>
      tpu.vector_store %arg6[%c0_11, %c0_12], %13 {strides = array<i32>} : memref<16x256xf32, #tpu.memory_space<vmem>>, vector<16x256xf32>,
    } else {
    }
    %c0 = arith.constant 0 : index
    %c0_1 = arith.constant 0 : index
    %3 = vector.load %arg6[%c0, %c0_1] : memref<16x256xf32, #tpu.memory_space<vmem>>, vector<16x256xf32>
    %c0_2 = arith.constant 0 : index
    %c0_3 = arith.constant 0 : index
    %c0_4 = arith.constant 0 : index
    %4 = vector.load %arg3[%c0_2, %c0_3, %c0_4] : memref<1x16x512xbf16, #tpu.memory_space<vmem>>, vector<1x16x512xbf16>
    %5 = vector.shape_cast %4 : vector<1x16x512xbf16> to vector<16x512xbf16>
    %c0_5 = arith.constant 0 : index
    %c0_6 = arith.constant 0 : index
    %6 = vector.load %arg4[%c0_5, %c0_6] : memref<512x256xbf16, #tpu.memory_space<vmem>>, vector<512x256xbf16>
    %cst = arith.constant dense<0.000000e+00> : vector<16x256xf32>
    %7 = tpu.matmul %5, %6, %cst {dimension_numbers = #tpu.dot_dimension_numbers<[1], [0], [0], [1], [0, 0, 1, 1], [], []>} : vector<16x512xbf16>, vector<512x256xbf16>, vector<16x256xf32> -> vector<16x256xf32>
    %8 = arith.addf %3, %7 : vector<16x256xf32>
    %c0_7 = arith.constant 0 : index
    %c0_8 = arith.constant 0 : index
    %9 = vector.load %arg6[%c0_7, %c0_8] : memref<16x256xf32, #tpu.memory_space<vmem>>, vector<16x256xf32>
    tpu.vector_store %arg6[%c0_7, %c0_8], %8 {strides = array<i32>} : memref<16x256xf32, #tpu.memory_space<vmem>>, vector<16x256xf32>,
    %c3_i32 = arith.constant 3 : i32
    %10 = arith.cmpi eq, %arg2, %c3_i32 : i32
    %11 = arith.extui %10 : i1 to i32
    %c0_i32_9 = arith.constant 0 : i32
    %12 = arith.cmpi ne, %11, %c0_i32_9 : i32
    scf.if %12 {
      %c0_10 = arith.constant 0 : index
      %c0_11 = arith.constant 0 : index
      %13 = vector.load %arg6[%c0_10, %c0_11] : memref<16x256xf32, #tpu.memory_space<vmem>>, vector<16x256xf32>
      %cst_12 = arith.constant dense<0.000000e+00> : vector<256xf32>
      %14 = vector.multi_reduction <add>, %13, %cst_12 [0] : vector<16x256xf32> to vector<256xf32>
      %15 = vector.shape_cast %14 : vector<256xf32> to vector<1x256xf32>
      %cst_13 = arith.constant 1.600000e+01 : f32
      %16 = vector.broadcast %cst_13 : f32 to vector<1x256xf32>
      %17 = arith.divf %15, %16 : vector<1x256xf32>
      %18 = vector.broadcast %17 : vector<1x256xf32> to vector<16x256xf32>
      %19 = arith.subf %13, %18 : vector<16x256xf32>
      %20 = arith.mulf %19, %19 : vector<16x256xf32>
      %cst_14 = arith.constant dense<0.000000e+00> : vector<256xf32>
      %21 = vector.multi_reduction <add>, %20, %cst_14 [0] : vector<16x256xf32> to vector<256xf32>
      %22 = vector.shape_cast %21 : vector<256xf32> to vector<1x256xf32>
      %cst_15 = arith.constant 1.600000e+01 : f32
      %23 = vector.broadcast %cst_15 : f32 to vector<1x256xf32>
      %24 = arith.divf %22, %23 : vector<1x256xf32>
      %cst_16 = arith.constant 9.99999974E-6 : f32
      %25 = vector.broadcast %cst_16 : f32 to vector<1x256xf32>
      %26 = arith.addf %24, %25 : vector<1x256xf32>
      %27 = math.rsqrt %26 : vector<1x256xf32>
      %28 = vector.broadcast %27 : vector<1x256xf32> to vector<16x256xf32>
      %29 = arith.mulf %19, %28 : vector<16x256xf32>
      %cst_17 = arith.constant 0.000000e+00 : f32
      %30 = vector.broadcast %cst_17 : f32 to vector<16x256xf32>
      %31 = arith.cmpf oge, %29, %30 : vector<16x256xf32>
      %cst_18 = arith.constant 2.000000e-01 : f32
      %32 = vector.broadcast %cst_18 : f32 to vector<16x256xf32>
      %33 = arith.mulf %32, %29 : vector<16x256xf32>
      %34 = arith.select %31, %29, %33 : vector<16x256xi1>, vector<16x256xf32>
      %35 = arith.truncf %34 : vector<16x256xf32> to vector<16x256xbf16>
      %c0_19 = arith.constant 0 : index
      %c0_20 = arith.constant 0 : index
      %c0_21 = arith.constant 0 : index
      %36 = vector.load %arg5[%c0_19, %c0_20, %c0_21] : memref<1x16x256xbf16, #tpu.memory_space<vmem>>, vector<1x16x256xbf16>
      %37 = vector.shape_cast %36 : vector<1x16x256xbf16> to vector<16x256xbf16>
      %38 = vector.shape_cast %35 : vector<16x256xbf16> to vector<1x16x256xbf16>
      tpu.vector_store %arg5[%c0_19, %c0_20, %c0_21], %38 {strides = array<i32>} : memref<1x16x256xbf16, #tpu.memory_space<vmem>>, vector<1x16x256xbf16>,
    } else {
    }
    return
  }
  func.func @transform_0(%arg0: i32, %arg1: i32, %arg2: i32) -> (i32, i32, i32) {
    %c0_i32 = arith.constant 0 : i32
    %c0_i32_0 = arith.constant 0 : i32
    return %arg0, %c0_i32, %arg2 : i32, i32, i32
  }
  func.func @transform_1(%arg0: i32, %arg1: i32, %arg2: i32) -> (i32, i32) {
    %c0_i32 = arith.constant 0 : i32
    return %arg2, %arg1 : i32, i32
  }
  func.func @transform_2(%arg0: i32, %arg1: i32, %arg2: i32) -> (i32, i32, i32) {
    %c0_i32 = arith.constant 0 : i32
    %c0_i32_0 = arith.constant 0 : i32
    return %arg0, %c0_i32, %arg1 : i32, i32, i32
  }
}

module attributes {stable_mosaic.version = 11 : i64} {
  func.func @_conv_in_lrelu_kernel(%arg0: i32, %arg1: i32, %arg2: i32, %arg3: memref<1x9x512xbf16, #tpu.memory_space<vmem>>, %arg4: memref<512x256xbf16, #tpu.memory_space<vmem>>, %arg5: memref<1x9x256xbf16, #tpu.memory_space<vmem>>, %arg6: memref<9x256xf32, #tpu.memory_space<vmem>>) attributes {dimension_semantics = [#tpu.dimension_semantics<parallel>, #tpu.dimension_semantics<parallel>, #tpu.dimension_semantics<arbitrary>], iteration_bounds = array<i64: 2, 2, 8>, scalar_prefetch = 0 : i64, scratch_operands = 1 : i64, tpu.core_type = #tpu.core_type<tc>, window_params = [{transform_indices = @transform_0, window_bounds = array<i64: 1, 9, 512>}, {transform_indices = @transform_1, window_bounds = array<i64: 512, 256>}, {transform_indices = @transform_2, window_bounds = array<i64: 1, 9, 256>}]} {
    %c0_i32 = arith.constant 0 : i32
    %0 = arith.cmpi eq, %arg2, %c0_i32 : i32
    %1 = arith.extui %0 : i1 to i32
    %c0_i32_0 = arith.constant 0 : i32
    %2 = arith.cmpi ne, %1, %c0_i32_0 : i32
    scf.if %2 {
      %cst_10 = arith.constant 0.000000e+00 : f32
      %13 = vector.broadcast %cst_10 : f32 to vector<9x256xf32>
      %c0_11 = arith.constant 0 : index
      %c0_12 = arith.constant 0 : index
      %14 = vector.load %arg6[%c0_11, %c0_12] : memref<9x256xf32, #tpu.memory_space<vmem>>, vector<9x256xf32>
      tpu.vector_store %arg6[%c0_11, %c0_12], %13 {strides = array<i32>} : memref<9x256xf32, #tpu.memory_space<vmem>>, vector<9x256xf32>,
    } else {
    }
    %c0 = arith.constant 0 : index
    %c0_1 = arith.constant 0 : index
    %3 = vector.load %arg6[%c0, %c0_1] : memref<9x256xf32, #tpu.memory_space<vmem>>, vector<9x256xf32>
    %c0_2 = arith.constant 0 : index
    %c0_3 = arith.constant 0 : index
    %c0_4 = arith.constant 0 : index
    %4 = vector.load %arg3[%c0_2, %c0_3, %c0_4] : memref<1x9x512xbf16, #tpu.memory_space<vmem>>, vector<1x9x512xbf16>
    %5 = vector.shape_cast %4 : vector<1x9x512xbf16> to vector<9x512xbf16>
    %c0_5 = arith.constant 0 : index
    %c0_6 = arith.constant 0 : index
    %6 = vector.load %arg4[%c0_5, %c0_6] : memref<512x256xbf16, #tpu.memory_space<vmem>>, vector<512x256xbf16>
    %cst = arith.constant dense<0.000000e+00> : vector<9x256xf32>
    %7 = tpu.matmul %5, %6, %cst {dimension_numbers = #tpu.dot_dimension_numbers<[1], [0], [0], [1], [0, 0, 1, 1], [], []>} : vector<9x512xbf16>, vector<512x256xbf16>, vector<9x256xf32> -> vector<9x256xf32>
    %8 = arith.addf %3, %7 : vector<9x256xf32>
    %c0_7 = arith.constant 0 : index
    %c0_8 = arith.constant 0 : index
    %9 = vector.load %arg6[%c0_7, %c0_8] : memref<9x256xf32, #tpu.memory_space<vmem>>, vector<9x256xf32>
    tpu.vector_store %arg6[%c0_7, %c0_8], %8 {strides = array<i32>} : memref<9x256xf32, #tpu.memory_space<vmem>>, vector<9x256xf32>,
    %c7_i32 = arith.constant 7 : i32
    %10 = arith.cmpi eq, %arg2, %c7_i32 : i32
    %11 = arith.extui %10 : i1 to i32
    %c0_i32_9 = arith.constant 0 : i32
    %12 = arith.cmpi ne, %11, %c0_i32_9 : i32
    scf.if %12 {
      %c0_10 = arith.constant 0 : index
      %c0_11 = arith.constant 0 : index
      %13 = vector.load %arg6[%c0_10, %c0_11] : memref<9x256xf32, #tpu.memory_space<vmem>>, vector<9x256xf32>
      %cst_12 = arith.constant dense<0.000000e+00> : vector<256xf32>
      %14 = vector.multi_reduction <add>, %13, %cst_12 [0] : vector<9x256xf32> to vector<256xf32>
      %15 = vector.shape_cast %14 : vector<256xf32> to vector<1x256xf32>
      %cst_13 = arith.constant 9.000000e+00 : f32
      %16 = vector.broadcast %cst_13 : f32 to vector<1x256xf32>
      %17 = arith.divf %15, %16 : vector<1x256xf32>
      %18 = vector.broadcast %17 : vector<1x256xf32> to vector<9x256xf32>
      %19 = arith.subf %13, %18 : vector<9x256xf32>
      %20 = arith.mulf %19, %19 : vector<9x256xf32>
      %cst_14 = arith.constant dense<0.000000e+00> : vector<256xf32>
      %21 = vector.multi_reduction <add>, %20, %cst_14 [0] : vector<9x256xf32> to vector<256xf32>
      %22 = vector.shape_cast %21 : vector<256xf32> to vector<1x256xf32>
      %cst_15 = arith.constant 9.000000e+00 : f32
      %23 = vector.broadcast %cst_15 : f32 to vector<1x256xf32>
      %24 = arith.divf %22, %23 : vector<1x256xf32>
      %cst_16 = arith.constant 9.99999974E-6 : f32
      %25 = vector.broadcast %cst_16 : f32 to vector<1x256xf32>
      %26 = arith.addf %24, %25 : vector<1x256xf32>
      %27 = math.rsqrt %26 : vector<1x256xf32>
      %28 = vector.broadcast %27 : vector<1x256xf32> to vector<9x256xf32>
      %29 = arith.mulf %19, %28 : vector<9x256xf32>
      %cst_17 = arith.constant 0.000000e+00 : f32
      %30 = vector.broadcast %cst_17 : f32 to vector<9x256xf32>
      %31 = arith.cmpf oge, %29, %30 : vector<9x256xf32>
      %cst_18 = arith.constant 2.000000e-01 : f32
      %32 = vector.broadcast %cst_18 : f32 to vector<9x256xf32>
      %33 = arith.mulf %32, %29 : vector<9x256xf32>
      %34 = arith.select %31, %29, %33 : vector<9x256xi1>, vector<9x256xf32>
      %35 = arith.truncf %34 : vector<9x256xf32> to vector<9x256xbf16>
      %c0_19 = arith.constant 0 : index
      %c0_20 = arith.constant 0 : index
      %c0_21 = arith.constant 0 : index
      %36 = vector.load %arg5[%c0_19, %c0_20, %c0_21] : memref<1x9x256xbf16, #tpu.memory_space<vmem>>, vector<1x9x256xbf16>
      %37 = vector.shape_cast %36 : vector<1x9x256xbf16> to vector<9x256xbf16>
      %38 = vector.shape_cast %35 : vector<9x256xbf16> to vector<1x9x256xbf16>
      tpu.vector_store %arg5[%c0_19, %c0_20, %c0_21], %38 {strides = array<i32>} : memref<1x9x256xbf16, #tpu.memory_space<vmem>>, vector<1x9x256xbf16>,
    } else {
    }
    return
  }
  func.func @transform_0(%arg0: i32, %arg1: i32, %arg2: i32) -> (i32, i32, i32) {
    %c0_i32 = arith.constant 0 : i32
    %c0_i32_0 = arith.constant 0 : i32
    return %arg0, %c0_i32, %arg2 : i32, i32, i32
  }
  func.func @transform_1(%arg0: i32, %arg1: i32, %arg2: i32) -> (i32, i32) {
    %c0_i32 = arith.constant 0 : i32
    return %arg2, %arg1 : i32, i32
  }
  func.func @transform_2(%arg0: i32, %arg1: i32, %arg2: i32) -> (i32, i32, i32) {
    %c0_i32 = arith.constant 0 : i32
    %c0_i32_0 = arith.constant 0 : i32
    return %arg0, %c0_i32, %arg1 : i32, i32, i32
  }
}

module attributes {stable_mosaic.version = 11 : i64} {
  func.func @_conv_mm_kernel(%arg0: i32, %arg1: i32, %arg2: i32, %arg3: memref<8x512xbf16, #tpu.memory_space<vmem>>, %arg4: memref<512x128xbf16, #tpu.memory_space<vmem>>, %arg5: memref<1x128xf32, #tpu.memory_space<vmem>>, %arg6: memref<8x128xf32, #tpu.memory_space<vmem>>, %arg7: memref<8x128xf32, #tpu.memory_space<vmem>>) attributes {dimension_semantics = [#tpu.dimension_semantics<parallel>, #tpu.dimension_semantics<parallel>, #tpu.dimension_semantics<arbitrary>], iteration_bounds = array<i64: 1, 1, 16>, scalar_prefetch = 0 : i64, scratch_operands = 1 : i64, tpu.core_type = #tpu.core_type<tc>, window_params = [{transform_indices = @transform_0, window_bounds = array<i64: 8, 512>}, {transform_indices = @transform_1, window_bounds = array<i64: 512, 128>}, {transform_indices = @transform_2, window_bounds = array<i64: 1, 128>}, {transform_indices = @transform_3, window_bounds = array<i64: 8, 128>}]} {
    %c0_i32 = arith.constant 0 : i32
    %0 = arith.cmpi eq, %arg2, %c0_i32 : i32
    %1 = arith.extui %0 : i1 to i32
    %c0_i32_0 = arith.constant 0 : i32
    %2 = arith.cmpi ne, %1, %c0_i32_0 : i32
    scf.if %2 {
      %cst_9 = arith.constant 0.000000e+00 : f32
      %12 = vector.broadcast %cst_9 : f32 to vector<8x128xf32>
      %c0_10 = arith.constant 0 : index
      %c0_11 = arith.constant 0 : index
      %13 = vector.load %arg7[%c0_10, %c0_11] : memref<8x128xf32, #tpu.memory_space<vmem>>, vector<8x128xf32>
      tpu.vector_store %arg7[%c0_10, %c0_11], %12 {strides = array<i32>} : memref<8x128xf32, #tpu.memory_space<vmem>>, vector<8x128xf32>,
    } else {
    }
    %c0 = arith.constant 0 : index
    %c0_1 = arith.constant 0 : index
    %3 = vector.load %arg7[%c0, %c0_1] : memref<8x128xf32, #tpu.memory_space<vmem>>, vector<8x128xf32>
    %c0_2 = arith.constant 0 : index
    %c0_3 = arith.constant 0 : index
    %4 = vector.load %arg3[%c0_2, %c0_3] : memref<8x512xbf16, #tpu.memory_space<vmem>>, vector<8x512xbf16>
    %c0_4 = arith.constant 0 : index
    %c0_5 = arith.constant 0 : index
    %5 = vector.load %arg4[%c0_4, %c0_5] : memref<512x128xbf16, #tpu.memory_space<vmem>>, vector<512x128xbf16>
    %cst = arith.constant dense<0.000000e+00> : vector<8x128xf32>
    %6 = tpu.matmul %4, %5, %cst {dimension_numbers = #tpu.dot_dimension_numbers<[1], [0], [0], [1], [0, 0, 1, 1], [], []>} : vector<8x512xbf16>, vector<512x128xbf16>, vector<8x128xf32> -> vector<8x128xf32>
    %7 = arith.addf %3, %6 : vector<8x128xf32>
    %c0_6 = arith.constant 0 : index
    %c0_7 = arith.constant 0 : index
    %8 = vector.load %arg7[%c0_6, %c0_7] : memref<8x128xf32, #tpu.memory_space<vmem>>, vector<8x128xf32>
    tpu.vector_store %arg7[%c0_6, %c0_7], %7 {strides = array<i32>} : memref<8x128xf32, #tpu.memory_space<vmem>>, vector<8x128xf32>,
    %c15_i32 = arith.constant 15 : i32
    %9 = arith.cmpi eq, %arg2, %c15_i32 : i32
    %10 = arith.extui %9 : i1 to i32
    %c0_i32_8 = arith.constant 0 : i32
    %11 = arith.cmpi ne, %10, %c0_i32_8 : i32
    scf.if %11 {
      %c0_9 = arith.constant 0 : index
      %c0_10 = arith.constant 0 : index
      %12 = vector.load %arg7[%c0_9, %c0_10] : memref<8x128xf32, #tpu.memory_space<vmem>>, vector<8x128xf32>
      %c0_11 = arith.constant 0 : index
      %c0_12 = arith.constant 0 : index
      %13 = vector.load %arg5[%c0_11, %c0_12] : memref<1x128xf32, #tpu.memory_space<vmem>>, vector<1x128xf32>
      %14 = vector.broadcast %13 : vector<1x128xf32> to vector<8x128xf32>
      %15 = arith.addf %12, %14 : vector<8x128xf32>
      %c0_13 = arith.constant 0 : index
      %c0_14 = arith.constant 0 : index
      %16 = vector.load %arg6[%c0_13, %c0_14] : memref<8x128xf32, #tpu.memory_space<vmem>>, vector<8x128xf32>
      tpu.vector_store %arg6[%c0_13, %c0_14], %15 {strides = array<i32>} : memref<8x128xf32, #tpu.memory_space<vmem>>, vector<8x128xf32>,
    } else {
    }
    return
  }
  func.func @transform_0(%arg0: i32, %arg1: i32, %arg2: i32) -> (i32, i32) {
    %c0_i32 = arith.constant 0 : i32
    return %arg0, %arg2 : i32, i32
  }
  func.func @transform_1(%arg0: i32, %arg1: i32, %arg2: i32) -> (i32, i32) {
    %c0_i32 = arith.constant 0 : i32
    return %arg2, %arg1 : i32, i32
  }
  func.func @transform_2(%arg0: i32, %arg1: i32, %arg2: i32) -> (i32, i32) {
    %c0_i32 = arith.constant 0 : i32
    %c0_i32_0 = arith.constant 0 : i32
    return %c0_i32, %arg1 : i32, i32
  }
  func.func @transform_3(%arg0: i32, %arg1: i32, %arg2: i32) -> (i32, i32) {
    %c0_i32 = arith.constant 0 : i32
    return %arg0, %arg1 : i32, i32
  }
}

</mosaic_0001>

<llo_original>
// kernel: discriminator_forward.5
$region0: #{discriminator_forward.5}
  #allocation0 [shape = 'u32[]', space=smem, size = 0x4, offset = 0x4, fixed_abs, tag = 'smem constant byte address 0x4 - core index']
  #allocation1 [shape = 'u32[144,128]{1,0:T(1,128)}', space=vmem, size = 0x12000, scoped, tag = 'internal scratch']
  #allocation2 [shape = 'f32[512,64]{1,0:T(8,128)}', space=vmem, size = 0x40000, scoped, tag = 'scratch operand']
  %s0 = inlined_call_operand.vmem [shape: bf16[512,48], index: 0, kind: input, shape index: {}]
  %s1 = inlined_call_operand.vmem [shape: bf16[48,64], index: 1, kind: input, shape index: {}]
  %s2 = inlined_call_operand.hbm [shape: f32[1,64], index: 2, kind: input, shape index: {}]
  %s3 = inlined_call_operand.vmem [shape: bf16[512,64], index: 3, kind: output, shape index: {}]
  %s4 = sld [smem:[#allocation0]]
  $region34: #{discriminator_forward.5} parent=0
    _
  %s6 = ssub.s32 1, %s4
  %s7 = scalar_select 0, %s6, %s4
  $region1: #{discriminator_forward.5} parent=0
    #allocation3 [shape = 'u8[512]{0}', space=vmem, size = 0x400, scoped, tag = 'input window, operand 2, single buffered']
    #allocation4 [shape = 's32[1]{0}', space=sflag, size = 0x4, scoped, tag = 'scoped memory for discriminator_forward.5']
    %8 = vsyncpa [#allocation4], 0
    // Predicated region
    $region2: #{discriminator_forward.5} parent=1 // pred_check
      _
    $region3: #{discriminator_forward.5} parent=1 // pred_check_branch
      %10 = sbr.rel (0) target = $region5
    $region4: #{discriminator_forward.5} parent=1 // pred_region
      _
    $region5: #{discriminator_forward.5} parent=1 // pred_fallthru
      _
    // Predicated region
    $region6: #{discriminator_forward.5} parent=1 // pred_check
      _
    $region7: #{discriminator_forward.5} parent=1 // pred_check_branch
      %12 = sbr.rel (0) target = $region9
    $region8: #{discriminator_forward.5} parent=1 // pred_region
      _
    $region9: #{discriminator_forward.5} parent=1 // pred_fallthru
      _
    // Predicated region
    $region10: #{discriminator_forward.5} parent=1 // pred_check
      _
    $region11: #{discriminator_forward.5} parent=1 // pred_check_branch
      %14 = sbr.rel (0) target = $region13
    $region12: #{discriminator_forward.5} parent=1 // pred_region
      %s16 = ssub.s32 16, 16
      %17 = vsyncadd [#allocation4], %s16
      %s19 = sshll.u32 [#allocation3], 4
      %s20 = int_to_ptr.vmem [resolvable:$true] %s19
      %22 = dma.hbm_to_vmem [thread:$0]  %s2, 16, %s20, [#allocation4]
    $region13: #{discriminator_forward.5} parent=1 // pred_fallthru
      _
    // Predicated region
    $region14: #{discriminator_forward.5} parent=1 // pred_check
      _
    $region15: #{discriminator_forward.5} parent=1 // pred_check_branch
      %24 = sbr.rel (0) target = $region17
    $region16: #{discriminator_forward.5} parent=1 // pred_region
      %25 = dma.done [#allocation4], 16
    $region17: #{discriminator_forward.5} parent=1 // pred_fallthru
      _
    %p27 = scmp.eq.s32.totalorder 0, 0
    // Predicated region
    $region18: #{discriminator_forward.5} parent=1 // pred_check
      %p28 = pneg %p27
    $region19: #{discriminator_forward.5} parent=1 // pred_check_branch
      %30 = sbr.rel (%p28) target = $region21
    $region20: #{discriminator_forward.5} parent=1 // pred_region
      %vm31 = vcmask 523264
      %32 = vst.msk [vmem:[#allocation2] sm:$0xff] %vm31, 0.0
      %33 = vst.msk [vmem:[#allocation2 + $0x8] sm:$0xff] %vm31, 0.0
      %34 = vst.msk [vmem:[#allocation2 + $0x10] sm:$0xff] %vm31, 0.0
      %35 = vst.msk [vmem:[#allocation2 + $0x18] sm:$0xff] %vm31, 0.0
      %36 = vst.msk [vmem:[#allocation2 + $0x20] sm:$0xff] %vm31, 0.0
      %37 = vst.msk [vmem:[#allocation2 + $0x28] sm:$0xff] %vm31, 0.0
      %38 = vst.msk [vmem:[#allocation2 + $0x30] sm:$0xff] %vm31, 0.0
      %39 = vst.msk [vmem:[#allocation2 + $0x38] sm:$0xff] %vm31, 0.0
      %40 = vst.msk [vmem:[#allocation2 + $0x40] sm:$0xff] %vm31, 0.0
      %41 = vst.msk [vmem:[#allocation2 + $0x48] sm:$0xff] %vm31, 0.0
      %42 = vst.msk [vmem:[#allocation2 + $0x50] sm:$0xff] %vm31, 0.0
      %43 = vst.msk [vmem:[#allocation2 + $0x58] sm:$0xff] %vm31, 0.0
      %44 = vst.msk [vmem:[#allocation2 + $0x60] sm:$0xff] %vm31, 0.0
      %45 = vst.msk [vmem:[#allocation2 + $0x68] sm:$0xff] %vm31, 0.0
      %46 = vst.msk [vmem:[#allocation2 + $0x70] sm:$0xff] %vm31, 0.0
      %47 = vst.msk [vmem:[#allocation2 + $0x78] sm:$0xff] %vm31, 0.0
      %48 = vst.msk [vmem:[#allocation2 + $0x80] sm:$0xff] %vm31, 0.0
      %49 = vst.msk [vmem:[#allocation2 + $0x88] sm:$0xff] %vm31, 0.0
      %50 = vst.msk [vmem:[#allocation2 + $0x90] sm:$0xff] %vm31, 0.0
      %51 = vst.msk [vmem:[#allocation2 + $0x98] sm:$0xff] %vm31, 0.0
      %52 = vst.msk [vmem:[#allocation2 + $0xa0] sm:$0xff] %vm31, 0.0
      %53 = vst.msk [vmem:[#allocation2 + $0xa8] sm:$0xff] %vm31, 0.0
      %54 = vst.msk [vmem:[#allocation2 + $0xb0] sm:$0xff] %vm31, 0.0
      %55 = vst.msk [vmem:[#allocation2 + $0xb8] sm:$0xff] %vm31, 0.0
      %56 = vst.msk [vmem:[#allocation2 + $0xc0] sm:$0xff] %vm31, 0.0
      %57 = vst.msk [vmem:[#allocation2 + $0xc8] sm:$0xff] %vm31, 0.0
      %58 = vst.msk [vmem:[#allocation2 + $0xd0] sm:$0xff] %vm31, 0.0
      %59 = vst.msk [vmem:[#allocation2 + $0xd8] sm:$0xff] %vm31, 0.0
      %60 = vst.msk [vmem:[#allocation2 + $0xe0] sm:$0xff] %vm31, 0.0
      %61 = vst.msk [vmem:[#allocation2 + $0xe8] sm:$0xff] %vm31, 0.0
      %62 = vst.msk [vmem:[#allocation2 + $0xf0] sm:$0xff] %vm31, 0.0
      %63 = vst.msk [vmem:[#allocation2 + $0xf8] sm:$0xff] %vm31, 0.0
      %64 = vst.msk [vmem:[#allocation2 + $0x100] sm:$0xff] %vm31, 0.0
      %65 = vst.msk [vmem:[#allocation2 + $0x108] sm:$0xff] %vm31, 0.0
      %66 = vst.msk [vmem:[#allocation2 + $0x110] sm:$0xff] %vm31, 0.0
      %67 = vst.msk [vmem:[#allocation2 + $0x118] sm:$0xff] %vm31, 0.0
      %68 = vst.msk [vmem:[#allocation2 + $0x120] sm:$0xff] %vm31, 0.0
      %69 = vst.msk [vmem:[#allocation2 + $0x128] sm:$0xff] %vm31, 0.0
      %70 = vst.msk [vmem:[#allocation2 + $0x130] sm:$0xff] %vm31, 0.0
      %71 = vst.msk [vmem:[#allocation2 + $0x138] sm:$0xff] %vm31, 0.0
      %72 = vst.msk [vmem:[#allocation2 + $0x140] sm:$0xff] %vm31, 0.0
      %73 = vst.msk [vmem:[#allocation2 + $0x148] sm:$0xff] %vm31, 0.0
      %74 = vst.msk [vmem:[#allocation2 + $0x150] sm:$0xff] %vm31, 0.0
      %75 = vst.msk [vmem:[#allocation2 + $0x158] sm:$0xff] %vm31, 0.0
      %76 = vst.msk [vmem:[#allocation2 + $0x160] sm:$0xff] %vm31, 0.0
      %77 = vst.msk [vmem:[#allocation2 + $0x168] sm:$0xff] %vm31, 0.0
      %78 = vst.msk [vmem:[#allocation2 + $0x170] sm:$0xff] %vm31, 0.0
      %79 = vst.msk [vmem:[#allocation2 + $0x178] sm:$0xff] %vm31, 0.0
      %80 = vst.msk [vmem:[#allocation2 + $0x180] sm:$0xff] %vm31, 0.0
      %81 = vst.msk [vmem:[#allocation2 + $0x188] sm:$0xff] %vm31, 0.0
      %82 = vst.msk [vmem:[#allocation2 + $0x190] sm:$0xff] %vm31, 0.0
      %83 = vst.msk [vmem:[#allocation2 + $0x198] sm:$0xff] %vm31, 0.0
      %84 = vst.msk [vmem:[#allocation2 + $0x1a0] sm:$0xff] %vm31, 0.0
      %85 = vst.msk [vmem:[#allocation2 + $0x1a8] sm:$0xff] %vm31, 0.0
      %86 = vst.msk [vmem:[#allocation2 + $0x1b0] sm:$0xff] %vm31, 0.0
      %87 = vst.msk [vmem:[#allocation2 + $0x1b8] sm:$0xff] %vm31, 0.0
      %88 = vst.msk [vmem:[#allocation2 + $0x1c0] sm:$0xff] %vm31, 0.0
      %89 = vst.msk [vmem:[#allocation2 + $0x1c8] sm:$0xff] %vm31, 0.0
      %90 = vst.msk [vmem:[#allocation2 + $0x1d0] sm:$0xff] %vm31, 0.0
      %91 = vst.msk [vmem:[#allocation2 + $0x1d8] sm:$0xff] %vm31, 0.0
      %92 = vst.msk [vmem:[#allocation2 + $0x1e0] sm:$0xff] %vm31, 0.0
      %93 = vst.msk [vmem:[#allocation2 + $0x1e8] sm:$0xff] %vm31, 0.0
      %94 = vst.msk [vmem:[#allocation2 + $0x1f0] sm:$0xff] %vm31, 0.0
      %95 = vst.msk [vmem:[#allocation2 + $0x1f8] sm:$0xff] %vm31, 0.0
    $region21: #{discriminator_forward.5} parent=1 // pred_fallthru
      _
    %v96 = vld [vmem:[#allocation2] sm:$0xff]
    %v97 = vld [vmem:[#allocation2 + $0x8] sm:$0xff]
    %v98 = vld [vmem:[#allocation2 + $0x10] sm:$0xff]
    %v99 = vld [vmem:[#allocation2 + $0x18] sm:$0xff]
    %v100 = vld [vmem:[#allocation2 + $0x20] sm:$0xff]
    %v101 = vld [vmem:[#allocation2 + $0x28] sm:$0xff]
    %v102 = vld [vmem:[#allocation2 + $0x30] sm:$0xff]
    %v103 = vld [vmem:[#allocation2 + $0x38] sm:$0xff]
    %v104 = vld [vmem:[#allocation2 + $0x40] sm:$0xff]
    %v105 = vld [vmem:[#allocation2 + $0x48] sm:$0xff]
    %v106 = vld [vmem:[#allocation2 + $0x50] sm:$0xff]
    %v107 = vld [vmem:[#allocation2 + $0x58] sm:$0xff]
    %v108 = vld [vmem:[#allocation2 + $0x60] sm:$0xff]
    %v109 = vld [vmem:[#allocation2 + $0x68] sm:$0xff]
    %v110 = vld [vmem:[#allocation2 + $0x70] sm:$0xff]
    %v111 = vld [vmem:[#allocation2 + $0x78] sm:$0xff]
    %v112 = vld [vmem:[#allocation2 + $0x80] sm:$0xff]
    %v113 = vld [vmem:[#allocation2 + $0x88] sm:$0xff]
    %v114 = vld [vmem:[#allocation2 + $0x90] sm:$0xff]
    %v115 = vld [vmem:[#allocation2 + $0x98] sm:$0xff]
    %v116 = vld [vmem:[#allocation2 + $0xa0] sm:$0xff]
    %v117 = vld [vmem:[#allocation2 + $0xa8] sm:$0xff]
    %v118 = vld [vmem:[#allocation2 + $0xb0] sm:$0xff]
    %v119 = vld [vmem:[#allocation2 + $0xb8] sm:$0xff]
    %v120 = vld [vmem:[#allocation2 + $0xc0] sm:$0xff]
    %v121 = vld [vmem:[#allocation2 + $0xc8] sm:$0xff]
    %v122 = vld [vmem:[#allocation2 + $0xd0] sm:$0xff]
    %v123 = vld [vmem:[#allocation2 + $0xd8] sm:$0xff]
    %v124 = vld [vmem:[#allocation2 + $0xe0] sm:$0xff]
    %v125 = vld [vmem:[#allocation2 + $0xe8] sm:$0xff]
    %v126 = vld [vmem:[#allocation2 + $0xf0] sm:$0xff]
    %v127 = vld [vmem:[#allocation2 + $0xf8] sm:$0xff]
    %v128 = vld [vmem:[#allocation2 + $0x100] sm:$0xff]
    %v129 = vld [vmem:[#allocation2 + $0x108] sm:$0xff]
    %v130 = vld [vmem:[#allocation2 + $0x110] sm:$0xff]
    %v131 = vld [vmem:[#allocation2 + $0x118] sm:$0xff]
    %v132 = vld [vmem:[#allocation2 + $0x120] sm:$0xff]
    %v133 = vld [vmem:[#allocation2 + $0x128] sm:$0xff]
    %v134 = vld [vmem:[#allocation2 + $0x130] sm:$0xff]
    %v135 = vld [vmem:[#allocation2 + $0x138] sm:$0xff]
    %v136 = vld [vmem:[#allocation2 + $0x140] sm:$0xff]
    %v137 = vld [vmem:[#allocation2 + $0x148] sm:$0xff]
    %v138 = vld [vmem:[#allocation2 + $0x150] sm:$0xff]
    %v139 = vld [vmem:[#allocation2 + $0x158] sm:$0xff]
    %v140 = vld [vmem:[#allocation2 + $0x160] sm:$0xff]
    %v141 = vld [vmem:[#allocation2 + $0x168] sm:$0xff]
    %v142 = vld [vmem:[#allocation2 + $0x170] sm:$0xff]
    %v143 = vld [vmem:[#allocation2 + $0x178] sm:$0xff]
    %v144 = vld [vmem:[#allocation2 + $0x180] sm:$0xff]
    %v145 = vld [vmem:[#allocation2 + $0x188] sm:$0xff]
    %v146 = vld [vmem:[#allocation2 + $0x190] sm:$0xff]
    %v147 = vld [vmem:[#allocation2 + $0x198] sm:$0xff]
    %v148 = vld [vmem:[#allocation2 + $0x1a0] sm:$0xff]
    %v149 = vld [vmem:[#allocation2 + $0x1a8] sm:$0xff]
    %v150 = vld [vmem:[#allocation2 + $0x1b0] sm:$0xff]
    %v151 = vld [vmem:[#allocation2 + $0x1b8] sm:$0xff]
    %v152 = vld [vmem:[#allocation2 + $0x1c0] sm:$0xff]
    %v153 = vld [vmem:[#allocation2 + $0x1c8] sm:$0xff]
    %v154 = vld [vmem:[#allocation2 + $0x1d0] sm:$0xff]
    %v155 = vld [vmem:[#allocation2 + $0x1d8] sm:$0xff]
    %v156 = vld [vmem:[#allocation2 + $0x1e0] sm:$0xff]
    %v157 = vld [vmem:[#allocation2 + $0x1e8] sm:$0xff]
    %v158 = vld [vmem:[#allocation2 + $0x1f0] sm:$0xff]
    %v159 = vld [vmem:[#allocation2 + $0x1f8] sm:$0xff]
    %v160 = vld [vmem:[%s0] sm:$0xf]
    %v161 = vld [vmem:[%s0 + $0x4] sm:$0xf]
    %v162 = vld [vmem:[%s0 + $0x8] sm:$0xf]
    %v163 = vld [vmem:[%s0 + $0xc] sm:$0xf]
    %v164 = vld [vmem:[%s0 + $0x10] sm:$0xf]
    %v165 = vld [vmem:[%s0 + $0x14] sm:$0xf]
    %v166 = vld [vmem:[%s0 + $0x18] sm:$0xf]
    %v167 = vld [vmem:[%s0 + $0x1c] sm:$0xf]
    %v168 = vld [vmem:[%s0 + $0x20] sm:$0xf]
    %v169 = vld [vmem:[%s0 + $0x24] sm:$0xf]
    %v170 = vld [vmem:[%s0 + $0x28] sm:$0xf]
    %v171 = vld [vmem:[%s0 + $0x2c] sm:$0xf]
    %v172 = vld [vmem:[%s0 + $0x30] sm:$0xf]
    %v173 = vld [vmem:[%s0 + $0x34] sm:$0xf]
    %v174 = vld [vmem:[%s0 + $0x38] sm:$0xf]
    %v175 = vld [vmem:[%s0 + $0x3c] sm:$0xf]
    %v176 = vld [vmem:[%s0 + $0x40] sm:$0xf]
    %v177 = vld [vmem:[%s0 + $0x44] sm:$0xf]
    %v178 = vld [vmem:[%s0 + $0x48] sm:$0xf]
    %v179 = vld [vmem:[%s0 + $0x4c] sm:$0xf]
    %v180 = vld [vmem:[%s0 + $0x50] sm:$0xf]
    %v181 = vld [vmem:[%s0 + $0x54] sm:$0xf]
    %v182 = vld [vmem:[%s0 + $0x58] sm:$0xf]
    %v183 = vld [vmem:[%s0 + $0x5c] sm:$0xf]
    %v184 = vld [vmem:[%s0 + $0x60] sm:$0xf]
    %v185 = vld [vmem:[%s0 + $0x64] sm:$0xf]
    %v186 = vld [vmem:[%s0 + $0x68] sm:$0xf]
    %v187 = vld [vmem:[%s0 + $0x6c] sm:$0xf]
    %v188 = vld [vmem:[%s0 + $0x70] sm:$0xf]
    %v189 = vld [vmem:[%s0 + $0x74] sm:$0xf]
    %v190 = vld [vmem:[%s0 + $0x78] sm:$0xf]
    %v191 = vld [vmem:[%s0 + $0x7c] sm:$0xf]
    %v192 = vld [vmem:[%s0 + $0x80] sm:$0xf]
    %v193 = vld [vmem:[%s0 + $0x84] sm:$0xf]
    %v194 = vld [vmem:[%s0 + $0x88] sm:$0xf]
    %v195 = vld [vmem:[%s0 + $0x8c] sm:$0xf]
    %v196 = vld [vmem:[%s0 + $0x90] sm:$0xf]
    %v197 = vld [vmem:[%s0 + $0x94] sm:$0xf]
    %v198 = vld [vmem:[%s0 + $0x98] sm:$0xf]
    %v199 = vld [vmem:[%s0 + $0x9c] sm:$0xf]
    %v200 = vld [vmem:[%s0 + $0xa0] sm:$0xf]
    %v201 = vld [vmem:[%s0 + $0xa4] sm:$0xf]
    %v202 = vld [vmem:[%s0 + $0xa8] sm:$0xf]
    %v203 = vld [vmem:[%s0 + $0xac] sm:$0xf]
    %v204 = vld [vmem:[%s0 + $0xb0] sm:$0xf]
    %v205 = vld [vmem:[%s0 + $0xb4] sm:$0xf]
    %v206 = vld [vmem:[%s0 + $0xb8] sm:$0xf]
    %v207 = vld [vmem:[%s0 + $0xbc] sm:$0xf]
    %v208 = vld [vmem:[%s0 + $0xc0] sm:$0xf]
    %v209 = vld [vmem:[%s0 + $0xc4] sm:$0xf]
    %v210 = vld [vmem:[%s0 + $0xc8] sm:$0xf]
    %v211 = vld [vmem:[%s0 + $0xcc] sm:$0xf]
    %v212 = vld [vmem:[%s0 + $0xd0] sm:$0xf]
    %v213 = vld [vmem:[%s0 + $0xd4] sm:$0xf]
    %v214 = vld [vmem:[%s0 + $0xd8] sm:$0xf]
    %v215 = vld [vmem:[%s0 + $0xdc] sm:$0xf]
    %v216 = vld [vmem:[%s0 + $0xe0] sm:$0xf]
    %v217 = vld [vmem:[%s0 + $0xe4] sm:$0xf]
    %v218 = vld [vmem:[%s0 + $0xe8] sm:$0xf]
    %v219 = vld [vmem:[%s0 + $0xec] sm:$0xf]
    %v220 = vld [vmem:[%s0 + $0xf0] sm:$0xf]
    %v221 = vld [vmem:[%s0 + $0xf4] sm:$0xf]
    %v222 = vld [vmem:[%s0 + $0xf8] sm:$0xf]
    %v223 = vld [vmem:[%s0 + $0xfc] sm:$0xf]
    %v224 = vld [vmem:[%s1] sm:$0xf]
    %v225 = vld [vmem:[%s1 + $0x4] sm:$0xf]
    %v226 = vld [vmem:[%s1 + $0x8] sm:$0xf]
    %v227 = vld [vmem:[%s1 + $0xc] sm:$0xf]
    %v228 = vld [vmem:[%s1 + $0x10] sm:$0xf]
    %v229 = vld [vmem:[%s1 + $0x14] sm:$0xf]
    %v294 = vunpack.c.l.b16 %v160
    %v295 = vunpack.c.l.b16 %v161
    %v296 = vunpack.c.l.b16 %v162
    %v297 = vunpack.c.l.b16 %v163
    %v298 = vunpack.c.l.b16 %v164
    %v299 = vunpack.c.l.b16 %v165
    %v300 = vunpack.c.l.b16 %v166
    %v301 = vunpack.c.l.b16 %v167
    %v302 = vunpack.c.l.b16 %v168
    %v303 = vunpack.c.l.b16 %v169
    %v304 = vunpack.c.l.b16 %v170
    %v305 = vunpack.c.l.b16 %v171
    %v306 = vunpack.c.l.b16 %v172
    %v307 = vunpack.c.l.b16 %v173
    %v308 = vunpack.c.l.b16 %v174
    %v309 = vunpack.c.l.b16 %v175
    %v310 = vunpack.c.l.b16 %v176
    %v311 = vunpack.c.l.b16 %v177
    %v312 = vunpack.c.l.b16 %v178
    %v313 = vunpack.c.l.b16 %v179
    %v314 = vunpack.c.l.b16 %v180
    %v315 = vunpack.c.l.b16 %v181
    %v316 = vunpack.c.l.b16 %v182
    %v317 = vunpack.c.l.b16 %v183
    %v318 = vunpack.c.l.b16 %v184
    %v319 = vunpack.c.l.b16 %v185
    %v320 = vunpack.c.l.b16 %v186
    %v321 = vunpack.c.l.b16 %v187
    %v322 = vunpack.c.l.b16 %v188
    %v323 = vunpack.c.l.b16 %v189
    %v324 = vunpack.c.l.b16 %v190
    %v325 = vunpack.c.l.b16 %v191
    %v326 = vunpack.c.l.b16 %v192
    %v327 = vunpack.c.l.b16 %v193
    %v328 = vunpack.c.l.b16 %v194
    %v329 = vunpack.c.l.b16 %v195
    %v330 = vunpack.c.l.b16 %v196
    %v331 = vunpack.c.l.b16 %v197
    %v332 = vunpack.c.l.b16 %v198
    %v333 = vunpack.c.l.b16 %v199
    %v334 = vunpack.c.l.b16 %v200
    %v335 = vunpack.c.l.b16 %v201
    %v336 = vunpack.c.l.b16 %v202
    %v337 = vunpack.c.l.b16 %v203
    %v338 = vunpack.c.l.b16 %v204
    %v339 = vunpack.c.l.b16 %v205
    %v340 = vunpack.c.l.b16 %v206
    %v341 = vunpack.c.l.b16 %v207
    %v342 = vunpack.c.l.b16 %v208
    %v343 = vunpack.c.l.b16 %v209
    %v344 = vunpack.c.l.b16 %v210
    %v345 = vunpack.c.l.b16 %v211
    %v346 = vunpack.c.l.b16 %v212
    %v347 = vunpack.c.l.b16 %v213
    %v348 = vunpack.c.l.b16 %v214
    %v349 = vunpack.c.l.b16 %v215
    %v350 = vunpack.c.l.b16 %v216
    %v351 = vunpack.c.l.b16 %v217
    %v352 = vunpack.c.l.b16 %v218
    %v353 = vunpack.c.l.b16 %v219
    %v354 = vunpack.c.l.b16 %v220
    %v355 = vunpack.c.l.b16 %v221
    %v356 = vunpack.c.l.b16 %v222
    %v357 = vunpack.c.l.b16 %v223
    %v358 = vpack.c.b16 %v295, %v294
    %v359 = vpack.c.b16 %v297, %v296
    %v360 = vpack.c.b16 %v299, %v298
    %v361 = vpack.c.b16 %v301, %v300
    %v362 = vpack.c.b16 %v303, %v302
    %v363 = vpack.c.b16 %v305, %v304
    %v364 = vpack.c.b16 %v307, %v306
    %v365 = vpack.c.b16 %v309, %v308
    %v366 = vpack.c.b16 %v311, %v310
    %v367 = vpack.c.b16 %v313, %v312
    %v368 = vpack.c.b16 %v315, %v314
    %v369 = vpack.c.b16 %v317, %v316
    %v370 = vpack.c.b16 %v319, %v318
    %v371 = vpack.c.b16 %v321, %v320
    %v372 = vpack.c.b16 %v323, %v322
    %v373 = vpack.c.b16 %v325, %v324
    %v374 = vpack.c.b16 %v327, %v326
    %v375 = vpack.c.b16 %v329, %v328
    %v376 = vpack.c.b16 %v331, %v330
    %v377 = vpack.c.b16 %v333, %v332
    %v378 = vpack.c.b16 %v335, %v334
    %v379 = vpack.c.b16 %v337, %v336
    %v380 = vpack.c.b16 %v339, %v338
    %v381 = vpack.c.b16 %v341, %v340
    %v382 = vpack.c.b16 %v343, %v342
    %v383 = vpack.c.b16 %v345, %v344
    %v384 = vpack.c.b16 %v347, %v346
    %v385 = vpack.c.b16 %v349, %v348
    %v386 = vpack.c.b16 %v351, %v350
    %v387 = vpack.c.b16 %v353, %v352
    %v388 = vpack.c.b16 %v355, %v354
    %v389 = vpack.c.b16 %v357, %v356
    %v396 = vunpack.c.l.b16 %v224
    %v397 = vunpack.c.l.b16 %v225
    %v398 = vunpack.c.l.b16 %v226
    %v399 = vunpack.c.l.b16 %v227
    %v400 = vunpack.c.l.b16 %v228
    %v401 = vunpack.c.l.b16 %v229
    %v402 = vpack.c.b16 %v397, %v396
    %v403 = vpack.c.b16 %v399, %v398
    %v404 = vpack.c.b16 %v401, %v400
    %vm408 = vcmask 392192
    %v410 = vsel %vm408, %v358, 0
    %v413 = vsel %vm408, %v359, 0
    %v416 = vsel %vm408, %v360, 0
    %v419 = vsel %vm408, %v361, 0
    %v422 = vsel %vm408, %v362, 0
    %v425 = vsel %vm408, %v363, 0
    %v428 = vsel %vm408, %v364, 0
    %v431 = vsel %vm408, %v365, 0
    %v434 = vsel %vm408, %v366, 0
    %v437 = vsel %vm408, %v367, 0
    %v440 = vsel %vm408, %v368, 0
    %v443 = vsel %vm408, %v369, 0
    %v446 = vsel %vm408, %v370, 0
    %v449 = vsel %vm408, %v371, 0
    %v452 = vsel %vm408, %v372, 0
    %v455 = vsel %vm408, %v373, 0
    %v458 = vsel %vm408, %v374, 0
    %v461 = vsel %vm408, %v375, 0
    %v464 = vsel %vm408, %v376, 0
    %v467 = vsel %vm408, %v377, 0
    %v470 = vsel %vm408, %v378, 0
    %v473 = vsel %vm408, %v379, 0
    %v476 = vsel %vm408, %v380, 0
    %v479 = vsel %vm408, %v381, 0
    %v482 = vsel %vm408, %v382, 0
    %v485 = vsel %vm408, %v383, 0
    %v488 = vsel %vm408, %v384, 0
    %v491 = vsel %vm408, %v385, 0
    %v494 = vsel %vm408, %v386, 0
    %v497 = vsel %vm408, %v387, 0
    %v500 = vsel %vm408, %v388, 0
    %v503 = vsel %vm408, %v389, 0
    %505 = vmatprep.subr.bf16.mxu0 0
    %506 = vmatpush1.bf16.msra.mxu0 0
    %507 = vmatprep.subr.bf16.mxu0 0
    %508 = vmatpush1.bf16.msra.mxu0 0
    %509 = vmatprep.subr.bf16.mxu0 0
    %510 = vmatpush1.bf16.msra.mxu0 0
    %511 = vmatprep.subr.bf16.mxu0 0
    %512 = vmatpush1.bf16.msra.mxu0 0
    %513 = vmatprep.subr.bf16.mxu0 0
    %514 = vmatpush1.bf16.msra.mxu0 0
    %515 = vmatprep.subr.bf16.mxu0 0
    %516 = vmatpush1.bf16.msra.mxu0 %v404
    %517 = vmatprep.subr.bf16.mxu0 0
    %518 = vmatpush1.bf16.msra.mxu0 %v403
    %519 = vmatprep.subr.bf16.mxu0 0
    %520 = vmatpush1.bf16.msra.mxu0 %v402
    %521 = vmatprep.subr.bf16.mxu0 0
    %522 = vmatpush2.bf16.msra.mxu0 0
    %523 = vmatprep.subr.bf16.mxu0 0
    %524 = vmatpush2.bf16.msra.mxu0 0
    %525 = vmatprep.subr.bf16.mxu0 0
    %526 = vmatpush2.bf16.msra.mxu0 0
    %527 = vmatprep.subr.bf16.mxu0 0
    %528 = vmatpush2.bf16.msra.mxu0 0
    %529 = vmatprep.subr.bf16.mxu0 0
    %530 = vmatpush2.bf16.msra.mxu0 0
    %531 = vmatprep.subr.bf16.mxu0 0
    %532 = vmatpush2.bf16.msra.mxu0 0
    %533 = vmatprep.subr.bf16.mxu0 0
    %534 = vmatpush2.bf16.msra.mxu0 0
    %535 = vmatprep.subr.bf16.mxu0 0
    %536 = vmatpush2.bf16.msra.mxu0 0
    %537 = vmatprep.mubr.bf16.mxu0 0
    %538 = vmatmul.mubr.bf16.gmra.mxu0 %v410
    %v539 = vpop.f32.mrf.mxu0
    %v540 = vadd.f32 0.0, %v539
    %v541 = vpop.f32.mrf.mxu0
    %v542 = vpop.f32.mrf.mxu0
    %v543 = vadd.f32 0.0, %v542
    %v544 = vpop.f32.mrf.mxu0
    %545 = vmatprep.mubr.bf16.mxu0 0
    %546 = vmatmul.mubr.bf16.gmra.mxu0 %v413
    %v547 = vpop.f32.mrf.mxu0
    %v548 = vadd.f32 0.0, %v547
    %v549 = vpop.f32.mrf.mxu0
    %v550 = vpop.f32.mrf.mxu0
    %v551 = vadd.f32 0.0, %v550
    %v552 = vpop.f32.mrf.mxu0
    %553 = vmatprep.mubr.bf16.mxu0 0
    %554 = vmatmul.mubr.bf16.gmra.mxu0 %v416
    %v555 = vpop.f32.mrf.mxu0
    %v556 = vadd.f32 0.0, %v555
    %v557 = vpop.f32.mrf.mxu0
    %v558 = vpop.f32.mrf.mxu0
    %v559 = vadd.f32 0.0, %v558
    %v560 = vpop.f32.mrf.mxu0
    %561 = vmatprep.mubr.bf16.mxu0 0
    %562 = vmatmul.mubr.bf16.gmra.mxu0 %v419
    %v563 = vpop.f32.mrf.mxu0
    %v564 = vadd.f32 0.0, %v563
    %v565 = vpop.f32.mrf.mxu0
    %v566 = vpop.f32.mrf.mxu0
    %v567 = vadd.f32 0.0, %v566
    %v568 = vpop.f32.mrf.mxu0
    %569 = vmatprep.mubr.bf16.mxu0 0
    %570 = vmatmul.mubr.bf16.gmra.mxu0 %v422
    %v571 = vpop.f32.mrf.mxu0
    %v572 = vadd.f32 0.0, %v571
    %v573 = vpop.f32.mrf.mxu0
    %v574 = vpop.f32.mrf.mxu0
    %v575 = vadd.f32 0.0, %v574
    %v576 = vpop.f32.mrf.mxu0
    %577 = vmatprep.mubr.bf16.mxu0 0
    %578 = vmatmul.mubr.bf16.gmra.mxu0 %v425
    %v579 = vpop.f32.mrf.mxu0
    %v580 = vadd.f32 0.0, %v579
    %v581 = vpop.f32.mrf.mxu0
    %v582 = vpop.f32.mrf.mxu0
    %v583 = vadd.f32 0.0, %v582
    %v584 = vpop.f32.mrf.mxu0
    %585 = vmatprep.mubr.bf16.mxu0 0
    %586 = vmatmul.mubr.bf16.gmra.mxu0 %v428
    %v587 = vpop.f32.mrf.mxu0
    %v588 = vadd.f32 0.0, %v587
    %v589 = vpop.f32.mrf.mxu0
    %v590 = vpop.f32.mrf.mxu0
    %v591 = vadd.f32 0.0, %v590
    %v592 = vpop.f32.mrf.mxu0
    %593 = vmatprep.mubr.bf16.mxu0 0
    %594 = vmatmul.mubr.bf16.gmra.mxu0 %v431
    %v595 = vpop.f32.mrf.mxu0
    %v596 = vadd.f32 0.0, %v595
    %v597 = vpop.f32.mrf.mxu0
    %v598 = vpop.f32.mrf.mxu0
    %v599 = vadd.f32 0.0, %v598
    %v600 = vpop.f32.mrf.mxu0
    %601 = vmatprep.mubr.bf16.mxu0 0
    %602 = vmatmul.mubr.bf16.gmra.mxu0 %v434
    %v603 = vpop.f32.mrf.mxu0
    %v604 = vadd.f32 0.0, %v603
    %v605 = vpop.f32.mrf.mxu0
    %v606 = vpop.f32.mrf.mxu0
    %v607 = vadd.f32 0.0, %v606
    %v608 = vpop.f32.mrf.mxu0
    %609 = vmatprep.mubr.bf16.mxu0 0
    %610 = vmatmul.mubr.bf16.gmra.mxu0 %v437
    %v611 = vpop.f32.mrf.mxu0
    %v612 = vadd.f32 0.0, %v611
    %v613 = vpop.f32.mrf.mxu0
    %v614 = vpop.f32.mrf.mxu0
    %v615 = vadd.f32 0.0, %v614
    %v616 = vpop.f32.mrf.mxu0
    %617 = vmatprep.mubr.bf16.mxu0 0
    %618 = vmatmul.mubr.bf16.gmra.mxu0 %v440
    %v619 = vpop.f32.mrf.mxu0
    %v620 = vadd.f32 0.0, %v619
    %v621 = vpop.f32.mrf.mxu0
    %v622 = vpop.f32.mrf.mxu0
    %v623 = vadd.f32 0.0, %v622
    %v624 = vpop.f32.mrf.mxu0
    %625 = vmatprep.mubr.bf16.mxu0 0
    %626 = vmatmul.mubr.bf16.gmra.mxu0 %v443
    %v627 = vpop.f32.mrf.mxu0
    %v628 = vadd.f32 0.0, %v627
    %v629 = vpop.f32.mrf.mxu0
    %v630 = vpop.f32.mrf.mxu0
    %v631 = vadd.f32 0.0, %v630
    %v632 = vpop.f32.mrf.mxu0
    %633 = vmatprep.mubr.bf16.mxu0 0
    %634 = vmatmul.mubr.bf16.gmra.mxu0 %v446
    %v635 = vpop.f32.mrf.mxu0
    %v636 = vadd.f32 0.0, %v635
    %v637 = vpop.f32.mrf.mxu0
    %v638 = vpop.f32.mrf.mxu0
    %v639 = vadd.f32 0.0, %v638
    %v640 = vpop.f32.mrf.mxu0
    %641 = vmatprep.mubr.bf16.mxu0 0
    %642 = vmatmul.mubr.bf16.gmra.mxu0 %v449
    %v643 = vpop.f32.mrf.mxu0
    %v644 = vadd.f32 0.0, %v643
    %v645 = vpop.f32.mrf.mxu0
    %v646 = vpop.f32.mrf.mxu0
    %v647 = vadd.f32 0.0, %v646
    %v648 = vpop.f32.mrf.mxu0
    %649 = vmatprep.mubr.bf16.mxu0 0
    %650 = vmatmul.mubr.bf16.gmra.mxu0 %v452
    %v651 = vpop.f32.mrf.mxu0
    %v652 = vadd.f32 0.0, %v651
    %v653 = vpop.f32.mrf.mxu0
    %v654 = vpop.f32.mrf.mxu0
    %v655 = vadd.f32 0.0, %v654
    %v656 = vpop.f32.mrf.mxu0
    %657 = vmatprep.mubr.bf16.mxu0 0
    %658 = vmatmul.mubr.bf16.gmra.mxu0 %v455
    %v659 = vpop.f32.mrf.mxu0
    %v660 = vadd.f32 0.0, %v659
    %v661 = vpop.f32.mrf.mxu0
    %v662 = vpop.f32.mrf.mxu0
    %v663 = vadd.f32 0.0, %v662
    %v664 = vpop.f32.mrf.mxu0
    %665 = vmatprep.mubr.bf16.mxu0 0
    %666 = vmatmul.mubr.bf16.gmra.mxu0 %v458
    %v667 = vpop.f32.mrf.mxu0
    %v668 = vadd.f32 0.0, %v667
    %v669 = vpop.f32.mrf.mxu0
    %v670 = vpop.f32.mrf.mxu0
    %v671 = vadd.f32 0.0, %v670
    %v672 = vpop.f32.mrf.mxu0
    %673 = vmatprep.mubr.bf16.mxu0 0
    %674 = vmatmul.mubr.bf16.gmra.mxu0 %v461
    %v675 = vpop.f32.mrf.mxu0
    %v676 = vadd.f32 0.0, %v675
    %v677 = vpop.f32.mrf.mxu0
    %v678 = vpop.f32.mrf.mxu0
    %v679 = vadd.f32 0.0, %v678
    %v680 = vpop.f32.mrf.mxu0
    %681 = vmatprep.mubr.bf16.mxu0 0
    %682 = vmatmul.mubr.bf16.gmra.mxu0 %v464
    %v683 = vpop.f32.mrf.mxu0
    %v684 = vadd.f32 0.0, %v683
    %v685 = vpop.f32.mrf.mxu0
    %v686 = vpop.f32.mrf.mxu0
    %v687 = vadd.f32 0.0, %v686
    %v688 = vpop.f32.mrf.mxu0
    %689 = vmatprep.mubr.bf16.mxu0 0
    %690 = vmatmul.mubr.bf16.gmra.mxu0 %v467
    %v691 = vpop.f32.mrf.mxu0
    %v692 = vadd.f32 0.0, %v691
    %v693 = vpop.f32.mrf.mxu0
    %v694 = vpop.f32.mrf.mxu0
    %v695 = vadd.f32 0.0, %v694
    %v696 = vpop.f32.mrf.mxu0
    %697 = vmatprep.mubr.bf16.mxu0 0
    %698 = vmatmul.mubr.bf16.gmra.mxu0 %v470
    %v699 = vpop.f32.mrf.mxu0
    %v700 = vadd.f32 0.0, %v699
    %v701 = vpop.f32.mrf.mxu0
    %v702 = vpop.f32.mrf.mxu0
    %v703 = vadd.f32 0.0, %v702
    %v704 = vpop.f32.mrf.mxu0
    %705 = vmatprep.mubr.bf16.mxu0 0
    %706 = vmatmul.mubr.bf16.gmra.mxu0 %v473
    %v707 = vpop.f32.mrf.mxu0
    %v708 = vadd.f32 0.0, %v707
    %v709 = vpop.f32.mrf.mxu0
    %v710 = vpop.f32.mrf.mxu0
    %v711 = vadd.f32 0.0, %v710
    %v712 = vpop.f32.mrf.mxu0
    %713 = vmatprep.mubr.bf16.mxu0 0
    %714 = vmatmul.mubr.bf16.gmra.mxu0 %v476
    %v715 = vpop.f32.mrf.mxu0
    %v716 = vadd.f32 0.0, %v715
    %v717 = vpop.f32.mrf.mxu0
    %v718 = vpop.f32.mrf.mxu0
    %v719 = vadd.f32 0.0, %v718
    %v720 = vpop.f32.mrf.mxu0
    %721 = vmatprep.mubr.bf16.mxu0 0
    %722 = vmatmul.mubr.bf16.gmra.mxu0 %v479
    %v723 = vpop.f32.mrf.mxu0
    %v724 = vadd.f32 0.0, %v723
    %v725 = vpop.f32.mrf.mxu0
    %v726 = vpop.f32.mrf.mxu0
    %v727 = vadd.f32 0.0, %v726
    %v728 = vpop.f32.mrf.mxu0
    %729 = vmatprep.mubr.bf16.mxu0 0
    %730 = vmatmul.mubr.bf16.gmra.mxu0 %v482
    %v731 = vpop.f32.mrf.mxu0
    %v732 = vadd.f32 0.0, %v731
    %v733 = vpop.f32.mrf.mxu0
    %v734 = vpop.f32.mrf.mxu0
    %v735 = vadd.f32 0.0, %v734
    %v736 = vpop.f32.mrf.mxu0
    %737 = vmatprep.mubr.bf16.mxu0 0
    %738 = vmatmul.mubr.bf16.gmra.mxu0 %v485
    %v739 = vpop.f32.mrf.mxu0
    %v740 = vadd.f32 0.0, %v739
    %v741 = vpop.f32.mrf.mxu0
    %v742 = vpop.f32.mrf.mxu0
    %v743 = vadd.f32 0.0, %v742
    %v744 = vpop.f32.mrf.mxu0
    %745 = vmatprep.mubr.bf16.mxu0 0
    %746 = vmatmul.mubr.bf16.gmra.mxu0 %v488
    %v747 = vpop.f32.mrf.mxu0
    %v748 = vadd.f32 0.0, %v747
    %v749 = vpop.f32.mrf.mxu0
    %v750 = vpop.f32.mrf.mxu0
    %v751 = vadd.f32 0.0, %v750
    %v752 = vpop.f32.mrf.mxu0
    %753 = vmatprep.mubr.bf16.mxu0 0
    %754 = vmatmul.mubr.bf16.gmra.mxu0 %v491
    %v755 = vpop.f32.mrf.mxu0
    %v756 = vadd.f32 0.0, %v755
    %v757 = vpop.f32.mrf.mxu0
    %v758 = vpop.f32.mrf.mxu0
    %v759 = vadd.f32 0.0, %v758
    %v760 = vpop.f32.mrf.mxu0
    %761 = vmatprep.mubr.bf16.mxu0 0
    %762 = vmatmul.mubr.bf16.gmra.mxu0 %v494
    %v763 = vpop.f32.mrf.mxu0
    %v764 = vadd.f32 0.0, %v763
    %v765 = vpop.f32.mrf.mxu0
    %v766 = vpop.f32.mrf.mxu0
    %v767 = vadd.f32 0.0, %v766
    %v768 = vpop.f32.mrf.mxu0
    %769 = vmatprep.mubr.bf16.mxu0 0
    %770 = vmatmul.mubr.bf16.gmra.mxu0 %v497
    %v771 = vpop.f32.mrf.mxu0
    %v772 = vadd.f32 0.0, %v771
    %v773 = vpop.f32.mrf.mxu0
    %v774 = vpop.f32.mrf.mxu0
    %v775 = vadd.f32 0.0, %v774
    %v776 = vpop.f32.mrf.mxu0
    %777 = vmatprep.mubr.bf16.mxu0 0
    %778 = vmatmul.mubr.bf16.gmra.mxu0 %v500
    %v779 = vpop.f32.mrf.mxu0
    %v780 = vadd.f32 0.0, %v779
    %v781 = vpop.f32.mrf.mxu0
    %v782 = vpop.f32.mrf.mxu0
    %v783 = vadd.f32 0.0, %v782
    %v784 = vpop.f32.mrf.mxu0
    %785 = vmatprep.mubr.bf16.mxu0 0
    %786 = vmatmul.mubr.bf16.gmra.mxu0 %v503
    %v787 = vpop.f32.mrf.mxu0
    %v788 = vadd.f32 0.0, %v787
    %v789 = vpop.f32.mrf.mxu0
    %v790 = vpop.f32.mrf.mxu0
    %v791 = vadd.f32 0.0, %v790
    %v792 = vpop.f32.mrf.mxu0
    %793 = vdwg.mxu0
    %v794 = vadd.f32 %v96, %v540
    %v795 = vadd.f32 %v97, %v543
    %v796 = vadd.f32 %v98, %v548
    %v797 = vadd.f32 %v99, %v551
    %v798 = vadd.f32 %v100, %v556
    %v799 = vadd.f32 %v101, %v559
    %v800 = vadd.f32 %v102, %v564
    %v801 = vadd.f32 %v103, %v567
    %v802 = vadd.f32 %v104, %v572
    %v803 = vadd.f32 %v105, %v575
    %v804 = vadd.f32 %v106, %v580
    %v805 = vadd.f32 %v107, %v583
    %v806 = vadd.f32 %v108, %v588
    %v807 = vadd.f32 %v109, %v591
    %v808 = vadd.f32 %v110, %v596
    %v809 = vadd.f32 %v111, %v599
    %v810 = vadd.f32 %v112, %v604
    %v811 = vadd.f32 %v113, %v607
    %v812 = vadd.f32 %v114, %v612
    %v813 = vadd.f32 %v115, %v615
    %v814 = vadd.f32 %v116, %v620
    %v815 = vadd.f32 %v117, %v623
    %v816 = vadd.f32 %v118, %v628
    %v817 = vadd.f32 %v119, %v631
    %v818 = vadd.f32 %v120, %v636
    %v819 = vadd.f32 %v121, %v639
    %v820 = vadd.f32 %v122, %v644
    %v821 = vadd.f32 %v123, %v647
    %v822 = vadd.f32 %v124, %v652
    %v823 = vadd.f32 %v125, %v655
    %v824 = vadd.f32 %v126, %v660
    %v825 = vadd.f32 %v127, %v663
    %v826 = vadd.f32 %v128, %v668
    %v827 = vadd.f32 %v129, %v671
    %v828 = vadd.f32 %v130, %v676
    %v829 = vadd.f32 %v131, %v679
    %v830 = vadd.f32 %v132, %v684
    %v831 = vadd.f32 %v133, %v687
    %v832 = vadd.f32 %v134, %v692
    %v833 = vadd.f32 %v135, %v695
    %v834 = vadd.f32 %v136, %v700
    %v835 = vadd.f32 %v137, %v703
    %v836 = vadd.f32 %v138, %v708
    %v837 = vadd.f32 %v139, %v711
    %v838 = vadd.f32 %v140, %v716
    %v839 = vadd.f32 %v141, %v719
    %v840 = vadd.f32 %v142, %v724
    %v841 = vadd.f32 %v143, %v727
    %v842 = vadd.f32 %v144, %v732
    %v843 = vadd.f32 %v145, %v735
    %v844 = vadd.f32 %v146, %v740
    %v845 = vadd.f32 %v147, %v743
    %v846 = vadd.f32 %v148, %v748
    %v847 = vadd.f32 %v149, %v751
    %v848 = vadd.f32 %v150, %v756
    %v849 = vadd.f32 %v151, %v759
    %v850 = vadd.f32 %v152, %v764
    %v851 = vadd.f32 %v153, %v767
    %v852 = vadd.f32 %v154, %v772
    %v853 = vadd.f32 %v155, %v775
    %v854 = vadd.f32 %v156, %v780
    %v855 = vadd.f32 %v157, %v783
    %v856 = vadd.f32 %v158, %v788
    %v857 = vadd.f32 %v159, %v791
    %vm858 = vcmask 523264
    %859 = vst.msk [vmem:[#allocation2] sm:$0xff] %vm858, %v794
    %860 = vst.msk [vmem:[#allocation2 + $0x8] sm:$0xff] %vm858, %v795
    %861 = vst.msk [vmem:[#allocation2 + $0x10] sm:$0xff] %vm858, %v796
    %862 = vst.msk [vmem:[#allocation2 + $0x18] sm:$0xff] %vm858, %v797
    %863 = vst.msk [vmem:[#allocation2 + $0x20] sm:$0xff] %vm858, %v798
    %864 = vst.msk [vmem:[#allocation2 + $0x28] sm:$0xff] %vm858, %v799
    %865 = vst.msk [vmem:[#allocation2 + $0x30] sm:$0xff] %vm858, %v800
    %866 = vst.msk [vmem:[#allocation2 + $0x38] sm:$0xff] %vm858, %v801
    %867 = vst.msk [vmem:[#allocation2 + $0x40] sm:$0xff] %vm858, %v802
    %868 = vst.msk [vmem:[#allocation2 + $0x48] sm:$0xff] %vm858, %v803
    %869 = vst.msk [vmem:[#allocation2 + $0x50] sm:$0xff] %vm858, %v804
    %870 = vst.msk [vmem:[#allocation2 + $0x58] sm:$0xff] %vm858, %v805
    %871 = vst.msk [vmem:[#allocation2 + $0x60] sm:$0xff] %vm858, %v806
    %872 = vst.msk [vmem:[#allocation2 + $0x68] sm:$0xff] %vm858, %v807
    %873 = vst.msk [vmem:[#allocation2 + $0x70] sm:$0xff] %vm858, %v808
    %874 = vst.msk [vmem:[#allocation2 + $0x78] sm:$0xff] %vm858, %v809
    %875 = vst.msk [vmem:[#allocation2 + $0x80] sm:$0xff] %vm858, %v810
    %876 = vst.msk [vmem:[#allocation2 + $0x88] sm:$0xff] %vm858, %v811
    %877 = vst.msk [vmem:[#allocation2 + $0x90] sm:$0xff] %vm858, %v812
    %878 = vst.msk [vmem:[#allocation2 + $0x98] sm:$0xff] %vm858, %v813
    %879 = vst.msk [vmem:[#allocation2 + $0xa0] sm:$0xff] %vm858, %v814
    %880 = vst.msk [vmem:[#allocation2 + $0xa8] sm:$0xff] %vm858, %v815
    %881 = vst.msk [vmem:[#allocation2 + $0xb0] sm:$0xff] %vm858, %v816
    %882 = vst.msk [vmem:[#allocation2 + $0xb8] sm:$0xff] %vm858, %v817
    %883 = vst.msk [vmem:[#allocation2 + $0xc0] sm:$0xff] %vm858, %v818
    %884 = vst.msk [vmem:[#allocation2 + $0xc8] sm:$0xff] %vm858, %v819
    %885 = vst.msk [vmem:[#allocation2 + $0xd0] sm:$0xff] %vm858, %v820
    %886 = vst.msk [vmem:[#allocation2 + $0xd8] sm:$0xff] %vm858, %v821
    %887 = vst.msk [vmem:[#allocation2 + $0xe0] sm:$0xff] %vm858, %v822
    %888 = vst.msk [vmem:[#allocation2 + $0xe8] sm:$0xff] %vm858, %v823
    %889 = vst.msk [vmem:[#allocation2 + $0xf0] sm:$0xff] %vm858, %v824
    %890 = vst.msk [vmem:[#allocation2 + $0xf8] sm:$0xff] %vm858, %v825
    %891 = vst.msk [vmem:[#allocation2 + $0x100] sm:$0xff] %vm858, %v826
    %892 = vst.msk [vmem:[#allocation2 + $0x108] sm:$0xff] %vm858, %v827
    %893 = vst.msk [vmem:[#allocation2 + $0x110] sm:$0xff] %vm858, %v828
    %894 = vst.msk [vmem:[#allocation2 + $0x118] sm:$0xff] %vm858, %v829
    %895 = vst.msk [vmem:[#allocation2 + $0x120] sm:$0xff] %vm858, %v830
    %896 = vst.msk [vmem:[#allocation2 + $0x128] sm:$0xff] %vm858, %v831
    %897 = vst.msk [vmem:[#allocation2 + $0x130] sm:$0xff] %vm858, %v832
    %898 = vst.msk [vmem:[#allocation2 + $0x138] sm:$0xff] %vm858, %v833
    %899 = vst.msk [vmem:[#allocation2 + $0x140] sm:$0xff] %vm858, %v834
    %900 = vst.msk [vmem:[#allocation2 + $0x148] sm:$0xff] %vm858, %v835
    %901 = vst.msk [vmem:[#allocation2 + $0x150] sm:$0xff] %vm858, %v836
    %902 = vst.msk [vmem:[#allocation2 + $0x158] sm:$0xff] %vm858, %v837
    %903 = vst.msk [vmem:[#allocation2 + $0x160] sm:$0xff] %vm858, %v838
    %904 = vst.msk [vmem:[#allocation2 + $0x168] sm:$0xff] %vm858, %v839
    %905 = vst.msk [vmem:[#allocation2 + $0x170] sm:$0xff] %vm858, %v840
    %906 = vst.msk [vmem:[#allocation2 + $0x178] sm:$0xff] %vm858, %v841
    %907 = vst.msk [vmem:[#allocation2 + $0x180] sm:$0xff] %vm858, %v842
    %908 = vst.msk [vmem:[#allocation2 + $0x188] sm:$0xff] %vm858, %v843
    %909 = vst.msk [vmem:[#allocation2 + $0x190] sm:$0xff] %vm858, %v844
    %910 = vst.msk [vmem:[#allocation2 + $0x198] sm:$0xff] %vm858, %v845
    %911 = vst.msk [vmem:[#allocation2 + $0x1a0] sm:$0xff] %vm858, %v846
    %912 = vst.msk [vmem:[#allocation2 + $0x1a8] sm:$0xff] %vm858, %v847
    %913 = vst.msk [vmem:[#allocation2 + $0x1b0] sm:$0xff] %vm858, %v848
    %914 = vst.msk [vmem:[#allocation2 + $0x1b8] sm:$0xff] %vm858, %v849
    %915 = vst.msk [vmem:[#allocation2 + $0x1c0] sm:$0xff] %vm858, %v850
    %916 = vst.msk [vmem:[#allocation2 + $0x1c8] sm:$0xff] %vm858, %v851
    %917 = vst.msk [vmem:[#allocation2 + $0x1d0] sm:$0xff] %vm858, %v852
    %918 = vst.msk [vmem:[#allocation2 + $0x1d8] sm:$0xff] %vm858, %v853
    %919 = vst.msk [vmem:[#allocation2 + $0x1e0] sm:$0xff] %vm858, %v854
    %920 = vst.msk [vmem:[#allocation2 + $0x1e8] sm:$0xff] %vm858, %v855
    %921 = vst.msk [vmem:[#allocation2 + $0x1f0] sm:$0xff] %vm858, %v856
    %922 = vst.msk [vmem:[#allocation2 + $0x1f8] sm:$0xff] %vm858, %v857
    // Predicated region
    $region22: #{discriminator_forward.5} parent=1 // pred_check
      %p923 = pneg %p27
    $region23: #{discriminator_forward.5} parent=1 // pred_check_branch
      %925 = sbr.rel (%p923) target = $region25
    $region24: #{discriminator_forward.5} parent=1 // pred_region
      %v926 = vld [vmem:[#allocation2] sm:$0xff]
      %v927 = vld [vmem:[#allocation2 + $0x8] sm:$0xff]
      %v928 = vld [vmem:[#allocation2 + $0x10] sm:$0xff]
      %v929 = vld [vmem:[#allocation2 + $0x18] sm:$0xff]
      %v930 = vld [vmem:[#allocation2 + $0x20] sm:$0xff]
      %v931 = vld [vmem:[#allocation2 + $0x28] sm:$0xff]
      %v932 = vld [vmem:[#allocation2 + $0x30] sm:$0xff]
      %v933 = vld [vmem:[#allocation2 + $0x38] sm:$0xff]
      %v934 = vld [vmem:[#allocation2 + $0x40] sm:$0xff]
      %v935 = vld [vmem:[#allocation2 + $0x48] sm:$0xff]
      %v936 = vld [vmem:[#allocation2 + $0x50] sm:$0xff]
      %v937 = vld [vmem:[#allocation2 + $0x58] sm:$0xff]
      %v938 = vld [vmem:[#allocation2 + $0x60] sm:$0xff]
      %v939 = vld [vmem:[#allocation2 + $0x68] sm:$0xff]
      %v940 = vld [vmem:[#allocation2 + $0x70] sm:$0xff]
      %v941 = vld [vmem:[#allocation2 + $0x78] sm:$0xff]
      %v942 = vld [vmem:[#allocation2 + $0x80] sm:$0xff]
      %v943 = vld [vmem:[#allocation2 + $0x88] sm:$0xff]
      %v944 = vld [vmem:[#allocation2 + $0x90] sm:$0xff]
      %v945 = vld [vmem:[#allocation2 + $0x98] sm:$0xff]
      %v946 = vld [vmem:[#allocation2 + $0xa0] sm:$0xff]
      %v947 = vld [vmem:[#allocation2 + $0xa8] sm:$0xff]
      %v948 = vld [vmem:[#allocation2 + $0xb0] sm:$0xff]
      %v949 = vld [vmem:[#allocation2 + $0xb8] sm:$0xff]
      %v950 = vld [vmem:[#allocation2 + $0xc0] sm:$0xff]
      %v951 = vld [vmem:[#allocation2 + $0xc8] sm:$0xff]
      %v952 = vld [vmem:[#allocation2 + $0xd0] sm:$0xff]
      %v953 = vld [vmem:[#allocation2 + $0xd8] sm:$0xff]
      %v954 = vld [vmem:[#allocation2 + $0xe0] sm:$0xff]
      %v955 = vld [vmem:[#allocation2 + $0xe8] sm:$0xff]
      %v956 = vld [vmem:[#allocation2 + $0xf0] sm:$0xff]
      %v957 = vld [vmem:[#allocation2 + $0xf8] sm:$0xff]
      %v958 = vld [vmem:[#allocation2 + $0x100] sm:$0xff]
      %v959 = vld [vmem:[#allocation2 + $0x108] sm:$0xff]
      %v960 = vld [vmem:[#allocation2 + $0x110] sm:$0xff]
      %v961 = vld [vmem:[#allocation2 + $0x118] sm:$0xff]
      %v962 = vld [vmem:[#allocation2 + $0x120] sm:$0xff]
      %v963 = vld [vmem:[#allocation2 + $0x128] sm:$0xff]
      %v964 = vld [vmem:[#allocation2 + $0x130] sm:$0xff]
      %v965 = vld [vmem:[#allocation2 + $0x138] sm:$0xff]
      %v966 = vld [vmem:[#allocation2 + $0x140] sm:$0xff]
      %v967 = vld [vmem:[#allocation2 + $0x148] sm:$0xff]
      %v968 = vld [vmem:[#allocation2 + $0x150] sm:$0xff]
      %v969 = vld [vmem:[#allocation2 + $0x158] sm:$0xff]
      %v970 = vld [vmem:[#allocation2 + $0x160] sm:$0xff]
      %v971 = vld [vmem:[#allocation2 + $0x168] sm:$0xff]
      %v972 = vld [vmem:[#allocation2 + $0x170] sm:$0xff]
      %v973 = vld [vmem:[#allocation2 + $0x178] sm:$0xff]
      %v974 = vld [vmem:[#allocation2 + $0x180] sm:$0xff]
      %v975 = vld [vmem:[#allocation2 + $0x188] sm:$0xff]
      %v976 = vld [vmem:[#allocation2 + $0x190] sm:$0xff]
      %v977 = vld [vmem:[#allocation2 + $0x198] sm:$0xff]
      %v978 = vld [vmem:[#allocation2 + $0x1a0] sm:$0xff]
      %v979 = vld [vmem:[#allocation2 + $0x1a8] sm:$0xff]
      %v980 = vld [vmem:[#allocation2 + $0x1b0] sm:$0xff]
      %v981 = vld [vmem:[#allocation2 + $0x1b8] sm:$0xff]
      %v982 = vld [vmem:[#allocation2 + $0x1c0] sm:$0xff]
      %v983 = vld [vmem:[#allocation2 + $0x1c8] sm:$0xff]
      %v984 = vld [vmem:[#allocation2 + $0x1d0] sm:$0xff]
      %v985 = vld [vmem:[#allocation2 + $0x1d8] sm:$0xff]
      %v986 = vld [vmem:[#allocation2 + $0x1e0] sm:$0xff]
      %v987 = vld [vmem:[#allocation2 + $0x1e8] sm:$0xff]
      %v988 = vld [vmem:[#allocation2 + $0x1f0] sm:$0xff]
      %v989 = vld [vmem:[#allocation2 + $0x1f8] sm:$0xff]
      %v990 = vld [vmem:[#allocation3] sm:$0x1]
      %v992 = vlaneseq
      %v993 = vshrl.u32 %v992, 7
      %v994 = vsub.s32 0, %v993
      %v995 = vrot.slane %v990, %v994
      %v997 = vadd.f32 %v926, %v995
      %v998 = vadd.f32 %v927, %v995
      %v999 = vadd.f32 %v928, %v995
      %v1000 = vadd.f32 %v929, %v995
      %v1001 = vadd.f32 %v930, %v995
      %v1002 = vadd.f32 %v931, %v995
      %v1003 = vadd.f32 %v932, %v995
      %v1004 = vadd.f32 %v933, %v995
      %v1005 = vadd.f32 %v934, %v995
      %v1006 = vadd.f32 %v935, %v995
      %v1007 = vadd.f32 %v936, %v995
      %v1008 = vadd.f32 %v937, %v995
      %v1009 = vadd.f32 %v938, %v995
      %v1010 = vadd.f32 %v939, %v995
      %v1011 = vadd.f32 %v940, %v995
      %v1012 = vadd.f32 %v941, %v995
      %v1013 = vadd.f32 %v942, %v995
      %v1014 = vadd.f32 %v943, %v995
      %v1015 = vadd.f32 %v944, %v995
      %v1016 = vadd.f32 %v945, %v995
      %v1017 = vadd.f32 %v946, %v995
      %v1018 = vadd.f32 %v947, %v995
      %v1019 = vadd.f32 %v948, %v995
      %v1020 = vadd.f32 %v949, %v995
      %v1021 = vadd.f32 %v950, %v995
      %v1022 = vadd.f32 %v951, %v995
      %v1023 = vadd.f32 %v952, %v995
      %v1024 = vadd.f32 %v953, %v995
      %v1025 = vadd.f32 %v954, %v995
      %v1026 = vadd.f32 %v955, %v995
      %v1027 = vadd.f32 %v956, %v995
      %v1028 = vadd.f32 %v957, %v995
      %v1029 = vadd.f32 %v958, %v995
      %v1030 = vadd.f32 %v959, %v995
      %v1031 = vadd.f32 %v960, %v995
      %v1032 = vadd.f32 %v961, %v995
      %v1033 = vadd.f32 %v962, %v995
      %v1034 = vadd.f32 %v963, %v995
      %v1035 = vadd.f32 %v964, %v995
      %v1036 = vadd.f32 %v965, %v995
      %v1037 = vadd.f32 %v966, %v995
      %v1038 = vadd.f32 %v967, %v995
      %v1039 = vadd.f32 %v968, %v995
      %v1040 = vadd.f32 %v969, %v995
      %v1041 = vadd.f32 %v970, %v995
      %v1042 = vadd.f32 %v971, %v995
      %v1043 = vadd.f32 %v972, %v995
      %v1044 = vadd.f32 %v973, %v995
      %v1045 = vadd.f32 %v974, %v995
      %v1046 = vadd.f32 %v975, %v995
      %v1047 = vadd.f32 %v976, %v995
      %v1048 = vadd.f32 %v977, %v995
      %v1049 = vadd.f32 %v978, %v995
      %v1050 = vadd.f32 %v979, %v995
      %v1051 = vadd.f32 %v980, %v995
      %v1052 = vadd.f32 %v981, %v995
      %v1053 = vadd.f32 %v982, %v995
      %v1054 = vadd.f32 %v983, %v995
      %v1055 = vadd.f32 %v984, %v995
      %v1056 = vadd.f32 %v985, %v995
      %v1057 = vadd.f32 %v986, %v995
      %v1058 = vadd.f32 %v987, %v995
      %v1059 = vadd.f32 %v988, %v995
      %v1060 = vadd.f32 %v989, %v995
      %vm1061 = vcmp.ge.f32.partialorder %v997, 0.0
      %vm1062 = vcmp.ge.f32.partialorder %v998, 0.0
      %vm1063 = vcmp.ge.f32.partialorder %v999, 0.0
      %vm1064 = vcmp.ge.f32.partialorder %v1000, 0.0
      %vm1065 = vcmp.ge.f32.partialorder %v1001, 0.0
      %vm1066 = vcmp.ge.f32.partialorder %v1002, 0.0
      %vm1067 = vcmp.ge.f32.partialorder %v1003, 0.0
      %vm1068 = vcmp.ge.f32.partialorder %v1004, 0.0
      %vm1069 = vcmp.ge.f32.partialorder %v1005, 0.0
      %vm1070 = vcmp.ge.f32.partialorder %v1006, 0.0
      %vm1071 = vcmp.ge.f32.partialorder %v1007, 0.0
      %vm1072 = vcmp.ge.f32.partialorder %v1008, 0.0
      %vm1073 = vcmp.ge.f32.partialorder %v1009, 0.0
      %vm1074 = vcmp.ge.f32.partialorder %v1010, 0.0
      %vm1075 = vcmp.ge.f32.partialorder %v1011, 0.0
      %vm1076 = vcmp.ge.f32.partialorder %v1012, 0.0
      %vm1077 = vcmp.ge.f32.partialorder %v1013, 0.0
      %vm1078 = vcmp.ge.f32.partialorder %v1014, 0.0
      %vm1079 = vcmp.ge.f32.partialorder %v1015, 0.0
      %vm1080 = vcmp.ge.f32.partialorder %v1016, 0.0
      %vm1081 = vcmp.ge.f32.partialorder %v1017, 0.0
      %vm1082 = vcmp.ge.f32.partialorder %v1018, 0.0
      %vm1083 = vcmp.ge.f32.partialorder %v1019, 0.0
      %vm1084 = vcmp.ge.f32.partialorder %v1020, 0.0
      %vm1085 = vcmp.ge.f32.partialorder %v1021, 0.0
      %vm1086 = vcmp.ge.f32.partialorder %v1022, 0.0
      %vm1087 = vcmp.ge.f32.partialorder %v1023, 0.0
      %vm1088 = vcmp.ge.f32.partialorder %v1024, 0.0
      %vm1089 = vcmp.ge.f32.partialorder %v1025, 0.0
      %vm1090 = vcmp.ge.f32.partialorder %v1026, 0.0
      %vm1091 = vcmp.ge.f32.partialorder %v1027, 0.0
      %vm1092 = vcmp.ge.f32.partialorder %v1028, 0.0
      %vm1093 = vcmp.ge.f32.partialorder %v1029, 0.0
      %vm1094 = vcmp.ge.f32.partialorder %v1030, 0.0
      %vm1095 = vcmp.ge.f32.partialorder %v1031, 0.0
      %vm1096 = vcmp.ge.f32.partialorder %v1032, 0.0
      %vm1097 = vcmp.ge.f32.partialorder %v1033, 0.0
      %vm1098 = vcmp.ge.f32.partialorder %v1034, 0.0
      %vm1099 = vcmp.ge.f32.partialorder %v1035, 0.0
      %vm1100 = vcmp.ge.f32.partialorder %v1036, 0.0
      %vm1101 = vcmp.ge.f32.partialorder %v1037, 0.0
      %vm1102 = vcmp.ge.f32.partialorder %v1038, 0.0
      %vm1103 = vcmp.ge.f32.partialorder %v1039, 0.0
      %vm1104 = vcmp.ge.f32.partialorder %v1040, 0.0
      %vm1105 = vcmp.ge.f32.partialorder %v1041, 0.0
      %vm1106 = vcmp.ge.f32.partialorder %v1042, 0.0
      %vm1107 = vcmp.ge.f32.partialorder %v1043, 0.0
      %vm1108 = vcmp.ge.f32.partialorder %v1044, 0.0
      %vm1109 = vcmp.ge.f32.partialorder %v1045, 0.0
      %vm1110 = vcmp.ge.f32.partialorder %v1046, 0.0
      %vm1111 = vcmp.ge.f32.partialorder %v1047, 0.0
      %vm1112 = vcmp.ge.f32.partialorder %v1048, 0.0
      %vm1113 = vcmp.ge.f32.partialorder %v1049, 0.0
      %vm1114 = vcmp.ge.f32.partialorder %v1050, 0.0
      %vm1115 = vcmp.ge.f32.partialorder %v1051, 0.0
      %vm1116 = vcmp.ge.f32.partialorder %v1052, 0.0
      %vm1117 = vcmp.ge.f32.partialorder %v1053, 0.0
      %vm1118 = vcmp.ge.f32.partialorder %v1054, 0.0
      %vm1119 = vcmp.ge.f32.partialorder %v1055, 0.0
      %vm1120 = vcmp.ge.f32.partialorder %v1056, 0.0
      %vm1121 = vcmp.ge.f32.partialorder %v1057, 0.0
      %vm1122 = vcmp.ge.f32.partialorder %v1058, 0.0
      %vm1123 = vcmp.ge.f32.partialorder %v1059, 0.0
      %vm1124 = vcmp.ge.f32.partialorder %v1060, 0.0
      %v1125 = vmul.f32 %v997, 0.2
      %v1126 = vmul.f32 %v998, 0.2
      %v1127 = vmul.f32 %v999, 0.2
      %v1128 = vmul.f32 %v1000, 0.2
      %v1129 = vmul.f32 %v1001, 0.2
      %v1130 = vmul.f32 %v1002, 0.2
      %v1131 = vmul.f32 %v1003, 0.2
      %v1132 = vmul.f32 %v1004, 0.2
      %v1133 = vmul.f32 %v1005, 0.2
      %v1134 = vmul.f32 %v1006, 0.2
      %v1135 = vmul.f32 %v1007, 0.2
      %v1136 = vmul.f32 %v1008, 0.2
      %v1137 = vmul.f32 %v1009, 0.2
      %v1138 = vmul.f32 %v1010, 0.2
      %v1139 = vmul.f32 %v1011, 0.2
      %v1140 = vmul.f32 %v1012, 0.2
      %v1141 = vmul.f32 %v1013, 0.2
      %v1142 = vmul.f32 %v1014, 0.2
      %v1143 = vmul.f32 %v1015, 0.2
      %v1144 = vmul.f32 %v1016, 0.2
      %v1145 = vmul.f32 %v1017, 0.2
      %v1146 = vmul.f32 %v1018, 0.2
      %v1147 = vmul.f32 %v1019, 0.2
      %v1148 = vmul.f32 %v1020, 0.2
      %v1149 = vmul.f32 %v1021, 0.2
      %v1150 = vmul.f32 %v1022, 0.2
      %v1151 = vmul.f32 %v1023, 0.2
      %v1152 = vmul.f32 %v1024, 0.2
      %v1153 = vmul.f32 %v1025, 0.2
      %v1154 = vmul.f32 %v1026, 0.2
      %v1155 = vmul.f32 %v1027, 0.2
      %v1156 = vmul.f32 %v1028, 0.2
      %v1157 = vmul.f32 %v1029, 0.2
      %v1158 = vmul.f32 %v1030, 0.2
      %v1159 = vmul.f32 %v1031, 0.2
      %v1160 = vmul.f32 %v1032, 0.2
      %v1161 = vmul.f32 %v1033, 0.2
      %v1162 = vmul.f32 %v1034, 0.2
      %v1163 = vmul.f32 %v1035, 0.2
      %v1164 = vmul.f32 %v1036, 0.2
      %v1165 = vmul.f32 %v1037, 0.2
      %v1166 = vmul.f32 %v1038, 0.2
      %v1167 = vmul.f32 %v1039, 0.2
      %v1168 = vmul.f32 %v1040, 0.2
      %v1169 = vmul.f32 %v1041, 0.2
      %v1170 = vmul.f32 %v1042, 0.2
      %v1171 = vmul.f32 %v1043, 0.2
      %v1172 = vmul.f32 %v1044, 0.2
      %v1173 = vmul.f32 %v1045, 0.2
      %v1174 = vmul.f32 %v1046, 0.2
      %v1175 = vmul.f32 %v1047, 0.2
      %v1176 = vmul.f32 %v1048, 0.2
      %v1177 = vmul.f32 %v1049, 0.2
      %v1178 = vmul.f32 %v1050, 0.2
      %v1179 = vmul.f32 %v1051, 0.2
      %v1180 = vmul.f32 %v1052, 0.2
      %v1181 = vmul.f32 %v1053, 0.2
      %v1182 = vmul.f32 %v1054, 0.2
      %v1183 = vmul.f32 %v1055, 0.2
      %v1184 = vmul.f32 %v1056, 0.2
      %v1185 = vmul.f32 %v1057, 0.2
      %v1186 = vmul.f32 %v1058, 0.2
      %v1187 = vmul.f32 %v1059, 0.2
      %v1188 = vmul.f32 %v1060, 0.2
      %v1189 = vsel %vm1061, %v997, %v1125
      %v1190 = vsel %vm1062, %v998, %v1126
      %v1191 = vsel %vm1063, %v999, %v1127
      %v1192 = vsel %vm1064, %v1000, %v1128
      %v1193 = vsel %vm1065, %v1001, %v1129
      %v1194 = vsel %vm1066, %v1002, %v1130
      %v1195 = vsel %vm1067, %v1003, %v1131
      %v1196 = vsel %vm1068, %v1004, %v1132
      %v1197 = vsel %vm1069, %v1005, %v1133
      %v1198 = vsel %vm1070, %v1006, %v1134
      %v1199 = vsel %vm1071, %v1007, %v1135
      %v1200 = vsel %vm1072, %v1008, %v1136
      %v1201 = vsel %vm1073, %v1009, %v1137
      %v1202 = vsel %vm1074, %v1010, %v1138
      %v1203 = vsel %vm1075, %v1011, %v1139
      %v1204 = vsel %vm1076, %v1012, %v1140
      %v1205 = vsel %vm1077, %v1013, %v1141
      %v1206 = vsel %vm1078, %v1014, %v1142
      %v1207 = vsel %vm1079, %v1015, %v1143
      %v1208 = vsel %vm1080, %v1016, %v1144
      %v1209 = vsel %vm1081, %v1017, %v1145
      %v1210 = vsel %vm1082, %v1018, %v1146
      %v1211 = vsel %vm1083, %v1019, %v1147
      %v1212 = vsel %vm1084, %v1020, %v1148
      %v1213 = vsel %vm1085, %v1021, %v1149
      %v1214 = vsel %vm1086, %v1022, %v1150
      %v1215 = vsel %vm1087, %v1023, %v1151
      %v1216 = vsel %vm1088, %v1024, %v1152
      %v1217 = vsel %vm1089, %v1025, %v1153
      %v1218 = vsel %vm1090, %v1026, %v1154
      %v1219 = vsel %vm1091, %v1027, %v1155
      %v1220 = vsel %vm1092, %v1028, %v1156
      %v1221 = vsel %vm1093, %v1029, %v1157
      %v1222 = vsel %vm1094, %v1030, %v1158
      %v1223 = vsel %vm1095, %v1031, %v1159
      %v1224 = vsel %vm1096, %v1032, %v1160
      %v1225 = vsel %vm1097, %v1033, %v1161
      %v1226 = vsel %vm1098, %v1034, %v1162
      %v1227 = vsel %vm1099, %v1035, %v1163
      %v1228 = vsel %vm1100, %v1036, %v1164
      %v1229 = vsel %vm1101, %v1037, %v1165
      %v1230 = vsel %vm1102, %v1038, %v1166
      %v1231 = vsel %vm1103, %v1039, %v1167
      %v1232 = vsel %vm1104, %v1040, %v1168
      %v1233 = vsel %vm1105, %v1041, %v1169
      %v1234 = vsel %vm1106, %v1042, %v1170
      %v1235 = vsel %vm1107, %v1043, %v1171
      %v1236 = vsel %vm1108, %v1044, %v1172
      %v1237 = vsel %vm1109, %v1045, %v1173
      %v1238 = vsel %vm1110, %v1046, %v1174
      %v1239 = vsel %vm1111, %v1047, %v1175
      %v1240 = vsel %vm1112, %v1048, %v1176
      %v1241 = vsel %vm1113, %v1049, %v1177
      %v1242 = vsel %vm1114, %v1050, %v1178
      %v1243 = vsel %vm1115, %v1051, %v1179
      %v1244 = vsel %vm1116, %v1052, %v1180
      %v1245 = vsel %vm1117, %v1053, %v1181
      %v1246 = vsel %vm1118, %v1054, %v1182
      %v1247 = vsel %vm1119, %v1055, %v1183
      %v1248 = vsel %vm1120, %v1056, %v1184
      %v1249 = vsel %vm1121, %v1057, %v1185
      %v1250 = vsel %vm1122, %v1058, %v1186
      %v1251 = vsel %vm1123, %v1059, %v1187
      %v1252 = vsel %vm1124, %v1060, %v1188
      %v1253 = vpack.c.bf16 %v1190, %v1189
      %v1254 = vpack.c.bf16 %v1192, %v1191
      %v1255 = vpack.c.bf16 %v1194, %v1193
      %v1256 = vpack.c.bf16 %v1196, %v1195
      %v1257 = vpack.c.bf16 %v1198, %v1197
      %v1258 = vpack.c.bf16 %v1200, %v1199
      %v1259 = vpack.c.bf16 %v1202, %v1201
      %v1260 = vpack.c.bf16 %v1204, %v1203
      %v1261 = vpack.c.bf16 %v1206, %v1205
      %v1262 = vpack.c.bf16 %v1208, %v1207
      %v1263 = vpack.c.bf16 %v1210, %v1209
      %v1264 = vpack.c.bf16 %v1212, %v1211
      %v1265 = vpack.c.bf16 %v1214, %v1213
      %v1266 = vpack.c.bf16 %v1216, %v1215
      %v1267 = vpack.c.bf16 %v1218, %v1217
      %v1268 = vpack.c.bf16 %v1220, %v1219
      %v1269 = vpack.c.bf16 %v1222, %v1221
      %v1270 = vpack.c.bf16 %v1224, %v1223
      %v1271 = vpack.c.bf16 %v1226, %v1225
      %v1272 = vpack.c.bf16 %v1228, %v1227
      %v1273 = vpack.c.bf16 %v1230, %v1229
      %v1274 = vpack.c.bf16 %v1232, %v1231
      %v1275 = vpack.c.bf16 %v1234, %v1233
      %v1276 = vpack.c.bf16 %v1236, %v1235
      %v1277 = vpack.c.bf16 %v1238, %v1237
      %v1278 = vpack.c.bf16 %v1240, %v1239
      %v1279 = vpack.c.bf16 %v1242, %v1241
      %v1280 = vpack.c.bf16 %v1244, %v1243
      %v1281 = vpack.c.bf16 %v1246, %v1245
      %v1282 = vpack.c.bf16 %v1248, %v1247
      %v1283 = vpack.c.bf16 %v1250, %v1249
      %v1284 = vpack.c.bf16 %v1252, %v1251
      %v1317 = vunpack.c.l.b16 %v1253
      %v1318 = vunpack.c.h.b16 %v1253
      %v1319 = vunpack.c.l.b16 %v1254
      %v1320 = vunpack.c.h.b16 %v1254
      %v1321 = vunpack.c.l.b16 %v1255
      %v1322 = vunpack.c.h.b16 %v1255
      %v1323 = vunpack.c.l.b16 %v1256
      %v1324 = vunpack.c.h.b16 %v1256
      %v1325 = vunpack.c.l.b16 %v1257
      %v1326 = vunpack.c.h.b16 %v1257
      %v1327 = vunpack.c.l.b16 %v1258
      %v1328 = vunpack.c.h.b16 %v1258
      %v1329 = vunpack.c.l.b16 %v1259
      %v1330 = vunpack.c.h.b16 %v1259
      %v1331 = vunpack.c.l.b16 %v1260
      %v1332 = vunpack.c.h.b16 %v1260
      %v1333 = vunpack.c.l.b16 %v1261
      %v1334 = vunpack.c.h.b16 %v1261
      %v1335 = vunpack.c.l.b16 %v1262
      %v1336 = vunpack.c.h.b16 %v1262
      %v1337 = vunpack.c.l.b16 %v1263
      %v1338 = vunpack.c.h.b16 %v1263
      %v1339 = vunpack.c.l.b16 %v1264
      %v1340 = vunpack.c.h.b16 %v1264
      %v1341 = vunpack.c.l.b16 %v1265
      %v1342 = vunpack.c.h.b16 %v1265
      %v1343 = vunpack.c.l.b16 %v1266
      %v1344 = vunpack.c.h.b16 %v1266
      %v1345 = vunpack.c.l.b16 %v1267
      %v1346 = vunpack.c.h.b16 %v1267
      %v1347 = vunpack.c.l.b16 %v1268
      %v1348 = vunpack.c.h.b16 %v1268
      %v1349 = vunpack.c.l.b16 %v1269
      %v1350 = vunpack.c.h.b16 %v1269
      %v1351 = vunpack.c.l.b16 %v1270
      %v1352 = vunpack.c.h.b16 %v1270
      %v1353 = vunpack.c.l.b16 %v1271
      %v1354 = vunpack.c.h.b16 %v1271
      %v1355 = vunpack.c.l.b16 %v1272
      %v1356 = vunpack.c.h.b16 %v1272
      %v1357 = vunpack.c.l.b16 %v1273
      %v1358 = vunpack.c.h.b16 %v1273
      %v1359 = vunpack.c.l.b16 %v1274
      %v1360 = vunpack.c.h.b16 %v1274
      %v1361 = vunpack.c.l.b16 %v1275
      %v1362 = vunpack.c.h.b16 %v1275
      %v1363 = vunpack.c.l.b16 %v1276
      %v1364 = vunpack.c.h.b16 %v1276
      %v1365 = vunpack.c.l.b16 %v1277
      %v1366 = vunpack.c.h.b16 %v1277
      %v1367 = vunpack.c.l.b16 %v1278
      %v1368 = vunpack.c.h.b16 %v1278
      %v1369 = vunpack.c.l.b16 %v1279
      %v1370 = vunpack.c.h.b16 %v1279
      %v1371 = vunpack.c.l.b16 %v1280
      %v1372 = vunpack.c.h.b16 %v1280
      %v1373 = vunpack.c.l.b16 %v1281
      %v1374 = vunpack.c.h.b16 %v1281
      %v1375 = vunpack.c.l.b16 %v1282
      %v1376 = vunpack.c.h.b16 %v1282
      %v1377 = vunpack.c.l.b16 %v1283
      %v1378 = vunpack.c.h.b16 %v1283
      %v1379 = vunpack.c.l.b16 %v1284
      %v1380 = vunpack.c.h.b16 %v1284
      %v1381 = vpack.c.b16 %v1317, %v1317
      %v1382 = vpack.c.b16 %v1318, %v1318
      %v1383 = vpack.c.b16 %v1319, %v1319
      %v1384 = vpack.c.b16 %v1320, %v1320
      %v1385 = vpack.c.b16 %v1321, %v1321
      %v1386 = vpack.c.b16 %v1322, %v1322
      %v1387 = vpack.c.b16 %v1323, %v1323
      %v1388 = vpack.c.b16 %v1324, %v1324
      %v1389 = vpack.c.b16 %v1325, %v1325
      %v1390 = vpack.c.b16 %v1326, %v1326
      %v1391 = vpack.c.b16 %v1327, %v1327
      %v1392 = vpack.c.b16 %v1328, %v1328
      %v1393 = vpack.c.b16 %v1329, %v1329
      %v1394 = vpack.c.b16 %v1330, %v1330
      %v1395 = vpack.c.b16 %v1331, %v1331
      %v1396 = vpack.c.b16 %v1332, %v1332
      %v1397 = vpack.c.b16 %v1333, %v1333
      %v1398 = vpack.c.b16 %v1334, %v1334
      %v1399 = vpack.c.b16 %v1335, %v1335
      %v1400 = vpack.c.b16 %v1336, %v1336
      %v1401 = vpack.c.b16 %v1337, %v1337
      %v1402 = vpack.c.b16 %v1338, %v1338
      %v1403 = vpack.c.b16 %v1339, %v1339
      %v1404 = vpack.c.b16 %v1340, %v1340
      %v1405 = vpack.c.b16 %v1341, %v1341
      %v1406 = vpack.c.b16 %v1342, %v1342
      %v1407 = vpack.c.b16 %v1343, %v1343
      %v1408 = vpack.c.b16 %v1344, %v1344
      %v1409 = vpack.c.b16 %v1345, %v1345
      %v1410 = vpack.c.b16 %v1346, %v1346
      %v1411 = vpack.c.b16 %v1347, %v1347
      %v1412 = vpack.c.b16 %v1348, %v1348
      %v1413 = vpack.c.b16 %v1349, %v1349
      %v1414 = vpack.c.b16 %v1350, %v1350
      %v1415 = vpack.c.b16 %v1351, %v1351
      %v1416 = vpack.c.b16 %v1352, %v1352
      %v1417 = vpack.c.b16 %v1353, %v1353
      %v1418 = vpack.c.b16 %v1354, %v1354
      %v1419 = vpack.c.b16 %v1355, %v1355
      %v1420 = vpack.c.b16 %v1356, %v1356
      %v1421 = vpack.c.b16 %v1357, %v1357
      %v1422 = vpack.c.b16 %v1358, %v1358
      %v1423 = vpack.c.b16 %v1359, %v1359
      %v1424 = vpack.c.b16 %v1360, %v1360
      %v1425 = vpack.c.b16 %v1361, %v1361
      %v1426 = vpack.c.b16 %v1362, %v1362
      %v1427 = vpack.c.b16 %v1363, %v1363
      %v1428 = vpack.c.b16 %v1364, %v1364
      %v1429 = vpack.c.b16 %v1365, %v1365
      %v1430 = vpack.c.b16 %v1366, %v1366
      %v1431 = vpack.c.b16 %v1367, %v1367
      %v1432 = vpack.c.b16 %v1368, %v1368
      %v1433 = vpack.c.b16 %v1369, %v1369
      %v1434 = vpack.c.b16 %v1370, %v1370
      %v1435 = vpack.c.b16 %v1371, %v1371
      %v1436 = vpack.c.b16 %v1372, %v1372
      %v1437 = vpack.c.b16 %v1373, %v1373
      %v1438 = vpack.c.b16 %v1374, %v1374
      %v1439 = vpack.c.b16 %v1375, %v1375
      %v1440 = vpack.c.b16 %v1376, %v1376
      %v1441 = vpack.c.b16 %v1377, %v1377
      %v1442 = vpack.c.b16 %v1378, %v1378
      %v1443 = vpack.c.b16 %v1379, %v1379
      %v1444 = vpack.c.b16 %v1380, %v1380
      %vm1509 = vcmask 519168
      %1510 = vst.msk [vmem:[%s3] sm:$0xf] %vm1509, %v1381
      %1511 = vst.msk [vmem:[%s3 + $0x4] sm:$0xf] %vm1509, %v1382
      %1512 = vst.msk [vmem:[%s3 + $0x8] sm:$0xf] %vm1509, %v1383
      %1513 = vst.msk [vmem:[%s3 + $0xc] sm:$0xf] %vm1509, %v1384
      %1514 = vst.msk [vmem:[%s3 + $0x10] sm:$0xf] %vm1509, %v1385
      %1515 = vst.msk [vmem:[%s3 + $0x14] sm:$0xf] %vm1509, %v1386
      %1516 = vst.msk [vmem:[%s3 + $0x18] sm:$0xf] %vm1509, %v1387
      %1517 = vst.msk [vmem:[%s3 + $0x1c] sm:$0xf] %vm1509, %v1388
      %1518 = vst.msk [vmem:[%s3 + $0x20] sm:$0xf] %vm1509, %v1389
      %1519 = vst.msk [vmem:[%s3 + $0x24] sm:$0xf] %vm1509, %v1390
      %1520 = vst.msk [vmem:[%s3 + $0x28] sm:$0xf] %vm1509, %v1391
      %1521 = vst.msk [vmem:[%s3 + $0x2c] sm:$0xf] %vm1509, %v1392
      %1522 = vst.msk [vmem:[%s3 + $0x30] sm:$0xf] %vm1509, %v1393
      %1523 = vst.msk [vmem:[%s3 + $0x34] sm:$0xf] %vm1509, %v1394
      %1524 = vst.msk [vmem:[%s3 + $0x38] sm:$0xf] %vm1509, %v1395
      %1525 = vst.msk [vmem:[%s3 + $0x3c] sm:$0xf] %vm1509, %v1396
      %1526 = vst.msk [vmem:[%s3 + $0x40] sm:$0xf] %vm1509, %v1397
      %1527 = vst.msk [vmem:[%s3 + $0x44] sm:$0xf] %vm1509, %v1398
      %1528 = vst.msk [vmem:[%s3 + $0x48] sm:$0xf] %vm1509, %v1399
      %1529 = vst.msk [vmem:[%s3 + $0x4c] sm:$0xf] %vm1509, %v1400
      %1530 = vst.msk [vmem:[%s3 + $0x50] sm:$0xf] %vm1509, %v1401
      %1531 = vst.msk [vmem:[%s3 + $0x54] sm:$0xf] %vm1509, %v1402
      %1532 = vst.msk [vmem:[%s3 + $0x58] sm:$0xf] %vm1509, %v1403
      %1533 = vst.msk [vmem:[%s3 + $0x5c] sm:$0xf] %vm1509, %v1404
      %1534 = vst.msk [vmem:[%s3 + $0x60] sm:$0xf] %vm1509, %v1405
      %1535 = vst.msk [vmem:[%s3 + $0x64] sm:$0xf] %vm1509, %v1406
      %1536 = vst.msk [vmem:[%s3 + $0x68] sm:$0xf] %vm1509, %v1407
      %1537 = vst.msk [vmem:[%s3 + $0x6c] sm:$0xf] %vm1509, %v1408
      %1538 = vst.msk [vmem:[%s3 + $0x70] sm:$0xf] %vm1509, %v1409
      %1539 = vst.msk [vmem:[%s3 + $0x74] sm:$0xf] %vm1509, %v1410
      %1540 = vst.msk [vmem:[%s3 + $0x78] sm:$0xf] %vm1509, %v1411
      %1541 = vst.msk [vmem:[%s3 + $0x7c] sm:$0xf] %vm1509, %v1412
      %1542 = vst.msk [vmem:[%s3 + $0x80] sm:$0xf] %vm1509, %v1413
      %1543 = vst.msk [vmem:[%s3 + $0x84] sm:$0xf] %vm1509, %v1414
      %1544 = vst.msk [vmem:[%s3 + $0x88] sm:$0xf] %vm1509, %v1415
      %1545 = vst.msk [vmem:[%s3 + $0x8c] sm:$0xf] %vm1509, %v1416
      %1546 = vst.msk [vmem:[%s3 + $0x90] sm:$0xf] %vm1509, %v1417
      %1547 = vst.msk [vmem:[%s3 + $0x94] sm:$0xf] %vm1509, %v1418
      %1548 = vst.msk [vmem:[%s3 + $0x98] sm:$0xf] %vm1509, %v1419
      %1549 = vst.msk [vmem:[%s3 + $0x9c] sm:$0xf] %vm1509, %v1420
      %1550 = vst.msk [vmem:[%s3 + $0xa0] sm:$0xf] %vm1509, %v1421
      %1551 = vst.msk [vmem:[%s3 + $0xa4] sm:$0xf] %vm1509, %v1422
      %1552 = vst.msk [vmem:[%s3 + $0xa8] sm:$0xf] %vm1509, %v1423
      %1553 = vst.msk [vmem:[%s3 + $0xac] sm:$0xf] %vm1509, %v1424
      %1554 = vst.msk [vmem:[%s3 + $0xb0] sm:$0xf] %vm1509, %v1425
      %1555 = vst.msk [vmem:[%s3 + $0xb4] sm:$0xf] %vm1509, %v1426
      %1556 = vst.msk [vmem:[%s3 + $0xb8] sm:$0xf] %vm1509, %v1427
      %1557 = vst.msk [vmem:[%s3 + $0xbc] sm:$0xf] %vm1509, %v1428
      %1558 = vst.msk [vmem:[%s3 + $0xc0] sm:$0xf] %vm1509, %v1429
      %1559 = vst.msk [vmem:[%s3 + $0xc4] sm:$0xf] %vm1509, %v1430
      %1560 = vst.msk [vmem:[%s3 + $0xc8] sm:$0xf] %vm1509, %v1431
      %1561 = vst.msk [vmem:[%s3 + $0xcc] sm:$0xf] %vm1509, %v1432
      %1562 = vst.msk [vmem:[%s3 + $0xd0] sm:$0xf] %vm1509, %v1433
      %1563 = vst.msk [vmem:[%s3 + $0xd4] sm:$0xf] %vm1509, %v1434
      %1564 = vst.msk [vmem:[%s3 + $0xd8] sm:$0xf] %vm1509, %v1435
      %1565 = vst.msk [vmem:[%s3 + $0xdc] sm:$0xf] %vm1509, %v1436
      %1566 = vst.msk [vmem:[%s3 + $0xe0] sm:$0xf] %vm1509, %v1437
      %1567 = vst.msk [vmem:[%s3 + $0xe4] sm:$0xf] %vm1509, %v1438
      %1568 = vst.msk [vmem:[%s3 + $0xe8] sm:$0xf] %vm1509, %v1439
      %1569 = vst.msk [vmem:[%s3 + $0xec] sm:$0xf] %vm1509, %v1440
      %1570 = vst.msk [vmem:[%s3 + $0xf0] sm:$0xf] %vm1509, %v1441
      %1571 = vst.msk [vmem:[%s3 + $0xf4] sm:$0xf] %vm1509, %v1442
      %1572 = vst.msk [vmem:[%s3 + $0xf8] sm:$0xf] %vm1509, %v1443
      %1573 = vst.msk [vmem:[%s3 + $0xfc] sm:$0xf] %vm1509, %v1444
    $region25: #{discriminator_forward.5} parent=1 // pred_fallthru
      _
    // Predicated region
    $region26: #{discriminator_forward.5} parent=1 // pred_check
      _
    $region27: #{discriminator_forward.5} parent=1 // pred_check_branch
      %1575 = sbr.rel (0) target = $region29
    $region28: #{discriminator_forward.5} parent=1 // pred_region
      _
    $region29: #{discriminator_forward.5} parent=1 // pred_fallthru
      _
    // Predicated region
    $region30: #{discriminator_forward.5} parent=1 // pred_check
      _
    $region31: #{discriminator_forward.5} parent=1 // pred_check_branch
      %1577 = sbr.rel (0) target = $region33
    $region32: #{discriminator_forward.5} parent=1 // pred_region
      _
    $region33: #{discriminator_forward.5} parent=1 // pred_fallthru
      _
    %1578 = vsyncpa [#allocation4], 1

// kernel: discriminator_forward.6
$region0: #{discriminator_forward.6}
  #allocation0 [shape = 'u32[]', space=smem, size = 0x4, offset = 0x4, fixed_abs, tag = 'smem constant byte address 0x4 - core index']
  #allocation1 [shape = 'u32[144,128]{1,0:T(1,128)}', space=vmem, size = 0x12000, scoped, tag = 'internal scratch']
  #allocation2 [shape = 'f32[64,128]{1,0:T(8,128)}', space=vmem, size = 0x8000, scoped, tag = 'scratch operand']
  %s0 = inlined_call_operand.vmem [shape: bf16[2,64,1024], index: 0, kind: input, shape index: {}]
  %s1 = inlined_call_operand.vmem [shape: bf16[1024,128], index: 1, kind: input, shape index: {}]
  %s2 = inlined_call_operand.vmem [shape: bf16[2,64,128], index: 2, kind: output, shape index: {}]
  %s3 = sld [smem:[#allocation0]]
  $region72: #{discriminator_forward.6} parent=0
    _
  %s5 = ssub.s32 1, %s3
  %s6 = scalar_select 0, %s5, %s3
  $region1: #{discriminator_forward.6} parent=0
    #allocation3 [shape = 'u8[131072]{0}', space=vmem, size = 0x20000, scoped, tag = 'input window, operand 0']
    loop: start=0, step=1, limit=6
    $region2: #{discriminator_forward.6} parent=1 // loop_pre_header
      _
    $region3: #{discriminator_forward.6} parent=1 // loop_header
      %s8 = sphi 0, %s12
      %p9 = scmp.ge.s32.totalorder %s8, 6
      %s15 = sphi 0, %s34
      %s16 = sphi 0, %s30
      %s17 = sphi 0, %s26
      %s18 = sphi 0, %s15
      %s19 = sphi 0, %s16
      %s20 = sphi 0, %s17
      %s21 = sphi 0, %s18
      %s22 = sphi 0, %s19
      %s23 = sphi 0, %s20
      %s39 = sphi 0, %s41
      %s42 = sphi 0, %s39
      %s43 = sphi 0, %s42
      %s59 = sphi 0, %s43
      %s67 = sphi 0, %s69
      %s70 = sphi 0, %s67
      %s71 = sphi 0, %s70
      %s87 = sphi 0, %s71
      %s95 = sphi 0, %s97
      %s98 = sphi 0, %s95
      %s99 = sphi 0, %s98
      %s115 = sphi 0, %s99
    $region4: #{discriminator_forward.6} parent=1 // loop_header_branch
      %11 = sbr.rel (%p9) target = $region8
    $region5: #{discriminator_forward.6} parent=1 // loop_body
      %s13 = ssub.s32 %s8, 1
      %s14 = ssub.s32 %s8, 2
      %s24 = sadd.s32 1, %s17
      %p25 = scmp.ge.s32.totalorder %s24, 2
      %s26 = scalar_select %p25, 0, %s24
      %s27 = sadd.s32 1, %s16
      %s28 = scalar_select %p25, %s27, %s16
      %p29 = scmp.ge.s32.totalorder %s28, 1
      %s30 = scalar_select %p29, 0, %s28
      %s31 = sadd.s32 1, %s15
      %s32 = scalar_select %p29, %s31, %s15
      %p33 = scmp.ge.s32.totalorder %s32, 2
      %s34 = scalar_select %p33, 0, %s32
      %s35 = ssub.s32 %s15, %s34
      %s36 = ssub.s32 %s17, %s26
      %s37 = sor.u32 %s35, %s36
      %p38 = scmp.eq.s32.totalorder %s37, 0
      %s40 = sadd.s32 %s39, 1
      %s41 = scalar_select %p38, %s39, %s40
      %p44 = pneg %p38
      %p45 = scmp.eq.s32.totalorder %s8, 3
      %p46 = por %p44, %p45
      %p47 = scmp.ne.s32.totalorder %s39, %s42
      %p48 = scmp.eq.s32.totalorder %s8, 0
      %p49 = por %p47, %p48
      %p50 = scmp.ne.s32.totalorder %s39, %s42
      %p51 = scmp.eq.s32.totalorder %s13, 3
      %p52 = por %p50, %p51
      %p53 = scmp.ne.s32.totalorder %s42, %s43
      %p54 = scmp.eq.s32.totalorder %s13, 0
      %p55 = por %p53, %p54
      %p56 = scmp.ne.s32.totalorder %s42, %s43
      %p57 = scmp.eq.s32.totalorder %s14, 3
      %p58 = por %p56, %p57
      %p60 = scmp.ne.s32.totalorder %s43, %s59
      %p61 = scmp.eq.s32.totalorder %s14, 0
      %p62 = por %p60, %p61
      %s63 = ssub.s32 %s17, %s26
      %s64 = ssub.s32 %s16, %s30
      %s65 = sor.u32 %s63, %s64
      %p66 = scmp.eq.s32.totalorder %s65, 0
      %s68 = sadd.s32 %s67, 1
      %s69 = scalar_select %p66, %s67, %s68
      %p72 = pneg %p66
      %p73 = scmp.eq.s32.totalorder %s8, 3
      %p74 = por %p72, %p73
      %p75 = scmp.ne.s32.totalorder %s67, %s70
      %p76 = scmp.eq.s32.totalorder %s8, 0
      %p77 = por %p75, %p76
      %p78 = scmp.ne.s32.totalorder %s67, %s70
      %p79 = scmp.eq.s32.totalorder %s13, 3
      %p80 = por %p78, %p79
      %p81 = scmp.ne.s32.totalorder %s70, %s71
      %p82 = scmp.eq.s32.totalorder %s13, 0
      %p83 = por %p81, %p82
      %p84 = scmp.ne.s32.totalorder %s70, %s71
      %p85 = scmp.eq.s32.totalorder %s14, 3
      %p86 = por %p84, %p85
      %p88 = scmp.ne.s32.totalorder %s71, %s87
      %p89 = scmp.eq.s32.totalorder %s14, 0
      %p90 = por %p88, %p89
      %s91 = ssub.s32 %s15, %s34
      %s92 = ssub.s32 %s16, %s30
      %s93 = sor.u32 %s91, %s92
      %p94 = scmp.eq.s32.totalorder %s93, 0
      %s96 = sadd.s32 %s95, 1
      %s97 = scalar_select %p94, %s95, %s96
      %p100 = pneg %p94
      %p101 = scmp.eq.s32.totalorder %s8, 3
      %p102 = por %p100, %p101
      %p103 = scmp.ne.s32.totalorder %s95, %s98
      %p104 = scmp.eq.s32.totalorder %s8, 0
      %p105 = por %p103, %p104
      %p106 = scmp.ne.s32.totalorder %s95, %s98
      %p107 = scmp.eq.s32.totalorder %s13, 3
      %p108 = por %p106, %p107
      %p109 = scmp.ne.s32.totalorder %s98, %s99
      %p110 = scmp.eq.s32.totalorder %s13, 0
      %p111 = por %p109, %p110
      %p112 = scmp.ne.s32.totalorder %s98, %s99
      %p113 = scmp.eq.s32.totalorder %s14, 3
      %p114 = por %p112, %p113
      %p116 = scmp.ne.s32.totalorder %s99, %s115
      %p117 = scmp.eq.s32.totalorder %s14, 0
      %p118 = por %p116, %p117
      %p119 = scmp.le.s32.totalorder 1, %s8
      %p120 = scmp.lt.s32.totalorder %s8, 5
      %p121 = pnand %p119, %p120
      %p122 = pneg %p121
      // Predicated region
      $region9: #{discriminator_forward.6} parent=5 // pred_check
        _
      $region10: #{discriminator_forward.6} parent=5 // pred_check_branch
        %124 = sbr.rel (%p121) target = $region12
      $region11: #{discriminator_forward.6} parent=5 // pred_region
        %s125 = ssub.s32 %s8, 1
      $region12: #{discriminator_forward.6} parent=5 // pred_fallthru
        _
      %p126 = scmp.lt.s32.totalorder %s8, 4
      // Predicated region
      $region13: #{discriminator_forward.6} parent=5 // pred_check
        %p127 = pneg %p126
      $region14: #{discriminator_forward.6} parent=5 // pred_check_branch
        %129 = sbr.rel (%p127) target = $region16
      $region15: #{discriminator_forward.6} parent=5 // pred_region
        // Predicated region
        $region17: #{discriminator_forward.6} parent=15 // pred_check
          %p130 = pneg %p49
        $region18: #{discriminator_forward.6} parent=15 // pred_check_branch
          %132 = sbr.rel (%p130) target = $region20
        $region19: #{discriminator_forward.6} parent=15 // pred_region
          %s133 = sand.u32 %s39, 1
          %s134 = sand.u32 %s39, 1
          %s135 = smul.addr %s134, 128
          %s136 = scalar_lea.vmem [#allocation3], %s135
          %s137 = smul.u32 4, %s17
          %s138 = smul.addr %s15, 64
          %s139 = sadd.s32 %s137, %s138
          %s140 = smul.addr %s139, 4
          %s141 = scalar_lea.vmem %s0, %s140
          // Predicated region
          $region21: #{discriminator_forward.6} parent=19 // pred_check
            _
          $region22: #{discriminator_forward.6} parent=19 // pred_check_branch
            %143 = sbr.rel (0) target = $region24
          $region23: #{discriminator_forward.6} parent=19 // pred_region
            // Predicated region
            $region25: #{discriminator_forward.6} parent=23 // pred_check
              _
            $region26: #{discriminator_forward.6} parent=23 // pred_check_branch
              %145 = sbr.rel (0) target = $region28
            $region27: #{discriminator_forward.6} parent=23 // pred_region
              loop: start=0, step=1, limit=1
              $region29: #{discriminator_forward.6} parent=27 // loop_pre_header
                _
              $region30: #{discriminator_forward.6} parent=27 // loop_header
                %s147 = sphi 0, %s151
                %p148 = scmp.ge.s32.totalorder %s147, 1
                %s152 = sphi %s141, %s141
                %s153 = sphi %s136, %s136
              $region31: #{discriminator_forward.6} parent=27 // loop_header_branch
                %150 = sbr.rel (%p148) target = $region35
              $region32: #{discriminator_forward.6} parent=27 // loop_body
                %v154 = vld [vmem:[%s152] sm:$0xff]
                %155 = vst [vmem:[%s153] sm:$0xff] %v154
                %v156 = vld [vmem:[%s152 + $0x8] sm:$0xff]
                %157 = vst [vmem:[%s153 + $0x8] sm:$0xff] %v156
                %v158 = vld [vmem:[%s152 + $0x20] sm:$0xff]
                %159 = vst [vmem:[%s153 + $0x10] sm:$0xff] %v158
                %v160 = vld [vmem:[%s152 + $0x28] sm:$0xff]
                %161 = vst [vmem:[%s153 + $0x18] sm:$0xff] %v160
                %v162 = vld [vmem:[%s152 + $0x40] sm:$0xff]
                %163 = vst [vmem:[%s153 + $0x20] sm:$0xff] %v162
                %v164 = vld [vmem:[%s152 + $0x48] sm:$0xff]
                %165 = vst [vmem:[%s153 + $0x28] sm:$0xff] %v164
                %v166 = vld [vmem:[%s152 + $0x60] sm:$0xff]
                %167 = vst [vmem:[%s153 + $0x30] sm:$0xff] %v166
                %v168 = vld [vmem:[%s152 + $0x68] sm:$0xff]
                %169 = vst [vmem:[%s153 + $0x38] sm:$0xff] %v168
                %v170 = vld [vmem:[%s152 + $0x80] sm:$0xff]
                %171 = vst [vmem:[%s153 + $0x40] sm:$0xff] %v170
                %v172 = vld [vmem:[%s152 + $0x88] sm:$0xff]
                %173 = vst [vmem:[%s153 + $0x48] sm:$0xff] %v172
                %v174 = vld [vmem:[%s152 + $0xa0] sm:$0xff]
                %175 = vst [vmem:[%s153 + $0x50] sm:$0xff] %v174
                %v176 = vld [vmem:[%s152 + $0xa8] sm:$0xff]
                %177 = vst [vmem:[%s153 + $0x58] sm:$0xff] %v176
                %v178 = vld [vmem:[%s152 + $0xc0] sm:$0xff]
                %179 = vst [vmem:[%s153 + $0x60] sm:$0xff] %v178
                %v180 = vld [vmem:[%s152 + $0xc8] sm:$0xff]
                %181 = vst [vmem:[%s153 + $0x68] sm:$0xff] %v180
                %v182 = vld [vmem:[%s152 + $0xe0] sm:$0xff]
                %183 = vst [vmem:[%s153 + $0x70] sm:$0xff] %v182
                %v184 = vld [vmem:[%s152 + $0xe8] sm:$0xff]
                %185 = vst [vmem:[%s153 + $0x78] sm:$0xff] %v184
              $region33: #{discriminator_forward.6} parent=27 // loop_footer
                %s151 = sadd.s32 1, %s147
              $region34: #{discriminator_forward.6} parent=27 // loop_footer_branch
                %146 = sbr.rel target = $region30
              $region35: #{discriminator_forward.6} parent=27 // loop_exit
                _
            $region28: #{discriminator_forward.6} parent=23 // pred_fallthru
              _
            // Predicated region
            $region36: #{discriminator_forward.6} parent=23 // pred_check
              _
            $region37: #{discriminator_forward.6} parent=23 // pred_check_branch
              %187 = sbr.rel target = $region39
            $region38: #{discriminator_forward.6} parent=23 // pred_region
              _
            $region39: #{discriminator_forward.6} parent=23 // pred_fallthru
              _
          $region24: #{discriminator_forward.6} parent=19 // pred_fallthru
            _
          %188 = vnop
        $region20: #{discriminator_forward.6} parent=15 // pred_fallthru
          _
        // Predicated region
        $region40: #{discriminator_forward.6} parent=15 // pred_check
          %p189 = pneg %p77
        $region41: #{discriminator_forward.6} parent=15 // pred_check_branch
          %191 = sbr.rel (%p189) target = $region43
        $region42: #{discriminator_forward.6} parent=15 // pred_region
          %s192 = smul.u32 64, %s17
          %p193 = scmp.lt.s32.totalorder %s192, 127
          %s194 = scalar_select %p193, %s192, 127
          %p195 = scmp.lt.s32.totalorder %s16, 0
          %s196 = scalar_select %p195, %s16, 0
          %s197 = sadd.s32 %s196, %s194
          %s198 = smul.addr %s197, 4
          %s199 = scalar_lea.vmem %s1, %s198
          %s200 = smul.u32 64, %s17
        $region43: #{discriminator_forward.6} parent=15 // pred_fallthru
          _
      $region16: #{discriminator_forward.6} parent=5 // pred_fallthru
        _
      %p201 = scmp.le.s32.totalorder 1, %s8
      %p202 = scmp.lt.s32.totalorder %s8, 5
      %p203 = pnand %p201, %p202
      %p204 = pneg %p203
      // Predicated region
      $region44: #{discriminator_forward.6} parent=5 // pred_check
        _
      $region45: #{discriminator_forward.6} parent=5 // pred_check_branch
        %206 = sbr.rel (%p203) target = $region47
      $region46: #{discriminator_forward.6} parent=5 // pred_region
        %s207 = ssub.s32 %s8, 1
        %s208 = sand.u32 %s42, 1
        %s209 = sand.u32 %s42, 1
        %s210 = smul.addr %s209, 128
        %s211 = scalar_lea.vmem [#allocation3], %s210
        // Predicated region
        $region48: #{discriminator_forward.6} parent=46 // pred_check
          %p212 = pneg %p55
        $region49: #{discriminator_forward.6} parent=46 // pred_check_branch
          %214 = sbr.rel (%p212) target = $region51
        $region50: #{discriminator_forward.6} parent=46 // pred_region
          _
        $region51: #{discriminator_forward.6} parent=46 // pred_fallthru
          _
        %s215 = sand.u32 %s42, 1
        %s216 = sand.u32 %s42, 1
        %s217 = smul.addr %s216, 128
        %s218 = scalar_lea.vmem [#allocation3], %s217
        %p219 = pneg %p55
        %p220 = pneg %p52
        %s221 = smul.u32 64, %s20
        %p222 = scmp.lt.s32.totalorder %s221, 127
        %s223 = scalar_select %p222, %s221, 127
        %p224 = scmp.lt.s32.totalorder %s19, 0
        %s225 = scalar_select %p224, %s19, 0
        %s226 = sadd.s32 %s225, %s223
        %s227 = smul.addr %s226, 4
        %s228 = scalar_lea.vmem %s1, %s227
        %p229 = pneg %p83
        %p230 = pneg %p80
        %p231 = pneg %p111
        %p232 = pneg %p108
        %p233 = scmp.lt.s32.totalorder %s18, 1
        %s234 = scalar_select %p233, %s18, 1
        %p235 = scmp.lt.s32.totalorder %s19, 0
        %s236 = scalar_select %p235, %s19, 0
        %s237 = smul.addr %s234, 8
        %s238 = sadd.s32 %s236, %s237
        %s239 = smul.addr %s238, 4
        %s240 = scalar_lea.vmem %s2, %s239
        %s241 = smul.u32 4, %s20
        %s242 = smul.u32 64, %s20
        %p243 = scmp.lt.s32.totalorder %s242, 127
        %s244 = scalar_select %p243, %s242, 127
        %p245 = scmp.lt.s32.totalorder %s19, 0
        %s246 = scalar_select %p245, %s19, 0
        %s247 = sadd.s32 %s246, %s244
        %s248 = smul.addr %s247, 4
        %s249 = scalar_lea.vmem %s1, %s248
        %s250 = smul.u32 64, %s20
        %p251 = scmp.lt.s32.totalorder %s18, 1
        %s252 = scalar_select %p251, %s18, 1
        %p253 = scmp.lt.s32.totalorder %s19, 0
        %s254 = scalar_select %p253, %s19, 0
        %s255 = smul.addr %s252, 8
        %s256 = sadd.s32 %s254, %s255
        %s257 = smul.addr %s256, 4
        %s258 = scalar_lea.vmem %s2, %s257
        %p260 = scmp.eq.s32.totalorder %s20, 0
        // Predicated region
        $region52: #{discriminator_forward.6} parent=46 // pred_check
          %p261 = pneg %p260
        $region53: #{discriminator_forward.6} parent=46 // pred_check_branch
          %263 = sbr.rel (%p261) target = $region55
        $region54: #{discriminator_forward.6} parent=46 // pred_region
          %264 = vst [vmem:[#allocation2] sm:$0xff] 0.0
          %265 = vst [vmem:[#allocation2 + $0x8] sm:$0xff] 0.0
          %266 = vst [vmem:[#allocation2 + $0x10] sm:$0xff] 0.0
          %267 = vst [vmem:[#allocation2 + $0x18] sm:$0xff] 0.0
          %268 = vst [vmem:[#allocation2 + $0x20] sm:$0xff] 0.0
          %269 = vst [vmem:[#allocation2 + $0x28] sm:$0xff] 0.0
          %270 = vst [vmem:[#allocation2 + $0x30] sm:$0xff] 0.0
          %271 = vst [vmem:[#allocation2 + $0x38] sm:$0xff] 0.0
        $region55: #{discriminator_forward.6} parent=46 // pred_fallthru
          _
        %v272 = vld [vmem:[#allocation2] sm:$0xff]
        %v273 = vld [vmem:[#allocation2 + $0x8] sm:$0xff]
        %v274 = vld [vmem:[#allocation2 + $0x10] sm:$0xff]
        %v275 = vld [vmem:[#allocation2 + $0x18] sm:$0xff]
        %v276 = vld [vmem:[#allocation2 + $0x20] sm:$0xff]
        %v277 = vld [vmem:[#allocation2 + $0x28] sm:$0xff]
        %v278 = vld [vmem:[#allocation2 + $0x30] sm:$0xff]
        %v279 = vld [vmem:[#allocation2 + $0x38] sm:$0xff]
        %v280 = vld [vmem:[%s211] sm:$0xff]
        %v281 = vld [vmem:[%s211 + $0x8] sm:$0xff]
        %v282 = vld [vmem:[%s211 + $0x10] sm:$0xff]
        %v283 = vld [vmem:[%s211 + $0x18] sm:$0xff]
        %v284 = vld [vmem:[%s211 + $0x20] sm:$0xff]
        %v285 = vld [vmem:[%s211 + $0x28] sm:$0xff]
        %v286 = vld [vmem:[%s211 + $0x30] sm:$0xff]
        %v287 = vld [vmem:[%s211 + $0x38] sm:$0xff]
        %v288 = vld [vmem:[%s211 + $0x40] sm:$0xff]
        %v289 = vld [vmem:[%s211 + $0x48] sm:$0xff]
        %v290 = vld [vmem:[%s211 + $0x50] sm:$0xff]
        %v291 = vld [vmem:[%s211 + $0x58] sm:$0xff]
        %v292 = vld [vmem:[%s211 + $0x60] sm:$0xff]
        %v293 = vld [vmem:[%s211 + $0x68] sm:$0xff]
        %v294 = vld [vmem:[%s211 + $0x70] sm:$0xff]
        %v295 = vld [vmem:[%s211 + $0x78] sm:$0xff]
        %v296 = vld [vmem:[%s249] sm:$0xf]
        %v297 = vld [vmem:[%s249 + $0x4] sm:$0xf]
        %v298 = vld [vmem:[%s249 + $0x8] sm:$0xf]
        %v299 = vld [vmem:[%s249 + $0xc] sm:$0xf]
        %v300 = vld [vmem:[%s249 + $0x10] sm:$0xf]
        %v301 = vld [vmem:[%s249 + $0x14] sm:$0xf]
        %v302 = vld [vmem:[%s249 + $0x18] sm:$0xf]
        %v303 = vld [vmem:[%s249 + $0x1c] sm:$0xf]
        %v304 = vld [vmem:[%s249 + $0x20] sm:$0xf]
        %v305 = vld [vmem:[%s249 + $0x24] sm:$0xf]
        %v306 = vld [vmem:[%s249 + $0x28] sm:$0xf]
        %v307 = vld [vmem:[%s249 + $0x2c] sm:$0xf]
        %v308 = vld [vmem:[%s249 + $0x30] sm:$0xf]
        %v309 = vld [vmem:[%s249 + $0x34] sm:$0xf]
        %v310 = vld [vmem:[%s249 + $0x38] sm:$0xf]
        %v311 = vld [vmem:[%s249 + $0x3c] sm:$0xf]
        %v312 = vld [vmem:[%s249 + $0x40] sm:$0xf]
        %v313 = vld [vmem:[%s249 + $0x44] sm:$0xf]
        %v314 = vld [vmem:[%s249 + $0x48] sm:$0xf]
        %v315 = vld [vmem:[%s249 + $0x4c] sm:$0xf]
        %v316 = vld [vmem:[%s249 + $0x50] sm:$0xf]
        %v317 = vld [vmem:[%s249 + $0x54] sm:$0xf]
        %v318 = vld [vmem:[%s249 + $0x58] sm:$0xf]
        %v319 = vld [vmem:[%s249 + $0x5c] sm:$0xf]
        %v320 = vld [vmem:[%s249 + $0x60] sm:$0xf]
        %v321 = vld [vmem:[%s249 + $0x64] sm:$0xf]
        %v322 = vld [vmem:[%s249 + $0x68] sm:$0xf]
        %v323 = vld [vmem:[%s249 + $0x6c] sm:$0xf]
        %v324 = vld [vmem:[%s249 + $0x70] sm:$0xf]
        %v325 = vld [vmem:[%s249 + $0x74] sm:$0xf]
        %v326 = vld [vmem:[%s249 + $0x78] sm:$0xf]
        %v327 = vld [vmem:[%s249 + $0x7c] sm:$0xf]
        %v328 = vld [vmem:[%s249 + $0x80] sm:$0xf]
        %v329 = vld [vmem:[%s249 + $0x84] sm:$0xf]
        %v330 = vld [vmem:[%s249 + $0x88] sm:$0xf]
        %v331 = vld [vmem:[%s249 + $0x8c] sm:$0xf]
        %v332 = vld [vmem:[%s249 + $0x90] sm:$0xf]
        %v333 = vld [vmem:[%s249 + $0x94] sm:$0xf]
        %v334 = vld [vmem:[%s249 + $0x98] sm:$0xf]
        %v335 = vld [vmem:[%s249 + $0x9c] sm:$0xf]
        %v336 = vld [vmem:[%s249 + $0xa0] sm:$0xf]
        %v337 = vld [vmem:[%s249 + $0xa4] sm:$0xf]
        %v338 = vld [vmem:[%s249 + $0xa8] sm:$0xf]
        %v339 = vld [vmem:[%s249 + $0xac] sm:$0xf]
        %v340 = vld [vmem:[%s249 + $0xb0] sm:$0xf]
        %v341 = vld [vmem:[%s249 + $0xb4] sm:$0xf]
        %v342 = vld [vmem:[%s249 + $0xb8] sm:$0xf]
        %v343 = vld [vmem:[%s249 + $0xbc] sm:$0xf]
        %v344 = vld [vmem:[%s249 + $0xc0] sm:$0xf]
        %v345 = vld [vmem:[%s249 + $0xc4] sm:$0xf]
        %v346 = vld [vmem:[%s249 + $0xc8] sm:$0xf]
        %v347 = vld [vmem:[%s249 + $0xcc] sm:$0xf]
        %v348 = vld [vmem:[%s249 + $0xd0] sm:$0xf]
        %v349 = vld [vmem:[%s249 + $0xd4] sm:$0xf]
        %v350 = vld [vmem:[%s249 + $0xd8] sm:$0xf]
        %v351 = vld [vmem:[%s249 + $0xdc] sm:$0xf]
        %v352 = vld [vmem:[%s249 + $0xe0] sm:$0xf]
        %v353 = vld [vmem:[%s249 + $0xe4] sm:$0xf]
        %v354 = vld [vmem:[%s249 + $0xe8] sm:$0xf]
        %v355 = vld [vmem:[%s249 + $0xec] sm:$0xf]
        %v356 = vld [vmem:[%s249 + $0xf0] sm:$0xf]
        %v357 = vld [vmem:[%s249 + $0xf4] sm:$0xf]
        %v358 = vld [vmem:[%s249 + $0xf8] sm:$0xf]
        %v359 = vld [vmem:[%s249 + $0xfc] sm:$0xf]
        %v376 = vunpack.c.l.b16 %v280
        %v377 = vunpack.c.h.b16 %v280
        %v378 = vunpack.c.l.b16 %v281
        %v379 = vunpack.c.h.b16 %v281
        %v380 = vunpack.c.l.b16 %v282
        %v381 = vunpack.c.h.b16 %v282
        %v382 = vunpack.c.l.b16 %v283
        %v383 = vunpack.c.h.b16 %v283
        %v384 = vunpack.c.l.b16 %v284
        %v385 = vunpack.c.h.b16 %v284
        %v386 = vunpack.c.l.b16 %v285
        %v387 = vunpack.c.h.b16 %v285
        %v388 = vunpack.c.l.b16 %v286
        %v389 = vunpack.c.h.b16 %v286
        %v390 = vunpack.c.l.b16 %v287
        %v391 = vunpack.c.h.b16 %v287
        %v392 = vunpack.c.l.b16 %v288
        %v393 = vunpack.c.h.b16 %v288
        %v394 = vunpack.c.l.b16 %v289
        %v395 = vunpack.c.h.b16 %v289
        %v396 = vunpack.c.l.b16 %v290
        %v397 = vunpack.c.h.b16 %v290
        %v398 = vunpack.c.l.b16 %v291
        %v399 = vunpack.c.h.b16 %v291
        %v400 = vunpack.c.l.b16 %v292
        %v401 = vunpack.c.h.b16 %v292
        %v402 = vunpack.c.l.b16 %v293
        %v403 = vunpack.c.h.b16 %v293
        %v404 = vunpack.c.l.b16 %v294
        %v405 = vunpack.c.h.b16 %v294
        %v406 = vunpack.c.l.b16 %v295
        %v407 = vunpack.c.h.b16 %v295
        %v408 = vpack.c.b16 %v380, %v376
        %v409 = vpack.c.b16 %v381, %v377
        %v410 = vpack.c.b16 %v382, %v378
        %v411 = vpack.c.b16 %v383, %v379
        %v412 = vpack.c.b16 %v388, %v384
        %v413 = vpack.c.b16 %v389, %v385
        %v414 = vpack.c.b16 %v390, %v386
        %v415 = vpack.c.b16 %v391, %v387
        %v416 = vpack.c.b16 %v396, %v392
        %v417 = vpack.c.b16 %v397, %v393
        %v418 = vpack.c.b16 %v398, %v394
        %v419 = vpack.c.b16 %v399, %v395
        %v420 = vpack.c.b16 %v404, %v400
        %v421 = vpack.c.b16 %v405, %v401
        %v422 = vpack.c.b16 %v406, %v402
        %v423 = vpack.c.b16 %v407, %v403
        %v504 = vunpack.c.l.b16 %v296
        %v505 = vunpack.c.l.b16 %v297
        %v506 = vunpack.c.l.b16 %v298
        %v507 = vunpack.c.l.b16 %v299
        %v508 = vunpack.c.l.b16 %v300
        %v509 = vunpack.c.l.b16 %v301
        %v510 = vunpack.c.l.b16 %v302
        %v511 = vunpack.c.l.b16 %v303
        %v512 = vunpack.c.l.b16 %v304
        %v513 = vunpack.c.l.b16 %v305
        %v514 = vunpack.c.l.b16 %v306
        %v515 = vunpack.c.l.b16 %v307
        %v516 = vunpack.c.l.b16 %v308
        %v517 = vunpack.c.l.b16 %v309
        %v518 = vunpack.c.l.b16 %v310
        %v519 = vunpack.c.l.b16 %v311
        %v520 = vunpack.c.l.b16 %v312
        %v521 = vunpack.c.l.b16 %v313
        %v522 = vunpack.c.l.b16 %v314
        %v523 = vunpack.c.l.b16 %v315
        %v524 = vunpack.c.l.b16 %v316
        %v525 = vunpack.c.l.b16 %v317
        %v526 = vunpack.c.l.b16 %v318
        %v527 = vunpack.c.l.b16 %v319
        %v528 = vunpack.c.l.b16 %v320
        %v529 = vunpack.c.l.b16 %v321
        %v530 = vunpack.c.l.b16 %v322
        %v531 = vunpack.c.l.b16 %v323
        %v532 = vunpack.c.l.b16 %v324
        %v533 = vunpack.c.l.b16 %v325
        %v534 = vunpack.c.l.b16 %v326
        %v535 = vunpack.c.l.b16 %v327
        %v536 = vunpack.c.l.b16 %v328
        %v537 = vunpack.c.l.b16 %v329
        %v538 = vunpack.c.l.b16 %v330
        %v539 = vunpack.c.l.b16 %v331
        %v540 = vunpack.c.l.b16 %v332
        %v541 = vunpack.c.l.b16 %v333
        %v542 = vunpack.c.l.b16 %v334
        %v543 = vunpack.c.l.b16 %v335
        %v544 = vunpack.c.l.b16 %v336
        %v545 = vunpack.c.l.b16 %v337
        %v546 = vunpack.c.l.b16 %v338
        %v547 = vunpack.c.l.b16 %v339
        %v548 = vunpack.c.l.b16 %v340
        %v549 = vunpack.c.l.b16 %v341
        %v550 = vunpack.c.l.b16 %v342
        %v551 = vunpack.c.l.b16 %v343
        %v552 = vunpack.c.l.b16 %v344
        %v553 = vunpack.c.l.b16 %v345
        %v554 = vunpack.c.l.b16 %v346
        %v555 = vunpack.c.l.b16 %v347
        %v556 = vunpack.c.l.b16 %v348
        %v557 = vunpack.c.l.b16 %v349
        %v558 = vunpack.c.l.b16 %v350
        %v559 = vunpack.c.l.b16 %v351
        %v560 = vunpack.c.l.b16 %v352
        %v561 = vunpack.c.l.b16 %v353
        %v562 = vunpack.c.l.b16 %v354
        %v563 = vunpack.c.l.b16 %v355
        %v564 = vunpack.c.l.b16 %v356
        %v565 = vunpack.c.l.b16 %v357
        %v566 = vunpack.c.l.b16 %v358
        %v567 = vunpack.c.l.b16 %v359
        %v568 = vpack.c.b16 %v505, %v504
        %v569 = vpack.c.b16 %v507, %v506
        %v570 = vpack.c.b16 %v509, %v508
        %v571 = vpack.c.b16 %v511, %v510
        %v572 = vpack.c.b16 %v513, %v512
        %v573 = vpack.c.b16 %v515, %v514
        %v574 = vpack.c.b16 %v517, %v516
        %v575 = vpack.c.b16 %v519, %v518
        %v576 = vpack.c.b16 %v521, %v520
        %v577 = vpack.c.b16 %v523, %v522
        %v578 = vpack.c.b16 %v525, %v524
        %v579 = vpack.c.b16 %v527, %v526
        %v580 = vpack.c.b16 %v529, %v528
        %v581 = vpack.c.b16 %v531, %v530
        %v582 = vpack.c.b16 %v533, %v532
        %v583 = vpack.c.b16 %v535, %v534
        %v584 = vpack.c.b16 %v537, %v536
        %v585 = vpack.c.b16 %v539, %v538
        %v586 = vpack.c.b16 %v541, %v540
        %v587 = vpack.c.b16 %v543, %v542
        %v588 = vpack.c.b16 %v545, %v544
        %v589 = vpack.c.b16 %v547, %v546
        %v590 = vpack.c.b16 %v549, %v548
        %v591 = vpack.c.b16 %v551, %v550
        %v592 = vpack.c.b16 %v553, %v552
        %v593 = vpack.c.b16 %v555, %v554
        %v594 = vpack.c.b16 %v557, %v556
        %v595 = vpack.c.b16 %v559, %v558
        %v596 = vpack.c.b16 %v561, %v560
        %v597 = vpack.c.b16 %v563, %v562
        %v598 = vpack.c.b16 %v565, %v564
        %v599 = vpack.c.b16 %v567, %v566
        %632 = vmatprep.subr.bf16.mxu0 0
        %633 = vmatpush1.bf16.msra.mxu0 %v575
        %634 = vmatprep.subr.bf16.mxu0 0
        %635 = vmatpush1.bf16.msra.mxu0 %v574
        %636 = vmatprep.subr.bf16.mxu0 0
        %637 = vmatpush1.bf16.msra.mxu0 %v573
        %638 = vmatprep.subr.bf16.mxu0 0
        %639 = vmatpush1.bf16.msra.mxu0 %v572
        %640 = vmatprep.subr.bf16.mxu0 0
        %641 = vmatpush1.bf16.msra.mxu0 %v571
        %642 = vmatprep.subr.bf16.mxu0 0
        %643 = vmatpush1.bf16.msra.mxu0 %v570
        %644 = vmatprep.subr.bf16.mxu0 0
        %645 = vmatpush1.bf16.msra.mxu0 %v569
        %646 = vmatprep.subr.bf16.mxu0 0
        %647 = vmatpush1.bf16.msra.mxu0 %v568
        %648 = vmatprep.subr.bf16.mxu0 0
        %649 = vmatpush2.bf16.msra.mxu0 %v583
        %650 = vmatprep.subr.bf16.mxu0 0
        %651 = vmatpush2.bf16.msra.mxu0 %v582
        %652 = vmatprep.subr.bf16.mxu0 0
        %653 = vmatpush2.bf16.msra.mxu0 %v581
        %654 = vmatprep.subr.bf16.mxu0 0
        %655 = vmatpush2.bf16.msra.mxu0 %v580
        %656 = vmatprep.subr.bf16.mxu0 0
        %657 = vmatpush2.bf16.msra.mxu0 %v579
        %658 = vmatprep.subr.bf16.mxu0 0
        %659 = vmatpush2.bf16.msra.mxu0 %v578
        %660 = vmatprep.subr.bf16.mxu0 0
        %661 = vmatpush2.bf16.msra.mxu0 %v577
        %662 = vmatprep.subr.bf16.mxu0 0
        %663 = vmatpush2.bf16.msra.mxu0 %v576
        %664 = vmatprep.mubr.bf16.mxu0 %v409
        %665 = vmatmul.mubr.bf16.gmra.mxu0 %v408
        %v666 = vpop.f32.mrf.mxu0
        %v667 = vadd.f32 0.0, %v666
        %v668 = vpop.f32.mrf.mxu0
        %v669 = vpop.f32.mrf.mxu0
        %v670 = vadd.f32 0.0, %v669
        %v671 = vpop.f32.mrf.mxu0
        %672 = vmatprep.mubr.bf16.mxu0 %v413
        %673 = vmatmul.mubr.bf16.gmra.mxu0 %v412
        %v674 = vpop.f32.mrf.mxu0
        %v675 = vadd.f32 0.0, %v674
        %v676 = vpop.f32.mrf.mxu0
        %v677 = vpop.f32.mrf.mxu0
        %v678 = vadd.f32 0.0, %v677
        %v679 = vpop.f32.mrf.mxu0
        %680 = vmatprep.mubr.bf16.mxu0 %v417
        %681 = vmatmul.mubr.bf16.gmra.mxu0 %v416
        %v682 = vpop.f32.mrf.mxu0
        %v683 = vadd.f32 0.0, %v682
        %v684 = vpop.f32.mrf.mxu0
        %v685 = vpop.f32.mrf.mxu0
        %v686 = vadd.f32 0.0, %v685
        %v687 = vpop.f32.mrf.mxu0
        %688 = vmatprep.mubr.bf16.mxu0 %v421
        %689 = vmatmul.mubr.bf16.gmra.mxu0 %v420
        %v690 = vpop.f32.mrf.mxu0
        %v691 = vadd.f32 0.0, %v690
        %v692 = vpop.f32.mrf.mxu0
        %v693 = vpop.f32.mrf.mxu0
        %v694 = vadd.f32 0.0, %v693
        %v695 = vpop.f32.mrf.mxu0
        %696 = vdwg.mxu0
        %697 = vmatprep.subr.bf16.mxu0 0
        %698 = vmatpush1.bf16.msra.mxu0 %v591
        %699 = vmatprep.subr.bf16.mxu0 0
        %700 = vmatpush1.bf16.msra.mxu0 %v590
        %701 = vmatprep.subr.bf16.mxu0 0
        %702 = vmatpush1.bf16.msra.mxu0 %v589
        %703 = vmatprep.subr.bf16.mxu0 0
        %704 = vmatpush1.bf16.msra.mxu0 %v588
        %705 = vmatprep.subr.bf16.mxu0 0
        %706 = vmatpush1.bf16.msra.mxu0 %v587
        %707 = vmatprep.subr.bf16.mxu0 0
        %708 = vmatpush1.bf16.msra.mxu0 %v586
        %709 = vmatprep.subr.bf16.mxu0 0
        %710 = vmatpush1.bf16.msra.mxu0 %v585
        %711 = vmatprep.subr.bf16.mxu0 0
        %712 = vmatpush1.bf16.msra.mxu0 %v584
        %713 = vmatprep.subr.bf16.mxu0 0
        %714 = vmatpush2.bf16.msra.mxu0 %v599
        %715 = vmatprep.subr.bf16.mxu0 0
        %716 = vmatpush2.bf16.msra.mxu0 %v598
        %717 = vmatprep.subr.bf16.mxu0 0
        %718 = vmatpush2.bf16.msra.mxu0 %v597
        %719 = vmatprep.subr.bf16.mxu0 0
        %720 = vmatpush2.bf16.msra.mxu0 %v596
        %721 = vmatprep.subr.bf16.mxu0 0
        %722 = vmatpush2.bf16.msra.mxu0 %v595
        %723 = vmatprep.subr.bf16.mxu0 0
        %724 = vmatpush2.bf16.msra.mxu0 %v594
        %725 = vmatprep.subr.bf16.mxu0 0
        %726 = vmatpush2.bf16.msra.mxu0 %v593
        %727 = vmatprep.subr.bf16.mxu0 0
        %728 = vmatpush2.bf16.msra.mxu0 %v592
        %729 = vmatprep.mubr.bf16.mxu0 %v411
        %730 = vmatmul.mubr.bf16.gmra.mxu0 %v410
        %v731 = vpop.f32.mrf.mxu0
        %v732 = vadd.f32 %v667, %v731
        %v733 = vpop.f32.mrf.mxu0
        %v734 = vpop.f32.mrf.mxu0
        %v735 = vadd.f32 %v670, %v734
        %v736 = vpop.f32.mrf.mxu0
        %737 = vmatprep.mubr.bf16.mxu0 %v415
        %738 = vmatmul.mubr.bf16.gmra.mxu0 %v414
        %v739 = vpop.f32.mrf.mxu0
        %v740 = vadd.f32 %v675, %v739
        %v741 = vpop.f32.mrf.mxu0
        %v742 = vpop.f32.mrf.mxu0
        %v743 = vadd.f32 %v678, %v742
        %v744 = vpop.f32.mrf.mxu0
        %745 = vmatprep.mubr.bf16.mxu0 %v419
        %746 = vmatmul.mubr.bf16.gmra.mxu0 %v418
        %v747 = vpop.f32.mrf.mxu0
        %v748 = vadd.f32 %v683, %v747
        %v749 = vpop.f32.mrf.mxu0
        %v750 = vpop.f32.mrf.mxu0
        %v751 = vadd.f32 %v686, %v750
        %v752 = vpop.f32.mrf.mxu0
        %753 = vmatprep.mubr.bf16.mxu0 %v423
        %754 = vmatmul.mubr.bf16.gmra.mxu0 %v422
        %v755 = vpop.f32.mrf.mxu0
        %v756 = vadd.f32 %v691, %v755
        %v757 = vpop.f32.mrf.mxu0
        %v758 = vpop.f32.mrf.mxu0
        %v759 = vadd.f32 %v694, %v758
        %v760 = vpop.f32.mrf.mxu0
        %761 = vdwg.mxu0
        %v762 = vadd.f32 %v272, %v732
        %v763 = vadd.f32 %v273, %v735
        %v764 = vadd.f32 %v274, %v740
        %v765 = vadd.f32 %v275, %v743
        %v766 = vadd.f32 %v276, %v748
        %v767 = vadd.f32 %v277, %v751
        %v768 = vadd.f32 %v278, %v756
        %v769 = vadd.f32 %v279, %v759
        %770 = vst [vmem:[#allocation2] sm:$0xff] %v762
        %771 = vst [vmem:[#allocation2 + $0x8] sm:$0xff] %v763
        %772 = vst [vmem:[#allocation2 + $0x10] sm:$0xff] %v764
        %773 = vst [vmem:[#allocation2 + $0x18] sm:$0xff] %v765
        %774 = vst [vmem:[#allocation2 + $0x20] sm:$0xff] %v766
        %775 = vst [vmem:[#allocation2 + $0x28] sm:$0xff] %v767
        %776 = vst [vmem:[#allocation2 + $0x30] sm:$0xff] %v768
        %777 = vst [vmem:[#allocation2 + $0x38] sm:$0xff] %v769
        %p778 = scmp.eq.s32.totalorder %s20, 1
        // Predicated region
        $region56: #{discriminator_forward.6} parent=46 // pred_check
          %p779 = pneg %p778
        $region57: #{discriminator_forward.6} parent=46 // pred_check_branch
          %781 = sbr.rel (%p779) target = $region59
        $region58: #{discriminator_forward.6} parent=46 // pred_region
          %v782 = vld [vmem:[#allocation2] sm:$0xff]
          %v783 = vld [vmem:[#allocation2 + $0x8] sm:$0xff]
          %v784 = vld [vmem:[#allocation2 + $0x10] sm:$0xff]
          %v785 = vld [vmem:[#allocation2 + $0x18] sm:$0xff]
          %v786 = vld [vmem:[#allocation2 + $0x20] sm:$0xff]
          %v787 = vld [vmem:[#allocation2 + $0x28] sm:$0xff]
          %v788 = vld [vmem:[#allocation2 + $0x30] sm:$0xff]
          %v789 = vld [vmem:[#allocation2 + $0x38] sm:$0xff]
          %v790 = vadd.f32 %v782, %v783
          %v791 = vadd.f32 %v790, %v784
          %v792 = vadd.f32 %v791, %v785
          %v793 = vadd.f32 %v792, %v786
          %v794 = vadd.f32 %v793, %v787
          %v795 = vadd.f32 %v794, %v788
          %v796 = vadd.f32 %v795, %v789
          %v797 = vrot.slane %v796, 4
          %v798 = vadd.f32 %v796, %v797
          %v799 = vrot.slane %v798, 2
          %v800 = vadd.f32 %v798, %v799
          %v801 = vrot.slane %v800, 1
          %v802 = vadd.f32 %v800, %v801
          %v803 = vrcp.pop 64.0
          %v804 = vmul.f32 %v802, %v803
          %v805 = vsub.f32 %v782, %v804
          %v806 = vsub.f32 %v783, %v804
          %v807 = vsub.f32 %v784, %v804
          %v808 = vsub.f32 %v785, %v804
          %v809 = vsub.f32 %v786, %v804
          %v810 = vsub.f32 %v787, %v804
          %v811 = vsub.f32 %v788, %v804
          %v812 = vsub.f32 %v789, %v804
          %v813 = vmul.f32 %v805, %v805
          %v814 = vmul.f32 %v806, %v806
          %v815 = vmul.f32 %v807, %v807
          %v816 = vmul.f32 %v808, %v808
          %v817 = vmul.f32 %v809, %v809
          %v818 = vmul.f32 %v810, %v810
          %v819 = vmul.f32 %v811, %v811
          %v820 = vmul.f32 %v812, %v812
          %v821 = vadd.f32 %v813, %v814
          %v822 = vadd.f32 %v821, %v815
          %v823 = vadd.f32 %v822, %v816
          %v824 = vadd.f32 %v823, %v817
          %v825 = vadd.f32 %v824, %v818
          %v826 = vadd.f32 %v825, %v819
          %v827 = vadd.f32 %v826, %v820
          %v828 = vrot.slane %v827, 4
          %v829 = vadd.f32 %v827, %v828
          %v830 = vrot.slane %v829, 2
          %v831 = vadd.f32 %v829, %v830
          %v832 = vrot.slane %v831, 1
          %v833 = vadd.f32 %v831, %v832
          %v834 = vmul.f32 %v833, %v803
          %v835 = vadd.f32 %v834, 1e-05
          %v836 = vrsqrt.pop %v835
          %v837 = vmul.f32 %v805, %v836
          %v838 = vmul.f32 %v806, %v836
          %v839 = vmul.f32 %v807, %v836
          %v840 = vmul.f32 %v808, %v836
          %v841 = vmul.f32 %v809, %v836
          %v842 = vmul.f32 %v810, %v836
          %v843 = vmul.f32 %v811, %v836
          %v844 = vmul.f32 %v812, %v836
          %vm845 = vcmp.ge.f32.partialorder %v837, 0.0
          %vm846 = vcmp.ge.f32.partialorder %v838, 0.0
          %vm847 = vcmp.ge.f32.partialorder %v839, 0.0
          %vm848 = vcmp.ge.f32.partialorder %v840, 0.0
          %vm849 = vcmp.ge.f32.partialorder %v841, 0.0
          %vm850 = vcmp.ge.f32.partialorder %v842, 0.0
          %vm851 = vcmp.ge.f32.partialorder %v843, 0.0
          %vm852 = vcmp.ge.f32.partialorder %v844, 0.0
          %v853 = vmul.f32 %v837, 0.2
          %v854 = vmul.f32 %v838, 0.2
          %v855 = vmul.f32 %v839, 0.2
          %v856 = vmul.f32 %v840, 0.2
          %v857 = vmul.f32 %v841, 0.2
          %v858 = vmul.f32 %v842, 0.2
          %v859 = vmul.f32 %v843, 0.2
          %v860 = vmul.f32 %v844, 0.2
          %v861 = vsel %vm845, %v837, %v853
          %v862 = vsel %vm846, %v838, %v854
          %v863 = vsel %vm847, %v839, %v855
          %v864 = vsel %vm848, %v840, %v856
          %v865 = vsel %vm849, %v841, %v857
          %v866 = vsel %vm850, %v842, %v858
          %v867 = vsel %vm851, %v843, %v859
          %v868 = vsel %vm852, %v844, %v860
          %v869 = vpack.c.bf16 %v862, %v861
          %v870 = vpack.c.bf16 %v864, %v863
          %v871 = vpack.c.bf16 %v866, %v865
          %v872 = vpack.c.bf16 %v868, %v867
          %v877 = vunpack.c.l.b16 %v869
          %v878 = vunpack.c.h.b16 %v869
          %v879 = vunpack.c.l.b16 %v870
          %v880 = vunpack.c.h.b16 %v870
          %v881 = vunpack.c.l.b16 %v871
          %v882 = vunpack.c.h.b16 %v871
          %v883 = vunpack.c.l.b16 %v872
          %v884 = vunpack.c.h.b16 %v872
          %v885 = vpack.c.b16 %v877, %v877
          %v886 = vpack.c.b16 %v878, %v878
          %v887 = vpack.c.b16 %v879, %v879
          %v888 = vpack.c.b16 %v880, %v880
          %v889 = vpack.c.b16 %v881, %v881
          %v890 = vpack.c.b16 %v882, %v882
          %v891 = vpack.c.b16 %v883, %v883
          %v892 = vpack.c.b16 %v884, %v884
          %901 = vst [vmem:[%s258] sm:$0xf] %v885
          %902 = vst [vmem:[%s258 + $0x4] sm:$0xf] %v886
          %903 = vst [vmem:[%s258 + $0x8] sm:$0xf] %v887
          %904 = vst [vmem:[%s258 + $0xc] sm:$0xf] %v888
          %905 = vst [vmem:[%s258 + $0x10] sm:$0xf] %v889
          %906 = vst [vmem:[%s258 + $0x14] sm:$0xf] %v890
          %907 = vst [vmem:[%s258 + $0x18] sm:$0xf] %v891
          %908 = vst [vmem:[%s258 + $0x1c] sm:$0xf] %v892
        $region59: #{discriminator_forward.6} parent=46 // pred_fallthru
          _
        %p909 = scmp.lt.s32.totalorder %s18, 1
        %s910 = scalar_select %p909, %s18, 1
        %p911 = scmp.lt.s32.totalorder %s19, 0
        %s912 = scalar_select %p911, %s19, 0
        %s913 = smul.addr %s910, 8
        %s914 = sadd.s32 %s912, %s913
        %s915 = smul.addr %s914, 4
        %s916 = scalar_lea.vmem %s2, %s915
        // Predicated region
        $region60: #{discriminator_forward.6} parent=46 // pred_check
          %p917 = pneg %p108
        $region61: #{discriminator_forward.6} parent=46 // pred_check_branch
          %919 = sbr.rel (%p917) target = $region63
        $region62: #{discriminator_forward.6} parent=46 // pred_region
          _
        $region63: #{discriminator_forward.6} parent=46 // pred_fallthru
          _
      $region47: #{discriminator_forward.6} parent=5 // pred_fallthru
        _
      %p920 = scmp.le.s32.totalorder 2, %s8
      // Predicated region
      $region64: #{discriminator_forward.6} parent=5 // pred_check
        %p921 = pneg %p920
      $region65: #{discriminator_forward.6} parent=5 // pred_check_branch
        %923 = sbr.rel (%p921) target = $region67
      $region66: #{discriminator_forward.6} parent=5 // pred_region
        %s924 = ssub.s32 %s8, 2
        // Predicated region
        $region68: #{discriminator_forward.6} parent=66 // pred_check
          %p925 = pneg %p114
        $region69: #{discriminator_forward.6} parent=66 // pred_check_branch
          %927 = sbr.rel (%p925) target = $region71
        $region70: #{discriminator_forward.6} parent=66 // pred_region
          %p928 = scmp.lt.s32.totalorder %s21, 1
          %s929 = scalar_select %p928, %s21, 1
          %p930 = scmp.lt.s32.totalorder %s22, 0
          %s931 = scalar_select %p930, %s22, 0
          %s932 = smul.addr %s929, 8
          %s933 = sadd.s32 %s931, %s932
          %s934 = smul.addr %s933, 4
          %s935 = scalar_lea.vmem %s2, %s934
        $region71: #{discriminator_forward.6} parent=66 // pred_fallthru
          _
      $region67: #{discriminator_forward.6} parent=5 // pred_fallthru
        _
    $region6: #{discriminator_forward.6} parent=1 // loop_footer
      %s12 = sadd.s32 1, %s8
    $region7: #{discriminator_forward.6} parent=1 // loop_footer_branch
      %7 = sbr.rel target = $region3
    $region8: #{discriminator_forward.6} parent=1 // loop_exit
      _

// kernel: discriminator_forward.7
$region0: #{discriminator_forward.7}
  #allocation0 [shape = 'u32[]', space=smem, size = 0x4, offset = 0x4, fixed_abs, tag = 'smem constant byte address 0x4 - core index']
  #allocation1 [shape = 'u32[144,128]{1,0:T(1,128)}', space=vmem, size = 0x12000, scoped, tag = 'internal scratch']
  #allocation2 [shape = 'f32[16,256]{1,0:T(8,128)}', space=vmem, size = 0x4000, scoped, tag = 'scratch operand']
  %s0 = inlined_call_operand.vmem [shape: bf16[2,16,2048], index: 0, kind: input, shape index: {}]
  %s1 = inlined_call_operand.vmem [shape: bf16[2048,256], index: 1, kind: input, shape index: {}]
  %s2 = inlined_call_operand.vmem [shape: bf16[2,16,256], index: 2, kind: output, shape index: {}]
  %s3 = sld [smem:[#allocation0]]
  $region72: #{discriminator_forward.7} parent=0
    _
  %s5 = ssub.s32 1, %s3
  %s6 = scalar_select 0, %s5, %s3
  $region1: #{discriminator_forward.7} parent=0
    #allocation3 [shape = 'u8[32768]{0}', space=vmem, size = 0x8000, scoped, tag = 'input window, operand 0']
    loop: start=0, step=1, limit=10
    $region2: #{discriminator_forward.7} parent=1 // loop_pre_header
      _
    $region3: #{discriminator_forward.7} parent=1 // loop_header
      %s8 = sphi 0, %s12
      %p9 = scmp.ge.s32.totalorder %s8, 10
      %s15 = sphi 0, %s34
      %s16 = sphi 0, %s30
      %s17 = sphi 0, %s26
      %s18 = sphi 0, %s15
      %s19 = sphi 0, %s16
      %s20 = sphi 0, %s17
      %s21 = sphi 0, %s18
      %s22 = sphi 0, %s19
      %s23 = sphi 0, %s20
      %s39 = sphi 0, %s41
      %s42 = sphi 0, %s39
      %s43 = sphi 0, %s42
      %s59 = sphi 0, %s43
      %s67 = sphi 0, %s69
      %s70 = sphi 0, %s67
      %s71 = sphi 0, %s70
      %s87 = sphi 0, %s71
      %s95 = sphi 0, %s97
      %s98 = sphi 0, %s95
      %s99 = sphi 0, %s98
      %s115 = sphi 0, %s99
    $region4: #{discriminator_forward.7} parent=1 // loop_header_branch
      %11 = sbr.rel (%p9) target = $region8
    $region5: #{discriminator_forward.7} parent=1 // loop_body
      %s13 = ssub.s32 %s8, 1
      %s14 = ssub.s32 %s8, 2
      %s24 = sadd.s32 1, %s17
      %p25 = scmp.ge.s32.totalorder %s24, 4
      %s26 = scalar_select %p25, 0, %s24
      %s27 = sadd.s32 1, %s16
      %s28 = scalar_select %p25, %s27, %s16
      %p29 = scmp.ge.s32.totalorder %s28, 1
      %s30 = scalar_select %p29, 0, %s28
      %s31 = sadd.s32 1, %s15
      %s32 = scalar_select %p29, %s31, %s15
      %p33 = scmp.ge.s32.totalorder %s32, 2
      %s34 = scalar_select %p33, 0, %s32
      %s35 = ssub.s32 %s15, %s34
      %s36 = ssub.s32 %s17, %s26
      %s37 = sor.u32 %s35, %s36
      %p38 = scmp.eq.s32.totalorder %s37, 0
      %s40 = sadd.s32 %s39, 1
      %s41 = scalar_select %p38, %s39, %s40
      %p44 = pneg %p38
      %p45 = scmp.eq.s32.totalorder %s8, 7
      %p46 = por %p44, %p45
      %p47 = scmp.ne.s32.totalorder %s39, %s42
      %p48 = scmp.eq.s32.totalorder %s8, 0
      %p49 = por %p47, %p48
      %p50 = scmp.ne.s32.totalorder %s39, %s42
      %p51 = scmp.eq.s32.totalorder %s13, 7
      %p52 = por %p50, %p51
      %p53 = scmp.ne.s32.totalorder %s42, %s43
      %p54 = scmp.eq.s32.totalorder %s13, 0
      %p55 = por %p53, %p54
      %p56 = scmp.ne.s32.totalorder %s42, %s43
      %p57 = scmp.eq.s32.totalorder %s14, 7
      %p58 = por %p56, %p57
      %p60 = scmp.ne.s32.totalorder %s43, %s59
      %p61 = scmp.eq.s32.totalorder %s14, 0
      %p62 = por %p60, %p61
      %s63 = ssub.s32 %s17, %s26
      %s64 = ssub.s32 %s16, %s30
      %s65 = sor.u32 %s63, %s64
      %p66 = scmp.eq.s32.totalorder %s65, 0
      %s68 = sadd.s32 %s67, 1
      %s69 = scalar_select %p66, %s67, %s68
      %p72 = pneg %p66
      %p73 = scmp.eq.s32.totalorder %s8, 7
      %p74 = por %p72, %p73
      %p75 = scmp.ne.s32.totalorder %s67, %s70
      %p76 = scmp.eq.s32.totalorder %s8, 0
      %p77 = por %p75, %p76
      %p78 = scmp.ne.s32.totalorder %s67, %s70
      %p79 = scmp.eq.s32.totalorder %s13, 7
      %p80 = por %p78, %p79
      %p81 = scmp.ne.s32.totalorder %s70, %s71
      %p82 = scmp.eq.s32.totalorder %s13, 0
      %p83 = por %p81, %p82
      %p84 = scmp.ne.s32.totalorder %s70, %s71
      %p85 = scmp.eq.s32.totalorder %s14, 7
      %p86 = por %p84, %p85
      %p88 = scmp.ne.s32.totalorder %s71, %s87
      %p89 = scmp.eq.s32.totalorder %s14, 0
      %p90 = por %p88, %p89
      %s91 = ssub.s32 %s15, %s34
      %s92 = ssub.s32 %s16, %s30
      %s93 = sor.u32 %s91, %s92
      %p94 = scmp.eq.s32.totalorder %s93, 0
      %s96 = sadd.s32 %s95, 1
      %s97 = scalar_select %p94, %s95, %s96
      %p100 = pneg %p94
      %p101 = scmp.eq.s32.totalorder %s8, 7
      %p102 = por %p100, %p101
      %p103 = scmp.ne.s32.totalorder %s95, %s98
      %p104 = scmp.eq.s32.totalorder %s8, 0
      %p105 = por %p103, %p104
      %p106 = scmp.ne.s32.totalorder %s95, %s98
      %p107 = scmp.eq.s32.totalorder %s13, 7
      %p108 = por %p106, %p107
      %p109 = scmp.ne.s32.totalorder %s98, %s99
      %p110 = scmp.eq.s32.totalorder %s13, 0
      %p111 = por %p109, %p110
      %p112 = scmp.ne.s32.totalorder %s98, %s99
      %p113 = scmp.eq.s32.totalorder %s14, 7
      %p114 = por %p112, %p113
      %p116 = scmp.ne.s32.totalorder %s99, %s115
      %p117 = scmp.eq.s32.totalorder %s14, 0
      %p118 = por %p116, %p117
      %p119 = scmp.le.s32.totalorder 1, %s8
      %p120 = scmp.lt.s32.totalorder %s8, 9
      %p121 = pnand %p119, %p120
      %p122 = pneg %p121
      // Predicated region
      $region9: #{discriminator_forward.7} parent=5 // pred_check
        _
      $region10: #{discriminator_forward.7} parent=5 // pred_check_branch
        %124 = sbr.rel (%p121) target = $region12
      $region11: #{discriminator_forward.7} parent=5 // pred_region
        %s125 = ssub.s32 %s8, 1
      $region12: #{discriminator_forward.7} parent=5 // pred_fallthru
        _
      %p126 = scmp.lt.s32.totalorder %s8, 8
      // Predicated region
      $region13: #{discriminator_forward.7} parent=5 // pred_check
        %p127 = pneg %p126
      $region14: #{discriminator_forward.7} parent=5 // pred_check_branch
        %129 = sbr.rel (%p127) target = $region16
      $region15: #{discriminator_forward.7} parent=5 // pred_region
        // Predicated region
        $region17: #{discriminator_forward.7} parent=15 // pred_check
          %p130 = pneg %p49
        $region18: #{discriminator_forward.7} parent=15 // pred_check_branch
          %132 = sbr.rel (%p130) target = $region20
        $region19: #{discriminator_forward.7} parent=15 // pred_region
          %s133 = sand.u32 %s39, 1
          %s134 = sand.u32 %s39, 1
          %s135 = smul.addr %s134, 32
          %s136 = scalar_lea.vmem [#allocation3], %s135
          %s137 = smul.u32 4, %s17
          %s138 = smul.addr %s15, 32
          %s139 = sadd.s32 %s137, %s138
          %s140 = smul.addr %s139, 4
          %s141 = scalar_lea.vmem %s0, %s140
          // Predicated region
          $region21: #{discriminator_forward.7} parent=19 // pred_check
            _
          $region22: #{discriminator_forward.7} parent=19 // pred_check_branch
            %143 = sbr.rel (0) target = $region24
          $region23: #{discriminator_forward.7} parent=19 // pred_region
            // Predicated region
            $region25: #{discriminator_forward.7} parent=23 // pred_check
              _
            $region26: #{discriminator_forward.7} parent=23 // pred_check_branch
              %145 = sbr.rel (0) target = $region28
            $region27: #{discriminator_forward.7} parent=23 // pred_region
              loop: start=0, step=1, limit=1
              $region29: #{discriminator_forward.7} parent=27 // loop_pre_header
                _
              $region30: #{discriminator_forward.7} parent=27 // loop_header
                %s147 = sphi 0, %s151
                %p148 = scmp.ge.s32.totalorder %s147, 1
                %s152 = sphi %s141, %s141
                %s153 = sphi %s136, %s136
              $region31: #{discriminator_forward.7} parent=27 // loop_header_branch
                %150 = sbr.rel (%p148) target = $region35
              $region32: #{discriminator_forward.7} parent=27 // loop_body
                %v154 = vld [vmem:[%s152] sm:$0xff]
                %155 = vst [vmem:[%s153] sm:$0xff] %v154
                %v156 = vld [vmem:[%s152 + $0x8] sm:$0xff]
                %157 = vst [vmem:[%s153 + $0x8] sm:$0xff] %v156
                %v158 = vld [vmem:[%s152 + $0x40] sm:$0xff]
                %159 = vst [vmem:[%s153 + $0x10] sm:$0xff] %v158
                %v160 = vld [vmem:[%s152 + $0x48] sm:$0xff]
                %161 = vst [vmem:[%s153 + $0x18] sm:$0xff] %v160
              $region33: #{discriminator_forward.7} parent=27 // loop_footer
                %s151 = sadd.s32 1, %s147
              $region34: #{discriminator_forward.7} parent=27 // loop_footer_branch
                %146 = sbr.rel target = $region30
              $region35: #{discriminator_forward.7} parent=27 // loop_exit
                _
            $region28: #{discriminator_forward.7} parent=23 // pred_fallthru
              _
            // Predicated region
            $region36: #{discriminator_forward.7} parent=23 // pred_check
              _
            $region37: #{discriminator_forward.7} parent=23 // pred_check_branch
              %163 = sbr.rel target = $region39
            $region38: #{discriminator_forward.7} parent=23 // pred_region
              _
            $region39: #{discriminator_forward.7} parent=23 // pred_fallthru
              _
          $region24: #{discriminator_forward.7} parent=19 // pred_fallthru
            _
          %164 = vnop
        $region20: #{discriminator_forward.7} parent=15 // pred_fallthru
          _
        // Predicated region
        $region40: #{discriminator_forward.7} parent=15 // pred_check
          %p165 = pneg %p77
        $region41: #{discriminator_forward.7} parent=15 // pred_check_branch
          %167 = sbr.rel (%p165) target = $region43
        $region42: #{discriminator_forward.7} parent=15 // pred_region
          %s168 = smul.u32 64, %s17
          %s169 = smul.u32 2, %s16
          %p170 = scmp.lt.s32.totalorder %s168, 255
          %s171 = scalar_select %p170, %s168, 255
          %p172 = scmp.lt.s32.totalorder %s169, 1
          %s173 = scalar_select %p172, %s169, 1
          %s174 = smul.addr %s171, 2
          %s175 = sadd.s32 %s173, %s174
          %s176 = smul.addr %s175, 4
          %s177 = scalar_lea.vmem %s1, %s176
          %s178 = smul.u32 64, %s17
          %s179 = smul.u32 2, %s16
        $region43: #{discriminator_forward.7} parent=15 // pred_fallthru
          _
      $region16: #{discriminator_forward.7} parent=5 // pred_fallthru
        _
      %p180 = scmp.le.s32.totalorder 1, %s8
      %p181 = scmp.lt.s32.totalorder %s8, 9
      %p182 = pnand %p180, %p181
      %p183 = pneg %p182
      // Predicated region
      $region44: #{discriminator_forward.7} parent=5 // pred_check
        _
      $region45: #{discriminator_forward.7} parent=5 // pred_check_branch
        %185 = sbr.rel (%p182) target = $region47
      $region46: #{discriminator_forward.7} parent=5 // pred_region
        %s186 = ssub.s32 %s8, 1
        %s187 = sand.u32 %s42, 1
        %s188 = sand.u32 %s42, 1
        %s189 = smul.addr %s188, 32
        %s190 = scalar_lea.vmem [#allocation3], %s189
        // Predicated region
        $region48: #{discriminator_forward.7} parent=46 // pred_check
          %p191 = pneg %p55
        $region49: #{discriminator_forward.7} parent=46 // pred_check_branch
          %193 = sbr.rel (%p191) target = $region51
        $region50: #{discriminator_forward.7} parent=46 // pred_region
          _
        $region51: #{discriminator_forward.7} parent=46 // pred_fallthru
          _
        %s194 = sand.u32 %s42, 1
        %s195 = sand.u32 %s42, 1
        %s196 = smul.addr %s195, 32
        %s197 = scalar_lea.vmem [#allocation3], %s196
        %p198 = pneg %p55
        %p199 = pneg %p52
        %s200 = smul.u32 64, %s20
        %s201 = smul.u32 2, %s19
        %p202 = scmp.lt.s32.totalorder %s200, 255
        %s203 = scalar_select %p202, %s200, 255
        %p204 = scmp.lt.s32.totalorder %s201, 1
        %s205 = scalar_select %p204, %s201, 1
        %s206 = smul.addr %s203, 2
        %s207 = sadd.s32 %s205, %s206
        %s208 = smul.addr %s207, 4
        %s209 = scalar_lea.vmem %s1, %s208
        %p210 = pneg %p83
        %p211 = pneg %p80
        %p212 = pneg %p111
        %p213 = pneg %p108
        %s214 = smul.u32 2, %s19
        %p215 = scmp.lt.s32.totalorder %s18, 1
        %s216 = scalar_select %p215, %s18, 1
        %p217 = scmp.lt.s32.totalorder %s214, 1
        %s218 = scalar_select %p217, %s214, 1
        %s219 = smul.addr %s216, 4
        %s220 = sadd.s32 %s218, %s219
        %s221 = smul.addr %s220, 4
        %s222 = scalar_lea.vmem %s2, %s221
        %s223 = smul.u32 4, %s20
        %s224 = smul.u32 64, %s20
        %s225 = smul.u32 2, %s19
        %p226 = scmp.lt.s32.totalorder %s224, 255
        %s227 = scalar_select %p226, %s224, 255
        %p228 = scmp.lt.s32.totalorder %s225, 1
        %s229 = scalar_select %p228, %s225, 1
        %s230 = smul.addr %s227, 2
        %s231 = sadd.s32 %s229, %s230
        %s232 = smul.addr %s231, 4
        %s233 = scalar_lea.vmem %s1, %s232
        %s234 = smul.u32 64, %s20
        %s235 = smul.u32 2, %s19
        %s236 = smul.u32 2, %s19
        %p237 = scmp.lt.s32.totalorder %s18, 1
        %s238 = scalar_select %p237, %s18, 1
        %p239 = scmp.lt.s32.totalorder %s236, 1
        %s240 = scalar_select %p239, %s236, 1
        %s241 = smul.addr %s238, 4
        %s242 = sadd.s32 %s240, %s241
        %s243 = smul.addr %s242, 4
        %s244 = scalar_lea.vmem %s2, %s243
        %s245 = smul.u32 2, %s19
        %p246 = scmp.eq.s32.totalorder %s20, 0
        // Predicated region
        $region52: #{discriminator_forward.7} parent=46 // pred_check
          %p247 = pneg %p246
        $region53: #{discriminator_forward.7} parent=46 // pred_check_branch
          %249 = sbr.rel (%p247) target = $region55
        $region54: #{discriminator_forward.7} parent=46 // pred_region
          %250 = vst [vmem:[#allocation2] sm:$0xff] 0.0
          %251 = vst [vmem:[#allocation2 + $0x8] sm:$0xff] 0.0
          %252 = vst [vmem:[#allocation2 + $0x10] sm:$0xff] 0.0
          %253 = vst [vmem:[#allocation2 + $0x18] sm:$0xff] 0.0
        $region55: #{discriminator_forward.7} parent=46 // pred_fallthru
          _
        %v254 = vld [vmem:[#allocation2] sm:$0xff]
        %v255 = vld [vmem:[#allocation2 + $0x8] sm:$0xff]
        %v256 = vld [vmem:[#allocation2 + $0x10] sm:$0xff]
        %v257 = vld [vmem:[#allocation2 + $0x18] sm:$0xff]
        %v258 = vld [vmem:[%s190] sm:$0xff]
        %v259 = vld [vmem:[%s190 + $0x8] sm:$0xff]
        %v260 = vld [vmem:[%s190 + $0x10] sm:$0xff]
        %v261 = vld [vmem:[%s190 + $0x18] sm:$0xff]
        %v262 = vld [vmem:[%s233] sm:$0xff]
        %v263 = vld [vmem:[%s233 + $0x8] sm:$0xff]
        %v264 = vld [vmem:[%s233 + $0x10] sm:$0xff]
        %v265 = vld [vmem:[%s233 + $0x18] sm:$0xff]
        %v266 = vld [vmem:[%s233 + $0x20] sm:$0xff]
        %v267 = vld [vmem:[%s233 + $0x28] sm:$0xff]
        %v268 = vld [vmem:[%s233 + $0x30] sm:$0xff]
        %v269 = vld [vmem:[%s233 + $0x38] sm:$0xff]
        %v270 = vld [vmem:[%s233 + $0x40] sm:$0xff]
        %v271 = vld [vmem:[%s233 + $0x48] sm:$0xff]
        %v272 = vld [vmem:[%s233 + $0x50] sm:$0xff]
        %v273 = vld [vmem:[%s233 + $0x58] sm:$0xff]
        %v274 = vld [vmem:[%s233 + $0x60] sm:$0xff]
        %v275 = vld [vmem:[%s233 + $0x68] sm:$0xff]
        %v276 = vld [vmem:[%s233 + $0x70] sm:$0xff]
        %v277 = vld [vmem:[%s233 + $0x78] sm:$0xff]
        %v278 = vld [vmem:[%s233 + $0x80] sm:$0xff]
        %v279 = vld [vmem:[%s233 + $0x88] sm:$0xff]
        %v280 = vld [vmem:[%s233 + $0x90] sm:$0xff]
        %v281 = vld [vmem:[%s233 + $0x98] sm:$0xff]
        %v282 = vld [vmem:[%s233 + $0xa0] sm:$0xff]
        %v283 = vld [vmem:[%s233 + $0xa8] sm:$0xff]
        %v284 = vld [vmem:[%s233 + $0xb0] sm:$0xff]
        %v285 = vld [vmem:[%s233 + $0xb8] sm:$0xff]
        %v286 = vld [vmem:[%s233 + $0xc0] sm:$0xff]
        %v287 = vld [vmem:[%s233 + $0xc8] sm:$0xff]
        %v288 = vld [vmem:[%s233 + $0xd0] sm:$0xff]
        %v289 = vld [vmem:[%s233 + $0xd8] sm:$0xff]
        %v290 = vld [vmem:[%s233 + $0xe0] sm:$0xff]
        %v291 = vld [vmem:[%s233 + $0xe8] sm:$0xff]
        %v292 = vld [vmem:[%s233 + $0xf0] sm:$0xff]
        %v293 = vld [vmem:[%s233 + $0xf8] sm:$0xff]
        %v294 = vld [vmem:[%s233 + $0x100] sm:$0xff]
        %v295 = vld [vmem:[%s233 + $0x108] sm:$0xff]
        %v296 = vld [vmem:[%s233 + $0x110] sm:$0xff]
        %v297 = vld [vmem:[%s233 + $0x118] sm:$0xff]
        %v298 = vld [vmem:[%s233 + $0x120] sm:$0xff]
        %v299 = vld [vmem:[%s233 + $0x128] sm:$0xff]
        %v300 = vld [vmem:[%s233 + $0x130] sm:$0xff]
        %v301 = vld [vmem:[%s233 + $0x138] sm:$0xff]
        %v302 = vld [vmem:[%s233 + $0x140] sm:$0xff]
        %v303 = vld [vmem:[%s233 + $0x148] sm:$0xff]
        %v304 = vld [vmem:[%s233 + $0x150] sm:$0xff]
        %v305 = vld [vmem:[%s233 + $0x158] sm:$0xff]
        %v306 = vld [vmem:[%s233 + $0x160] sm:$0xff]
        %v307 = vld [vmem:[%s233 + $0x168] sm:$0xff]
        %v308 = vld [vmem:[%s233 + $0x170] sm:$0xff]
        %v309 = vld [vmem:[%s233 + $0x178] sm:$0xff]
        %v310 = vld [vmem:[%s233 + $0x180] sm:$0xff]
        %v311 = vld [vmem:[%s233 + $0x188] sm:$0xff]
        %v312 = vld [vmem:[%s233 + $0x190] sm:$0xff]
        %v313 = vld [vmem:[%s233 + $0x198] sm:$0xff]
        %v314 = vld [vmem:[%s233 + $0x1a0] sm:$0xff]
        %v315 = vld [vmem:[%s233 + $0x1a8] sm:$0xff]
        %v316 = vld [vmem:[%s233 + $0x1b0] sm:$0xff]
        %v317 = vld [vmem:[%s233 + $0x1b8] sm:$0xff]
        %v318 = vld [vmem:[%s233 + $0x1c0] sm:$0xff]
        %v319 = vld [vmem:[%s233 + $0x1c8] sm:$0xff]
        %v320 = vld [vmem:[%s233 + $0x1d0] sm:$0xff]
        %v321 = vld [vmem:[%s233 + $0x1d8] sm:$0xff]
        %v322 = vld [vmem:[%s233 + $0x1e0] sm:$0xff]
        %v323 = vld [vmem:[%s233 + $0x1e8] sm:$0xff]
        %v324 = vld [vmem:[%s233 + $0x1f0] sm:$0xff]
        %v325 = vld [vmem:[%s233 + $0x1f8] sm:$0xff]
        %v330 = vunpack.c.l.b16 %v258
        %v331 = vunpack.c.h.b16 %v258
        %v332 = vunpack.c.l.b16 %v259
        %v333 = vunpack.c.h.b16 %v259
        %v334 = vunpack.c.l.b16 %v260
        %v335 = vunpack.c.h.b16 %v260
        %v336 = vunpack.c.l.b16 %v261
        %v337 = vunpack.c.h.b16 %v261
        %v338 = vpack.c.b16 %v334, %v330
        %v339 = vpack.c.b16 %v335, %v331
        %v340 = vpack.c.b16 %v336, %v332
        %v341 = vpack.c.b16 %v337, %v333
        %v410 = vunpack.c.l.b16 %v262
        %v411 = vunpack.c.h.b16 %v262
        %v412 = vunpack.c.l.b16 %v263
        %v413 = vunpack.c.h.b16 %v263
        %v414 = vunpack.c.l.b16 %v264
        %v415 = vunpack.c.h.b16 %v264
        %v416 = vunpack.c.l.b16 %v265
        %v417 = vunpack.c.h.b16 %v265
        %v418 = vunpack.c.l.b16 %v266
        %v419 = vunpack.c.h.b16 %v266
        %v420 = vunpack.c.l.b16 %v267
        %v421 = vunpack.c.h.b16 %v267
        %v422 = vunpack.c.l.b16 %v268
        %v423 = vunpack.c.h.b16 %v268
        %v424 = vunpack.c.l.b16 %v269
        %v425 = vunpack.c.h.b16 %v269
        %v426 = vunpack.c.l.b16 %v270
        %v427 = vunpack.c.h.b16 %v270
        %v428 = vunpack.c.l.b16 %v271
        %v429 = vunpack.c.h.b16 %v271
        %v430 = vunpack.c.l.b16 %v272
        %v431 = vunpack.c.h.b16 %v272
        %v432 = vunpack.c.l.b16 %v273
        %v433 = vunpack.c.h.b16 %v273
        %v434 = vunpack.c.l.b16 %v274
        %v435 = vunpack.c.h.b16 %v274
        %v436 = vunpack.c.l.b16 %v275
        %v437 = vunpack.c.h.b16 %v275
        %v438 = vunpack.c.l.b16 %v276
        %v439 = vunpack.c.h.b16 %v276
        %v440 = vunpack.c.l.b16 %v277
        %v441 = vunpack.c.h.b16 %v277
        %v442 = vunpack.c.l.b16 %v278
        %v443 = vunpack.c.h.b16 %v278
        %v444 = vunpack.c.l.b16 %v279
        %v445 = vunpack.c.h.b16 %v279
        %v446 = vunpack.c.l.b16 %v280
        %v447 = vunpack.c.h.b16 %v280
        %v448 = vunpack.c.l.b16 %v281
        %v449 = vunpack.c.h.b16 %v281
        %v450 = vunpack.c.l.b16 %v282
        %v451 = vunpack.c.h.b16 %v282
        %v452 = vunpack.c.l.b16 %v283
        %v453 = vunpack.c.h.b16 %v283
        %v454 = vunpack.c.l.b16 %v284
        %v455 = vunpack.c.h.b16 %v284
        %v456 = vunpack.c.l.b16 %v285
        %v457 = vunpack.c.h.b16 %v285
        %v458 = vunpack.c.l.b16 %v286
        %v459 = vunpack.c.h.b16 %v286
        %v460 = vunpack.c.l.b16 %v287
        %v461 = vunpack.c.h.b16 %v287
        %v462 = vunpack.c.l.b16 %v288
        %v463 = vunpack.c.h.b16 %v288
        %v464 = vunpack.c.l.b16 %v289
        %v465 = vunpack.c.h.b16 %v289
        %v466 = vunpack.c.l.b16 %v290
        %v467 = vunpack.c.h.b16 %v290
        %v468 = vunpack.c.l.b16 %v291
        %v469 = vunpack.c.h.b16 %v291
        %v470 = vunpack.c.l.b16 %v292
        %v471 = vunpack.c.h.b16 %v292
        %v472 = vunpack.c.l.b16 %v293
        %v473 = vunpack.c.h.b16 %v293
        %v474 = vunpack.c.l.b16 %v294
        %v475 = vunpack.c.h.b16 %v294
        %v476 = vunpack.c.l.b16 %v295
        %v477 = vunpack.c.h.b16 %v295
        %v478 = vunpack.c.l.b16 %v296
        %v479 = vunpack.c.h.b16 %v296
        %v480 = vunpack.c.l.b16 %v297
        %v481 = vunpack.c.h.b16 %v297
        %v482 = vunpack.c.l.b16 %v298
        %v483 = vunpack.c.h.b16 %v298
        %v484 = vunpack.c.l.b16 %v299
        %v485 = vunpack.c.h.b16 %v299
        %v486 = vunpack.c.l.b16 %v300
        %v487 = vunpack.c.h.b16 %v300
        %v488 = vunpack.c.l.b16 %v301
        %v489 = vunpack.c.h.b16 %v301
        %v490 = vunpack.c.l.b16 %v302
        %v491 = vunpack.c.h.b16 %v302
        %v492 = vunpack.c.l.b16 %v303
        %v493 = vunpack.c.h.b16 %v303
        %v494 = vunpack.c.l.b16 %v304
        %v495 = vunpack.c.h.b16 %v304
        %v496 = vunpack.c.l.b16 %v305
        %v497 = vunpack.c.h.b16 %v305
        %v498 = vunpack.c.l.b16 %v306
        %v499 = vunpack.c.h.b16 %v306
        %v500 = vunpack.c.l.b16 %v307
        %v501 = vunpack.c.h.b16 %v307
        %v502 = vunpack.c.l.b16 %v308
        %v503 = vunpack.c.h.b16 %v308
        %v504 = vunpack.c.l.b16 %v309
        %v505 = vunpack.c.h.b16 %v309
        %v506 = vunpack.c.l.b16 %v310
        %v507 = vunpack.c.h.b16 %v310
        %v508 = vunpack.c.l.b16 %v311
        %v509 = vunpack.c.h.b16 %v311
        %v510 = vunpack.c.l.b16 %v312
        %v511 = vunpack.c.h.b16 %v312
        %v512 = vunpack.c.l.b16 %v313
        %v513 = vunpack.c.h.b16 %v313
        %v514 = vunpack.c.l.b16 %v314
        %v515 = vunpack.c.h.b16 %v314
        %v516 = vunpack.c.l.b16 %v315
        %v517 = vunpack.c.h.b16 %v315
        %v518 = vunpack.c.l.b16 %v316
        %v519 = vunpack.c.h.b16 %v316
        %v520 = vunpack.c.l.b16 %v317
        %v521 = vunpack.c.h.b16 %v317
        %v522 = vunpack.c.l.b16 %v318
        %v523 = vunpack.c.h.b16 %v318
        %v524 = vunpack.c.l.b16 %v319
        %v525 = vunpack.c.h.b16 %v319
        %v526 = vunpack.c.l.b16 %v320
        %v527 = vunpack.c.h.b16 %v320
        %v528 = vunpack.c.l.b16 %v321
        %v529 = vunpack.c.h.b16 %v321
        %v530 = vunpack.c.l.b16 %v322
        %v531 = vunpack.c.h.b16 %v322
        %v532 = vunpack.c.l.b16 %v323
        %v533 = vunpack.c.h.b16 %v323
        %v534 = vunpack.c.l.b16 %v324
        %v535 = vunpack.c.h.b16 %v324
        %v536 = vunpack.c.l.b16 %v325
        %v537 = vunpack.c.h.b16 %v325
        %v538 = vpack.c.b16 %v412, %v410
        %v539 = vpack.c.b16 %v413, %v411
        %v540 = vpack.c.b16 %v416, %v414
        %v541 = vpack.c.b16 %v417, %v415
        %v542 = vpack.c.b16 %v420, %v418
        %v543 = vpack.c.b16 %v421, %v419
        %v544 = vpack.c.b16 %v424, %v422
        %v545 = vpack.c.b16 %v425, %v423
        %v546 = vpack.c.b16 %v428, %v426
        %v547 = vpack.c.b16 %v429, %v427
        %v548 = vpack.c.b16 %v432, %v430
        %v549 = vpack.c.b16 %v433, %v431
        %v550 = vpack.c.b16 %v436, %v434
        %v551 = vpack.c.b16 %v437, %v435
        %v552 = vpack.c.b16 %v440, %v438
        %v553 = vpack.c.b16 %v441, %v439
        %v554 = vpack.c.b16 %v444, %v442
        %v555 = vpack.c.b16 %v445, %v443
        %v556 = vpack.c.b16 %v448, %v446
        %v557 = vpack.c.b16 %v449, %v447
        %v558 = vpack.c.b16 %v452, %v450
        %v559 = vpack.c.b16 %v453, %v451
        %v560 = vpack.c.b16 %v456, %v454
        %v561 = vpack.c.b16 %v457, %v455
        %v562 = vpack.c.b16 %v460, %v458
        %v563 = vpack.c.b16 %v461, %v459
        %v564 = vpack.c.b16 %v464, %v462
        %v565 = vpack.c.b16 %v465, %v463
        %v566 = vpack.c.b16 %v468, %v466
        %v567 = vpack.c.b16 %v469, %v467
        %v568 = vpack.c.b16 %v472, %v470
        %v569 = vpack.c.b16 %v473, %v471
        %v570 = vpack.c.b16 %v476, %v474
        %v571 = vpack.c.b16 %v477, %v475
        %v572 = vpack.c.b16 %v480, %v478
        %v573 = vpack.c.b16 %v481, %v479
        %v574 = vpack.c.b16 %v484, %v482
        %v575 = vpack.c.b16 %v485, %v483
        %v576 = vpack.c.b16 %v488, %v486
        %v577 = vpack.c.b16 %v489, %v487
        %v578 = vpack.c.b16 %v492, %v490
        %v579 = vpack.c.b16 %v493, %v491
        %v580 = vpack.c.b16 %v496, %v494
        %v581 = vpack.c.b16 %v497, %v495
        %v582 = vpack.c.b16 %v500, %v498
        %v583 = vpack.c.b16 %v501, %v499
        %v584 = vpack.c.b16 %v504, %v502
        %v585 = vpack.c.b16 %v505, %v503
        %v586 = vpack.c.b16 %v508, %v506
        %v587 = vpack.c.b16 %v509, %v507
        %v588 = vpack.c.b16 %v512, %v510
        %v589 = vpack.c.b16 %v513, %v511
        %v590 = vpack.c.b16 %v516, %v514
        %v591 = vpack.c.b16 %v517, %v515
        %v592 = vpack.c.b16 %v520, %v518
        %v593 = vpack.c.b16 %v521, %v519
        %v594 = vpack.c.b16 %v524, %v522
        %v595 = vpack.c.b16 %v525, %v523
        %v596 = vpack.c.b16 %v528, %v526
        %v597 = vpack.c.b16 %v529, %v527
        %v598 = vpack.c.b16 %v532, %v530
        %v599 = vpack.c.b16 %v533, %v531
        %v600 = vpack.c.b16 %v536, %v534
        %v601 = vpack.c.b16 %v537, %v535
        %666 = vmatprep.subr.bf16.mxu0 %v553
        %667 = vmatpush1.bf16.msra.mxu0 %v552
        %668 = vmatprep.subr.bf16.mxu0 %v551
        %669 = vmatpush1.bf16.msra.mxu0 %v550
        %670 = vmatprep.subr.bf16.mxu0 %v549
        %671 = vmatpush1.bf16.msra.mxu0 %v548
        %672 = vmatprep.subr.bf16.mxu0 %v547
        %673 = vmatpush1.bf16.msra.mxu0 %v546
        %674 = vmatprep.subr.bf16.mxu0 %v545
        %675 = vmatpush1.bf16.msra.mxu0 %v544
        %676 = vmatprep.subr.bf16.mxu0 %v543
        %677 = vmatpush1.bf16.msra.mxu0 %v542
        %678 = vmatprep.subr.bf16.mxu0 %v541
        %679 = vmatpush1.bf16.msra.mxu0 %v540
        %680 = vmatprep.subr.bf16.mxu0 %v539
        %681 = vmatpush1.bf16.msra.mxu0 %v538
        %682 = vmatprep.subr.bf16.mxu0 %v569
        %683 = vmatpush2.bf16.msra.mxu0 %v568
        %684 = vmatprep.subr.bf16.mxu0 %v567
        %685 = vmatpush2.bf16.msra.mxu0 %v566
        %686 = vmatprep.subr.bf16.mxu0 %v565
        %687 = vmatpush2.bf16.msra.mxu0 %v564
        %688 = vmatprep.subr.bf16.mxu0 %v563
        %689 = vmatpush2.bf16.msra.mxu0 %v562
        %690 = vmatprep.subr.bf16.mxu0 %v561
        %691 = vmatpush2.bf16.msra.mxu0 %v560
        %692 = vmatprep.subr.bf16.mxu0 %v559
        %693 = vmatpush2.bf16.msra.mxu0 %v558
        %694 = vmatprep.subr.bf16.mxu0 %v557
        %695 = vmatpush2.bf16.msra.mxu0 %v556
        %696 = vmatprep.subr.bf16.mxu0 %v555
        %697 = vmatpush2.bf16.msra.mxu0 %v554
        %698 = vmatprep.mubr.bf16.mxu0 %v339
        %699 = vmatmul.mubr.bf16.gmra.mxu0 %v338
        %v700 = vpop.f32.mrf.mxu0
        %v701 = vadd.f32 0.0, %v700
        %v702 = vpop.f32.mrf.mxu0
        %v703 = vadd.f32 0.0, %v702
        %v704 = vpop.f32.mrf.mxu0
        %v705 = vadd.f32 0.0, %v704
        %v706 = vpop.f32.mrf.mxu0
        %v707 = vadd.f32 0.0, %v706
        %708 = vdwg.mxu0
        %709 = vmatprep.subr.bf16.mxu0 %v585
        %710 = vmatpush1.bf16.msra.mxu0 %v584
        %711 = vmatprep.subr.bf16.mxu0 %v583
        %712 = vmatpush1.bf16.msra.mxu0 %v582
        %713 = vmatprep.subr.bf16.mxu0 %v581
        %714 = vmatpush1.bf16.msra.mxu0 %v580
        %715 = vmatprep.subr.bf16.mxu0 %v579
        %716 = vmatpush1.bf16.msra.mxu0 %v578
        %717 = vmatprep.subr.bf16.mxu0 %v577
        %718 = vmatpush1.bf16.msra.mxu0 %v576
        %719 = vmatprep.subr.bf16.mxu0 %v575
        %720 = vmatpush1.bf16.msra.mxu0 %v574
        %721 = vmatprep.subr.bf16.mxu0 %v573
        %722 = vmatpush1.bf16.msra.mxu0 %v572
        %723 = vmatprep.subr.bf16.mxu0 %v571
        %724 = vmatpush1.bf16.msra.mxu0 %v570
        %725 = vmatprep.subr.bf16.mxu0 %v601
        %726 = vmatpush2.bf16.msra.mxu0 %v600
        %727 = vmatprep.subr.bf16.mxu0 %v599
        %728 = vmatpush2.bf16.msra.mxu0 %v598
        %729 = vmatprep.subr.bf16.mxu0 %v597
        %730 = vmatpush2.bf16.msra.mxu0 %v596
        %731 = vmatprep.subr.bf16.mxu0 %v595
        %732 = vmatpush2.bf16.msra.mxu0 %v594
        %733 = vmatprep.subr.bf16.mxu0 %v593
        %734 = vmatpush2.bf16.msra.mxu0 %v592
        %735 = vmatprep.subr.bf16.mxu0 %v591
        %736 = vmatpush2.bf16.msra.mxu0 %v590
        %737 = vmatprep.subr.bf16.mxu0 %v589
        %738 = vmatpush2.bf16.msra.mxu0 %v588
        %739 = vmatprep.subr.bf16.mxu0 %v587
        %740 = vmatpush2.bf16.msra.mxu0 %v586
        %741 = vmatprep.mubr.bf16.mxu0 %v341
        %742 = vmatmul.mubr.bf16.gmra.mxu0 %v340
        %v743 = vpop.f32.mrf.mxu0
        %v744 = vadd.f32 %v701, %v743
        %v745 = vpop.f32.mrf.mxu0
        %v746 = vadd.f32 %v703, %v745
        %v747 = vpop.f32.mrf.mxu0
        %v748 = vadd.f32 %v705, %v747
        %v749 = vpop.f32.mrf.mxu0
        %v750 = vadd.f32 %v707, %v749
        %751 = vdwg.mxu0
        %v752 = vadd.f32 %v254, %v744
        %v753 = vadd.f32 %v255, %v746
        %v754 = vadd.f32 %v256, %v748
        %v755 = vadd.f32 %v257, %v750
        %756 = vst [vmem:[#allocation2] sm:$0xff] %v752
        %757 = vst [vmem:[#allocation2 + $0x8] sm:$0xff] %v753
        %758 = vst [vmem:[#allocation2 + $0x10] sm:$0xff] %v754
        %759 = vst [vmem:[#allocation2 + $0x18] sm:$0xff] %v755
        %p760 = scmp.eq.s32.totalorder %s20, 3
        // Predicated region
        $region56: #{discriminator_forward.7} parent=46 // pred_check
          %p761 = pneg %p760
        $region57: #{discriminator_forward.7} parent=46 // pred_check_branch
          %763 = sbr.rel (%p761) target = $region59
        $region58: #{discriminator_forward.7} parent=46 // pred_region
          %v764 = vld [vmem:[#allocation2] sm:$0xff]
          %v765 = vld [vmem:[#allocation2 + $0x8] sm:$0xff]
          %v766 = vld [vmem:[#allocation2 + $0x10] sm:$0xff]
          %v767 = vld [vmem:[#allocation2 + $0x18] sm:$0xff]
          %v768 = vadd.f32 %v764, %v766
          %v769 = vrot.slane %v768, 4
          %v770 = vadd.f32 %v768, %v769
          %v771 = vrot.slane %v770, 2
          %v772 = vadd.f32 %v770, %v771
          %v773 = vrot.slane %v772, 1
          %v774 = vadd.f32 %v772, %v773
          %v775 = vadd.f32 %v765, %v767
          %v776 = vrot.slane %v775, 4
          %v777 = vadd.f32 %v775, %v776
          %v778 = vrot.slane %v777, 2
          %v779 = vadd.f32 %v777, %v778
          %v780 = vrot.slane %v779, 1
          %v781 = vadd.f32 %v779, %v780
          %v782 = vrcp.pop 16.0
          %v783 = vmul.f32 %v774, %v782
          %v784 = vmul.f32 %v781, %v782
          %v785 = vsub.f32 %v764, %v783
          %v786 = vsub.f32 %v765, %v784
          %v787 = vsub.f32 %v766, %v783
          %v788 = vsub.f32 %v767, %v784
          %v789 = vmul.f32 %v785, %v785
          %v790 = vmul.f32 %v786, %v786
          %v791 = vmul.f32 %v787, %v787
          %v792 = vmul.f32 %v788, %v788
          %v793 = vadd.f32 %v789, %v791
          %v794 = vrot.slane %v793, 4
          %v795 = vadd.f32 %v793, %v794
          %v796 = vrot.slane %v795, 2
          %v797 = vadd.f32 %v795, %v796
          %v798 = vrot.slane %v797, 1
          %v799 = vadd.f32 %v797, %v798
          %v800 = vadd.f32 %v790, %v792
          %v801 = vrot.slane %v800, 4
          %v802 = vadd.f32 %v800, %v801
          %v803 = vrot.slane %v802, 2
          %v804 = vadd.f32 %v802, %v803
          %v805 = vrot.slane %v804, 1
          %v806 = vadd.f32 %v804, %v805
          %v807 = vmul.f32 %v799, %v782
          %v808 = vmul.f32 %v806, %v782
          %v809 = vadd.f32 %v807, 1e-05
          %v810 = vadd.f32 %v808, 1e-05
          %v811 = vrsqrt.pop %v809
          %v812 = vrsqrt.pop %v810
          %v813 = vmul.f32 %v785, %v811
          %v814 = vmul.f32 %v786, %v812
          %v815 = vmul.f32 %v787, %v811
          %v816 = vmul.f32 %v788, %v812
          %vm817 = vcmp.ge.f32.partialorder %v813, 0.0
          %vm818 = vcmp.ge.f32.partialorder %v814, 0.0
          %vm819 = vcmp.ge.f32.partialorder %v815, 0.0
          %vm820 = vcmp.ge.f32.partialorder %v816, 0.0
          %v821 = vmul.f32 %v813, 0.2
          %v822 = vmul.f32 %v814, 0.2
          %v823 = vmul.f32 %v815, 0.2
          %v824 = vmul.f32 %v816, 0.2
          %v825 = vsel %vm817, %v813, %v821
          %v826 = vsel %vm818, %v814, %v822
          %v827 = vsel %vm819, %v815, %v823
          %v828 = vsel %vm820, %v816, %v824
          %v829 = vpack.c.bf16 %v827, %v825
          %v830 = vpack.c.bf16 %v828, %v826
          %v833 = vunpack.c.l.b16 %v829
          %v834 = vunpack.c.l.b16 %v830
          %v835 = vunpack.c.h.b16 %v829
          %v836 = vunpack.c.h.b16 %v830
          %v837 = vpack.c.b16 %v834, %v833
          %v838 = vpack.c.b16 %v836, %v835
          %841 = vst [vmem:[%s244] sm:$0xff] %v837
          %842 = vst [vmem:[%s244 + $0x8] sm:$0xff] %v838
        $region59: #{discriminator_forward.7} parent=46 // pred_fallthru
          _
        %s843 = smul.u32 2, %s19
        %p844 = scmp.lt.s32.totalorder %s18, 1
        %s845 = scalar_select %p844, %s18, 1
        %p846 = scmp.lt.s32.totalorder %s843, 1
        %s847 = scalar_select %p846, %s843, 1
        %s848 = smul.addr %s845, 4
        %s849 = sadd.s32 %s847, %s848
        %s850 = smul.addr %s849, 4
        %s851 = scalar_lea.vmem %s2, %s850
        // Predicated region
        $region60: #{discriminator_forward.7} parent=46 // pred_check
          %p852 = pneg %p108
        $region61: #{discriminator_forward.7} parent=46 // pred_check_branch
          %854 = sbr.rel (%p852) target = $region63
        $region62: #{discriminator_forward.7} parent=46 // pred_region
          %s855 = smul.u32 2, %s19
        $region63: #{discriminator_forward.7} parent=46 // pred_fallthru
          _
      $region47: #{discriminator_forward.7} parent=5 // pred_fallthru
        _
      %p856 = scmp.le.s32.totalorder 2, %s8
      // Predicated region
      $region64: #{discriminator_forward.7} parent=5 // pred_check
        %p857 = pneg %p856
      $region65: #{discriminator_forward.7} parent=5 // pred_check_branch
        %859 = sbr.rel (%p857) target = $region67
      $region66: #{discriminator_forward.7} parent=5 // pred_region
        %s860 = ssub.s32 %s8, 2
        // Predicated region
        $region68: #{discriminator_forward.7} parent=66 // pred_check
          %p861 = pneg %p114
        $region69: #{discriminator_forward.7} parent=66 // pred_check_branch
          %863 = sbr.rel (%p861) target = $region71
        $region70: #{discriminator_forward.7} parent=66 // pred_region
          %s864 = smul.u32 2, %s22
          %p865 = scmp.lt.s32.totalorder %s21, 1
          %s866 = scalar_select %p865, %s21, 1
          %p867 = scmp.lt.s32.totalorder %s864, 1
          %s868 = scalar_select %p867, %s864, 1
          %s869 = smul.addr %s866, 4
          %s870 = sadd.s32 %s868, %s869
          %s871 = smul.addr %s870, 4
          %s872 = scalar_lea.vmem %s2, %s871
        $region71: #{discriminator_forward.7} parent=66 // pred_fallthru
          _
      $region67: #{discriminator_forward.7} parent=5 // pred_fallthru
        _
    $region6: #{discriminator_forward.7} parent=1 // loop_footer
      %s12 = sadd.s32 1, %s8
    $region7: #{discriminator_forward.7} parent=1 // loop_footer_branch
      %7 = sbr.rel target = $region3
    $region8: #{discriminator_forward.7} parent=1 // loop_exit
      _

// kernel: discriminator_forward.8
$region0: #{discriminator_forward.8}
  #allocation0 [shape = 'u32[]', space=smem, size = 0x4, offset = 0x4, fixed_abs, tag = 'smem constant byte address 0x4 - core index']
  #allocation1 [shape = 'u32[144,128]{1,0:T(1,128)}', space=vmem, size = 0x12000, scoped, tag = 'internal scratch']
  #allocation2 [shape = 'f32[9,256]{1,0:T(8,128)}', space=vmem, size = 0x4000, scoped, tag = 'scratch operand']
  %s0 = inlined_call_operand.vmem [shape: bf16[2,9,4096], index: 0, kind: input, shape index: {}]
  %s1 = inlined_call_operand.vmem [shape: bf16[4096,512], index: 1, kind: input, shape index: {}]
  %s2 = inlined_call_operand.vmem [shape: bf16[2,9,512], index: 2, kind: output, shape index: {}]
  %s3 = sld [smem:[#allocation0]]
  $region144: #{discriminator_forward.8} parent=0
    _
  %s5 = ssub.s32 1, %s3
  %s6 = scalar_select 0, %s5, %s3
  $region1: #{discriminator_forward.8} parent=0
    #allocation3 [shape = 'u8[32768]{0}', space=vmem, size = 0x8000, scoped, tag = 'input window, operand 0']
    #allocation4 [shape = 'u8[524288]{0}', space=vmem, size = 0x80000, scoped, tag = 'input window, operand 1']
    #allocation5 [shape = 'u8[16384]{0}', space=vmem, size = 0x4000, scoped, tag = 'output window, operand 0']
    loop: start=0, step=1, limit=34
    $region2: #{discriminator_forward.8} parent=1 // loop_pre_header
      _
    $region3: #{discriminator_forward.8} parent=1 // loop_header
      %s8 = sphi 0, %s12
      %p9 = scmp.ge.s32.totalorder %s8, 34
      %s15 = sphi 0, %s34
      %s16 = sphi 0, %s30
      %s17 = sphi 0, %s26
      %s18 = sphi 0, %s15
      %s19 = sphi 0, %s16
      %s20 = sphi 0, %s17
      %s21 = sphi 0, %s18
      %s22 = sphi 0, %s19
      %s23 = sphi 0, %s20
      %s39 = sphi 0, %s41
      %s42 = sphi 0, %s39
      %s43 = sphi 0, %s42
      %s59 = sphi 0, %s43
      %s67 = sphi 0, %s69
      %s70 = sphi 0, %s67
      %s71 = sphi 0, %s70
      %s87 = sphi 0, %s71
      %s95 = sphi 0, %s97
      %s98 = sphi 0, %s95
      %s99 = sphi 0, %s98
      %s115 = sphi 0, %s99
    $region4: #{discriminator_forward.8} parent=1 // loop_header_branch
      %11 = sbr.rel (%p9) target = $region8
    $region5: #{discriminator_forward.8} parent=1 // loop_body
      %s13 = ssub.s32 %s8, 1
      %s14 = ssub.s32 %s8, 2
      %s24 = sadd.s32 1, %s17
      %p25 = scmp.ge.s32.totalorder %s24, 8
      %s26 = scalar_select %p25, 0, %s24
      %s27 = sadd.s32 1, %s16
      %s28 = scalar_select %p25, %s27, %s16
      %p29 = scmp.ge.s32.totalorder %s28, 2
      %s30 = scalar_select %p29, 0, %s28
      %s31 = sadd.s32 1, %s15
      %s32 = scalar_select %p29, %s31, %s15
      %p33 = scmp.ge.s32.totalorder %s32, 2
      %s34 = scalar_select %p33, 0, %s32
      %s35 = ssub.s32 %s15, %s34
      %s36 = ssub.s32 %s17, %s26
      %s37 = sor.u32 %s35, %s36
      %p38 = scmp.eq.s32.totalorder %s37, 0
      %s40 = sadd.s32 %s39, 1
      %s41 = scalar_select %p38, %s39, %s40
      %p44 = pneg %p38
      %p45 = scmp.eq.s32.totalorder %s8, 31
      %p46 = por %p44, %p45
      %p47 = scmp.ne.s32.totalorder %s39, %s42
      %p48 = scmp.eq.s32.totalorder %s8, 0
      %p49 = por %p47, %p48
      %p50 = scmp.ne.s32.totalorder %s39, %s42
      %p51 = scmp.eq.s32.totalorder %s13, 31
      %p52 = por %p50, %p51
      %p53 = scmp.ne.s32.totalorder %s42, %s43
      %p54 = scmp.eq.s32.totalorder %s13, 0
      %p55 = por %p53, %p54
      %p56 = scmp.ne.s32.totalorder %s42, %s43
      %p57 = scmp.eq.s32.totalorder %s14, 31
      %p58 = por %p56, %p57
      %p60 = scmp.ne.s32.totalorder %s43, %s59
      %p61 = scmp.eq.s32.totalorder %s14, 0
      %p62 = por %p60, %p61
      %s63 = ssub.s32 %s17, %s26
      %s64 = ssub.s32 %s16, %s30
      %s65 = sor.u32 %s63, %s64
      %p66 = scmp.eq.s32.totalorder %s65, 0
      %s68 = sadd.s32 %s67, 1
      %s69 = scalar_select %p66, %s67, %s68
      %p72 = pneg %p66
      %p73 = scmp.eq.s32.totalorder %s8, 31
      %p74 = por %p72, %p73
      %p75 = scmp.ne.s32.totalorder %s67, %s70
      %p76 = scmp.eq.s32.totalorder %s8, 0
      %p77 = por %p75, %p76
      %p78 = scmp.ne.s32.totalorder %s67, %s70
      %p79 = scmp.eq.s32.totalorder %s13, 31
      %p80 = por %p78, %p79
      %p81 = scmp.ne.s32.totalorder %s70, %s71
      %p82 = scmp.eq.s32.totalorder %s13, 0
      %p83 = por %p81, %p82
      %p84 = scmp.ne.s32.totalorder %s70, %s71
      %p85 = scmp.eq.s32.totalorder %s14, 31
      %p86 = por %p84, %p85
      %p88 = scmp.ne.s32.totalorder %s71, %s87
      %p89 = scmp.eq.s32.totalorder %s14, 0
      %p90 = por %p88, %p89
      %s91 = ssub.s32 %s15, %s34
      %s92 = ssub.s32 %s16, %s30
      %s93 = sor.u32 %s91, %s92
      %p94 = scmp.eq.s32.totalorder %s93, 0
      %s96 = sadd.s32 %s95, 1
      %s97 = scalar_select %p94, %s95, %s96
      %p100 = pneg %p94
      %p101 = scmp.eq.s32.totalorder %s8, 31
      %p102 = por %p100, %p101
      %p103 = scmp.ne.s32.totalorder %s95, %s98
      %p104 = scmp.eq.s32.totalorder %s8, 0
      %p105 = por %p103, %p104
      %p106 = scmp.ne.s32.totalorder %s95, %s98
      %p107 = scmp.eq.s32.totalorder %s13, 31
      %p108 = por %p106, %p107
      %p109 = scmp.ne.s32.totalorder %s98, %s99
      %p110 = scmp.eq.s32.totalorder %s13, 0
      %p111 = por %p109, %p110
      %p112 = scmp.ne.s32.totalorder %s98, %s99
      %p113 = scmp.eq.s32.totalorder %s14, 31
      %p114 = por %p112, %p113
      %p116 = scmp.ne.s32.totalorder %s99, %s115
      %p117 = scmp.eq.s32.totalorder %s14, 0
      %p118 = por %p116, %p117
      %p119 = scmp.le.s32.totalorder 1, %s8
      %p120 = scmp.lt.s32.totalorder %s8, 33
      %p121 = pnand %p119, %p120
      %p122 = pneg %p121
      // Predicated region
      $region9: #{discriminator_forward.8} parent=5 // pred_check
        _
      $region10: #{discriminator_forward.8} parent=5 // pred_check_branch
        %124 = sbr.rel (%p121) target = $region12
      $region11: #{discriminator_forward.8} parent=5 // pred_region
        %s125 = ssub.s32 %s8, 1
      $region12: #{discriminator_forward.8} parent=5 // pred_fallthru
        _
      %p126 = scmp.lt.s32.totalorder %s8, 32
      // Predicated region
      $region13: #{discriminator_forward.8} parent=5 // pred_check
        %p127 = pneg %p126
      $region14: #{discriminator_forward.8} parent=5 // pred_check_branch
        %129 = sbr.rel (%p127) target = $region16
      $region15: #{discriminator_forward.8} parent=5 // pred_region
        // Predicated region
        $region17: #{discriminator_forward.8} parent=15 // pred_check
          %p130 = pneg %p49
        $region18: #{discriminator_forward.8} parent=15 // pred_check_branch
          %132 = sbr.rel (%p130) target = $region20
        $region19: #{discriminator_forward.8} parent=15 // pred_region
          %s133 = sand.u32 %s39, 1
          %s134 = sand.u32 %s39, 1
          %s135 = smul.addr %s134, 32
          %s136 = scalar_lea.vmem [#allocation3], %s135
          %s137 = smul.u32 4, %s17
          %s138 = smul.addr %s15, 64
          %s139 = sadd.s32 %s137, %s138
          %s140 = smul.addr %s139, 4
          %s141 = scalar_lea.vmem %s0, %s140
          // Predicated region
          $region21: #{discriminator_forward.8} parent=19 // pred_check
            _
          $region22: #{discriminator_forward.8} parent=19 // pred_check_branch
            %143 = sbr.rel (0) target = $region24
          $region23: #{discriminator_forward.8} parent=19 // pred_region
            // Predicated region
            $region25: #{discriminator_forward.8} parent=23 // pred_check
              _
            $region26: #{discriminator_forward.8} parent=23 // pred_check_branch
              %145 = sbr.rel (0) target = $region28
            $region27: #{discriminator_forward.8} parent=23 // pred_region
              loop: start=0, step=1, limit=1
              $region29: #{discriminator_forward.8} parent=27 // loop_pre_header
                _
              $region30: #{discriminator_forward.8} parent=27 // loop_header
                %s147 = sphi 0, %s151
                %p148 = scmp.ge.s32.totalorder %s147, 1
                %s152 = sphi %s141, %s141
                %s153 = sphi %s136, %s136
              $region31: #{discriminator_forward.8} parent=27 // loop_header_branch
                %150 = sbr.rel (%p148) target = $region35
              $region32: #{discriminator_forward.8} parent=27 // loop_body
                %v154 = vld [vmem:[%s152] sm:$0xff]
                %155 = vst [vmem:[%s153] sm:$0xff] %v154
                %v156 = vld [vmem:[%s152 + $0x8] sm:$0xff]
                %157 = vst [vmem:[%s153 + $0x8] sm:$0xff] %v156
                %v158 = vld [vmem:[%s152 + $0x80] sm:$0xff]
                %159 = vst [vmem:[%s153 + $0x10] sm:$0xff] %v158
                %v160 = vld [vmem:[%s152 + $0x88] sm:$0xff]
                %161 = vst [vmem:[%s153 + $0x18] sm:$0xff] %v160
              $region33: #{discriminator_forward.8} parent=27 // loop_footer
                %s151 = sadd.s32 1, %s147
              $region34: #{discriminator_forward.8} parent=27 // loop_footer_branch
                %146 = sbr.rel target = $region30
              $region35: #{discriminator_forward.8} parent=27 // loop_exit
                _
            $region28: #{discriminator_forward.8} parent=23 // pred_fallthru
              _
            // Predicated region
            $region36: #{discriminator_forward.8} parent=23 // pred_check
              _
            $region37: #{discriminator_forward.8} parent=23 // pred_check_branch
              %163 = sbr.rel target = $region39
            $region38: #{discriminator_forward.8} parent=23 // pred_region
              _
            $region39: #{discriminator_forward.8} parent=23 // pred_fallthru
              _
          $region24: #{discriminator_forward.8} parent=19 // pred_fallthru
            _
          %164 = vnop
        $region20: #{discriminator_forward.8} parent=15 // pred_fallthru
          _
        // Predicated region
        $region40: #{discriminator_forward.8} parent=15 // pred_check
          %p165 = pneg %p77
        $region41: #{discriminator_forward.8} parent=15 // pred_check_branch
          %167 = sbr.rel (%p165) target = $region43
        $region42: #{discriminator_forward.8} parent=15 // pred_region
          %s168 = sand.u32 %s67, 1
          %s169 = sand.u32 %s67, 1
          %s170 = smul.addr %s169, 512
          %s171 = scalar_lea.vmem [#allocation4], %s170
          %s172 = smul.u32 64, %s17
          %s173 = smul.u32 2, %s16
          %s174 = smul.addr %s172, 4
          %s175 = sadd.s32 %s173, %s174
          %s176 = smul.addr %s175, 4
          %s177 = scalar_lea.vmem %s1, %s176
          // Predicated region
          $region44: #{discriminator_forward.8} parent=42 // pred_check
            _
          $region45: #{discriminator_forward.8} parent=42 // pred_check_branch
            %179 = sbr.rel (0) target = $region47
          $region46: #{discriminator_forward.8} parent=42 // pred_region
            // Predicated region
            $region48: #{discriminator_forward.8} parent=46 // pred_check
              _
            $region49: #{discriminator_forward.8} parent=46 // pred_check_branch
              %181 = sbr.rel (0) target = $region51
            $region50: #{discriminator_forward.8} parent=46 // pred_region
              // Predicated region
              $region63: #{discriminator_forward.8} parent=50 // pred_check
                _
              $region64: #{discriminator_forward.8} parent=50 // pred_check_branch
                %323 = sbr.rel (0) target = $region66
              $region65: #{discriminator_forward.8} parent=50 // pred_region
                loop: start=0, step=1, limit=1
                $region67: #{discriminator_forward.8} parent=65 // loop_pre_header
                  _
                $region68: #{discriminator_forward.8} parent=65 // loop_header
                  %s325 = sphi 0, %s329
                  %p326 = scmp.ge.s32.totalorder %s325, 1
                  %s330 = sphi %s177, %s177
                  %s331 = sphi %s171, %s171
                $region69: #{discriminator_forward.8} parent=65 // loop_header_branch
                  %328 = sbr.rel (%p326) target = $region73
                $region70: #{discriminator_forward.8} parent=65 // loop_body
                  %v332 = vld [vmem:[%s330] sm:$0xff]
                  %333 = vst [vmem:[%s331] sm:$0xff] %v332
                  %v334 = vld [vmem:[%s330 + $0x10] sm:$0xff]
                  %335 = vst [vmem:[%s331 + $0x8] sm:$0xff] %v334
                  %v336 = vld [vmem:[%s330 + $0x20] sm:$0xff]
                  %337 = vst [vmem:[%s331 + $0x10] sm:$0xff] %v336
                  %v338 = vld [vmem:[%s330 + $0x30] sm:$0xff]
                  %339 = vst [vmem:[%s331 + $0x18] sm:$0xff] %v338
                  %v340 = vld [vmem:[%s330 + $0x40] sm:$0xff]
                  %341 = vst [vmem:[%s331 + $0x20] sm:$0xff] %v340
                  %v342 = vld [vmem:[%s330 + $0x50] sm:$0xff]
                  %343 = vst [vmem:[%s331 + $0x28] sm:$0xff] %v342
                  %v344 = vld [vmem:[%s330 + $0x60] sm:$0xff]
                  %345 = vst [vmem:[%s331 + $0x30] sm:$0xff] %v344
                  %v346 = vld [vmem:[%s330 + $0x70] sm:$0xff]
                  %347 = vst [vmem:[%s331 + $0x38] sm:$0xff] %v346
                  %v348 = vld [vmem:[%s330 + $0x80] sm:$0xff]
                  %349 = vst [vmem:[%s331 + $0x40] sm:$0xff] %v348
                  %v350 = vld [vmem:[%s330 + $0x90] sm:$0xff]
                  %351 = vst [vmem:[%s331 + $0x48] sm:$0xff] %v350
                  %v352 = vld [vmem:[%s330 + $0xa0] sm:$0xff]
                  %353 = vst [vmem:[%s331 + $0x50] sm:$0xff] %v352
                  %v354 = vld [vmem:[%s330 + $0xb0] sm:$0xff]
                  %355 = vst [vmem:[%s331 + $0x58] sm:$0xff] %v354
                  %v356 = vld [vmem:[%s330 + $0xc0] sm:$0xff]
                  %357 = vst [vmem:[%s331 + $0x60] sm:$0xff] %v356
                  %v358 = vld [vmem:[%s330 + $0xd0] sm:$0xff]
                  %359 = vst [vmem:[%s331 + $0x68] sm:$0xff] %v358
                  %v360 = vld [vmem:[%s330 + $0xe0] sm:$0xff]
                  %361 = vst [vmem:[%s331 + $0x70] sm:$0xff] %v360
                  %v362 = vld [vmem:[%s330 + $0xf0] sm:$0xff]
                  %363 = vst [vmem:[%s331 + $0x78] sm:$0xff] %v362
                  %v364 = vld [vmem:[%s330 + $0x100] sm:$0xff]
                  %365 = vst [vmem:[%s331 + $0x80] sm:$0xff] %v364
                  %v366 = vld [vmem:[%s330 + $0x110] sm:$0xff]
                  %367 = vst [vmem:[%s331 + $0x88] sm:$0xff] %v366
                  %v368 = vld [vmem:[%s330 + $0x120] sm:$0xff]
                  %369 = vst [vmem:[%s331 + $0x90] sm:$0xff] %v368
                  %v370 = vld [vmem:[%s330 + $0x130] sm:$0xff]
                  %371 = vst [vmem:[%s331 + $0x98] sm:$0xff] %v370
                  %v372 = vld [vmem:[%s330 + $0x140] sm:$0xff]
                  %373 = vst [vmem:[%s331 + $0xa0] sm:$0xff] %v372
                  %v374 = vld [vmem:[%s330 + $0x150] sm:$0xff]
                  %375 = vst [vmem:[%s331 + $0xa8] sm:$0xff] %v374
                  %v376 = vld [vmem:[%s330 + $0x160] sm:$0xff]
                  %377 = vst [vmem:[%s331 + $0xb0] sm:$0xff] %v376
                  %v378 = vld [vmem:[%s330 + $0x170] sm:$0xff]
                  %379 = vst [vmem:[%s331 + $0xb8] sm:$0xff] %v378
                  %v380 = vld [vmem:[%s330 + $0x180] sm:$0xff]
                  %381 = vst [vmem:[%s331 + $0xc0] sm:$0xff] %v380
                  %v382 = vld [vmem:[%s330 + $0x190] sm:$0xff]
                  %383 = vst [vmem:[%s331 + $0xc8] sm:$0xff] %v382
                  %v384 = vld [vmem:[%s330 + $0x1a0] sm:$0xff]
                  %385 = vst [vmem:[%s331 + $0xd0] sm:$0xff] %v384
                  %v386 = vld [vmem:[%s330 + $0x1b0] sm:$0xff]
                  %387 = vst [vmem:[%s331 + $0xd8] sm:$0xff] %v386
                  %v388 = vld [vmem:[%s330 + $0x1c0] sm:$0xff]
                  %389 = vst [vmem:[%s331 + $0xe0] sm:$0xff] %v388
                  %v390 = vld [vmem:[%s330 + $0x1d0] sm:$0xff]
                  %391 = vst [vmem:[%s331 + $0xe8] sm:$0xff] %v390
                  %v392 = vld [vmem:[%s330 + $0x1e0] sm:$0xff]
                  %393 = vst [vmem:[%s331 + $0xf0] sm:$0xff] %v392
                  %v394 = vld [vmem:[%s330 + $0x1f0] sm:$0xff]
                  %395 = vst [vmem:[%s331 + $0xf8] sm:$0xff] %v394
                  %v396 = vld [vmem:[%s330 + $0x200] sm:$0xff]
                  %397 = vst [vmem:[%s331 + $0x100] sm:$0xff] %v396
                  %v398 = vld [vmem:[%s330 + $0x210] sm:$0xff]
                  %399 = vst [vmem:[%s331 + $0x108] sm:$0xff] %v398
                  %v400 = vld [vmem:[%s330 + $0x220] sm:$0xff]
                  %401 = vst [vmem:[%s331 + $0x110] sm:$0xff] %v400
                  %v402 = vld [vmem:[%s330 + $0x230] sm:$0xff]
                  %403 = vst [vmem:[%s331 + $0x118] sm:$0xff] %v402
                  %v404 = vld [vmem:[%s330 + $0x240] sm:$0xff]
                  %405 = vst [vmem:[%s331 + $0x120] sm:$0xff] %v404
                  %v406 = vld [vmem:[%s330 + $0x250] sm:$0xff]
                  %407 = vst [vmem:[%s331 + $0x128] sm:$0xff] %v406
                  %v408 = vld [vmem:[%s330 + $0x260] sm:$0xff]
                  %409 = vst [vmem:[%s331 + $0x130] sm:$0xff] %v408
                  %v410 = vld [vmem:[%s330 + $0x270] sm:$0xff]
                  %411 = vst [vmem:[%s331 + $0x138] sm:$0xff] %v410
                  %v412 = vld [vmem:[%s330 + $0x280] sm:$0xff]
                  %413 = vst [vmem:[%s331 + $0x140] sm:$0xff] %v412
                  %v414 = vld [vmem:[%s330 + $0x290] sm:$0xff]
                  %415 = vst [vmem:[%s331 + $0x148] sm:$0xff] %v414
                  %v416 = vld [vmem:[%s330 + $0x2a0] sm:$0xff]
                  %417 = vst [vmem:[%s331 + $0x150] sm:$0xff] %v416
                  %v418 = vld [vmem:[%s330 + $0x2b0] sm:$0xff]
                  %419 = vst [vmem:[%s331 + $0x158] sm:$0xff] %v418
                  %v420 = vld [vmem:[%s330 + $0x2c0] sm:$0xff]
                  %421 = vst [vmem:[%s331 + $0x160] sm:$0xff] %v420
                  %v422 = vld [vmem:[%s330 + $0x2d0] sm:$0xff]
                  %423 = vst [vmem:[%s331 + $0x168] sm:$0xff] %v422
                  %v424 = vld [vmem:[%s330 + $0x2e0] sm:$0xff]
                  %425 = vst [vmem:[%s331 + $0x170] sm:$0xff] %v424
                  %v426 = vld [vmem:[%s330 + $0x2f0] sm:$0xff]
                  %427 = vst [vmem:[%s331 + $0x178] sm:$0xff] %v426
                  %v428 = vld [vmem:[%s330 + $0x300] sm:$0xff]
                  %429 = vst [vmem:[%s331 + $0x180] sm:$0xff] %v428
                  %v430 = vld [vmem:[%s330 + $0x310] sm:$0xff]
                  %431 = vst [vmem:[%s331 + $0x188] sm:$0xff] %v430
                  %v432 = vld [vmem:[%s330 + $0x320] sm:$0xff]
                  %433 = vst [vmem:[%s331 + $0x190] sm:$0xff] %v432
                  %v434 = vld [vmem:[%s330 + $0x330] sm:$0xff]
                  %435 = vst [vmem:[%s331 + $0x198] sm:$0xff] %v434
                  %v436 = vld [vmem:[%s330 + $0x340] sm:$0xff]
                  %437 = vst [vmem:[%s331 + $0x1a0] sm:$0xff] %v436
                  %v438 = vld [vmem:[%s330 + $0x350] sm:$0xff]
                  %439 = vst [vmem:[%s331 + $0x1a8] sm:$0xff] %v438
                  %v440 = vld [vmem:[%s330 + $0x360] sm:$0xff]
                  %441 = vst [vmem:[%s331 + $0x1b0] sm:$0xff] %v440
                  %v442 = vld [vmem:[%s330 + $0x370] sm:$0xff]
                  %443 = vst [vmem:[%s331 + $0x1b8] sm:$0xff] %v442
                  %v444 = vld [vmem:[%s330 + $0x380] sm:$0xff]
                  %445 = vst [vmem:[%s331 + $0x1c0] sm:$0xff] %v444
                  %v446 = vld [vmem:[%s330 + $0x390] sm:$0xff]
                  %447 = vst [vmem:[%s331 + $0x1c8] sm:$0xff] %v446
                  %v448 = vld [vmem:[%s330 + $0x3a0] sm:$0xff]
                  %449 = vst [vmem:[%s331 + $0x1d0] sm:$0xff] %v448
                  %v450 = vld [vmem:[%s330 + $0x3b0] sm:$0xff]
                  %451 = vst [vmem:[%s331 + $0x1d8] sm:$0xff] %v450
                  %v452 = vld [vmem:[%s330 + $0x3c0] sm:$0xff]
                  %453 = vst [vmem:[%s331 + $0x1e0] sm:$0xff] %v452
                  %v454 = vld [vmem:[%s330 + $0x3d0] sm:$0xff]
                  %455 = vst [vmem:[%s331 + $0x1e8] sm:$0xff] %v454
                  %v456 = vld [vmem:[%s330 + $0x3e0] sm:$0xff]
                  %457 = vst [vmem:[%s331 + $0x1f0] sm:$0xff] %v456
                  %v458 = vld [vmem:[%s330 + $0x3f0] sm:$0xff]
                  %459 = vst [vmem:[%s331 + $0x1f8] sm:$0xff] %v458
                $region71: #{discriminator_forward.8} parent=65 // loop_footer
                  %s329 = sadd.s32 1, %s325
                $region72: #{discriminator_forward.8} parent=65 // loop_footer_branch
                  %324 = sbr.rel target = $region68
                $region73: #{discriminator_forward.8} parent=65 // loop_exit
                  _
              $region66: #{discriminator_forward.8} parent=50 // pred_fallthru
                _
              // Predicated region
              $region74: #{discriminator_forward.8} parent=50 // pred_check
                _
              $region75: #{discriminator_forward.8} parent=50 // pred_check_branch
                %461 = sbr.rel target = $region77
              $region76: #{discriminator_forward.8} parent=50 // pred_region
                _
              $region77: #{discriminator_forward.8} parent=50 // pred_fallthru
                _
            $region51: #{discriminator_forward.8} parent=46 // pred_fallthru
              _
            // Predicated region
            $region52: #{discriminator_forward.8} parent=46 // pred_check
              _
            $region53: #{discriminator_forward.8} parent=46 // pred_check_branch
              %183 = sbr.rel target = $region55
            $region54: #{discriminator_forward.8} parent=46 // pred_region
              %s185 = ssub.s32 256, 1
              loop: start=0, step=1, limit=1
              $region56: #{discriminator_forward.8} parent=54 // loop_pre_header
                _
              $region57: #{discriminator_forward.8} parent=54 // loop_header
                %s187 = sphi 0, %s191
                %p188 = scmp.ge.s32.totalorder %s187, 1
                %s192 = sphi %s177, %s177
                %s193 = sphi %s171, %s171
              $region58: #{discriminator_forward.8} parent=54 // loop_header_branch
                %190 = sbr.rel (%p188) target = $region62
              $region59: #{discriminator_forward.8} parent=54 // loop_body
                %v194 = vld [vmem:[%s192] sm:%s185]
                %195 = vst [vmem:[%s193] sm:%s185] %v194
                %v196 = vld [vmem:[%s192 + $0x10] sm:%s185]
                %197 = vst [vmem:[%s193 + $0x8] sm:%s185] %v196
                %v198 = vld [vmem:[%s192 + $0x20] sm:%s185]
                %199 = vst [vmem:[%s193 + $0x10] sm:%s185] %v198
                %v200 = vld [vmem:[%s192 + $0x30] sm:%s185]
                %201 = vst [vmem:[%s193 + $0x18] sm:%s185] %v200
                %v202 = vld [vmem:[%s192 + $0x40] sm:%s185]
                %203 = vst [vmem:[%s193 + $0x20] sm:%s185] %v202
                %v204 = vld [vmem:[%s192 + $0x50] sm:%s185]
                %205 = vst [vmem:[%s193 + $0x28] sm:%s185] %v204
                %v206 = vld [vmem:[%s192 + $0x60] sm:%s185]
                %207 = vst [vmem:[%s193 + $0x30] sm:%s185] %v206
                %v208 = vld [vmem:[%s192 + $0x70] sm:%s185]
                %209 = vst [vmem:[%s193 + $0x38] sm:%s185] %v208
                %v210 = vld [vmem:[%s192 + $0x80] sm:%s185]
                %211 = vst [vmem:[%s193 + $0x40] sm:%s185] %v210
                %v212 = vld [vmem:[%s192 + $0x90] sm:%s185]
                %213 = vst [vmem:[%s193 + $0x48] sm:%s185] %v212
                %v214 = vld [vmem:[%s192 + $0xa0] sm:%s185]
                %215 = vst [vmem:[%s193 + $0x50] sm:%s185] %v214
                %v216 = vld [vmem:[%s192 + $0xb0] sm:%s185]
                %217 = vst [vmem:[%s193 + $0x58] sm:%s185] %v216
                %v218 = vld [vmem:[%s192 + $0xc0] sm:%s185]
                %219 = vst [vmem:[%s193 + $0x60] sm:%s185] %v218
                %v220 = vld [vmem:[%s192 + $0xd0] sm:%s185]
                %221 = vst [vmem:[%s193 + $0x68] sm:%s185] %v220
                %v222 = vld [vmem:[%s192 + $0xe0] sm:%s185]
                %223 = vst [vmem:[%s193 + $0x70] sm:%s185] %v222
                %v224 = vld [vmem:[%s192 + $0xf0] sm:%s185]
                %225 = vst [vmem:[%s193 + $0x78] sm:%s185] %v224
                %v226 = vld [vmem:[%s192 + $0x100] sm:%s185]
                %227 = vst [vmem:[%s193 + $0x80] sm:%s185] %v226
                %v228 = vld [vmem:[%s192 + $0x110] sm:%s185]
                %229 = vst [vmem:[%s193 + $0x88] sm:%s185] %v228
                %v230 = vld [vmem:[%s192 + $0x120] sm:%s185]
                %231 = vst [vmem:[%s193 + $0x90] sm:%s185] %v230
                %v232 = vld [vmem:[%s192 + $0x130] sm:%s185]
                %233 = vst [vmem:[%s193 + $0x98] sm:%s185] %v232
                %v234 = vld [vmem:[%s192 + $0x140] sm:%s185]
                %235 = vst [vmem:[%s193 + $0xa0] sm:%s185] %v234
                %v236 = vld [vmem:[%s192 + $0x150] sm:%s185]
                %237 = vst [vmem:[%s193 + $0xa8] sm:%s185] %v236
                %v238 = vld [vmem:[%s192 + $0x160] sm:%s185]
                %239 = vst [vmem:[%s193 + $0xb0] sm:%s185] %v238
                %v240 = vld [vmem:[%s192 + $0x170] sm:%s185]
                %241 = vst [vmem:[%s193 + $0xb8] sm:%s185] %v240
                %v242 = vld [vmem:[%s192 + $0x180] sm:%s185]
                %243 = vst [vmem:[%s193 + $0xc0] sm:%s185] %v242
                %v244 = vld [vmem:[%s192 + $0x190] sm:%s185]
                %245 = vst [vmem:[%s193 + $0xc8] sm:%s185] %v244
                %v246 = vld [vmem:[%s192 + $0x1a0] sm:%s185]
                %247 = vst [vmem:[%s193 + $0xd0] sm:%s185] %v246
                %v248 = vld [vmem:[%s192 + $0x1b0] sm:%s185]
                %249 = vst [vmem:[%s193 + $0xd8] sm:%s185] %v248
                %v250 = vld [vmem:[%s192 + $0x1c0] sm:%s185]
                %251 = vst [vmem:[%s193 + $0xe0] sm:%s185] %v250
                %v252 = vld [vmem:[%s192 + $0x1d0] sm:%s185]
                %253 = vst [vmem:[%s193 + $0xe8] sm:%s185] %v252
                %v254 = vld [vmem:[%s192 + $0x1e0] sm:%s185]
                %255 = vst [vmem:[%s193 + $0xf0] sm:%s185] %v254
                %v256 = vld [vmem:[%s192 + $0x1f0] sm:%s185]
                %257 = vst [vmem:[%s193 + $0xf8] sm:%s185] %v256
                %v258 = vld [vmem:[%s192 + $0x200] sm:%s185]
                %259 = vst [vmem:[%s193 + $0x100] sm:%s185] %v258
                %v260 = vld [vmem:[%s192 + $0x210] sm:%s185]
                %261 = vst [vmem:[%s193 + $0x108] sm:%s185] %v260
                %v262 = vld [vmem:[%s192 + $0x220] sm:%s185]
                %263 = vst [vmem:[%s193 + $0x110] sm:%s185] %v262
                %v264 = vld [vmem:[%s192 + $0x230] sm:%s185]
                %265 = vst [vmem:[%s193 + $0x118] sm:%s185] %v264
                %v266 = vld [vmem:[%s192 + $0x240] sm:%s185]
                %267 = vst [vmem:[%s193 + $0x120] sm:%s185] %v266
                %v268 = vld [vmem:[%s192 + $0x250] sm:%s185]
                %269 = vst [vmem:[%s193 + $0x128] sm:%s185] %v268
                %v270 = vld [vmem:[%s192 + $0x260] sm:%s185]
                %271 = vst [vmem:[%s193 + $0x130] sm:%s185] %v270
                %v272 = vld [vmem:[%s192 + $0x270] sm:%s185]
                %273 = vst [vmem:[%s193 + $0x138] sm:%s185] %v272
                %v274 = vld [vmem:[%s192 + $0x280] sm:%s185]
                %275 = vst [vmem:[%s193 + $0x140] sm:%s185] %v274
                %v276 = vld [vmem:[%s192 + $0x290] sm:%s185]
                %277 = vst [vmem:[%s193 + $0x148] sm:%s185] %v276
                %v278 = vld [vmem:[%s192 + $0x2a0] sm:%s185]
                %279 = vst [vmem:[%s193 + $0x150] sm:%s185] %v278
                %v280 = vld [vmem:[%s192 + $0x2b0] sm:%s185]
                %281 = vst [vmem:[%s193 + $0x158] sm:%s185] %v280
                %v282 = vld [vmem:[%s192 + $0x2c0] sm:%s185]
                %283 = vst [vmem:[%s193 + $0x160] sm:%s185] %v282
                %v284 = vld [vmem:[%s192 + $0x2d0] sm:%s185]
                %285 = vst [vmem:[%s193 + $0x168] sm:%s185] %v284
                %v286 = vld [vmem:[%s192 + $0x2e0] sm:%s185]
                %287 = vst [vmem:[%s193 + $0x170] sm:%s185] %v286
                %v288 = vld [vmem:[%s192 + $0x2f0] sm:%s185]
                %289 = vst [vmem:[%s193 + $0x178] sm:%s185] %v288
                %v290 = vld [vmem:[%s192 + $0x300] sm:%s185]
                %291 = vst [vmem:[%s193 + $0x180] sm:%s185] %v290
                %v292 = vld [vmem:[%s192 + $0x310] sm:%s185]
                %293 = vst [vmem:[%s193 + $0x188] sm:%s185] %v292
                %v294 = vld [vmem:[%s192 + $0x320] sm:%s185]
                %295 = vst [vmem:[%s193 + $0x190] sm:%s185] %v294
                %v296 = vld [vmem:[%s192 + $0x330] sm:%s185]
                %297 = vst [vmem:[%s193 + $0x198] sm:%s185] %v296
                %v298 = vld [vmem:[%s192 + $0x340] sm:%s185]
                %299 = vst [vmem:[%s193 + $0x1a0] sm:%s185] %v298
                %v300 = vld [vmem:[%s192 + $0x350] sm:%s185]
                %301 = vst [vmem:[%s193 + $0x1a8] sm:%s185] %v300
                %v302 = vld [vmem:[%s192 + $0x360] sm:%s185]
                %303 = vst [vmem:[%s193 + $0x1b0] sm:%s185] %v302
                %v304 = vld [vmem:[%s192 + $0x370] sm:%s185]
                %305 = vst [vmem:[%s193 + $0x1b8] sm:%s185] %v304
                %v306 = vld [vmem:[%s192 + $0x380] sm:%s185]
                %307 = vst [vmem:[%s193 + $0x1c0] sm:%s185] %v306
                %v308 = vld [vmem:[%s192 + $0x390] sm:%s185]
                %309 = vst [vmem:[%s193 + $0x1c8] sm:%s185] %v308
                %v310 = vld [vmem:[%s192 + $0x3a0] sm:%s185]
                %311 = vst [vmem:[%s193 + $0x1d0] sm:%s185] %v310
                %v312 = vld [vmem:[%s192 + $0x3b0] sm:%s185]
                %313 = vst [vmem:[%s193 + $0x1d8] sm:%s185] %v312
                %v314 = vld [vmem:[%s192 + $0x3c0] sm:%s185]
                %315 = vst [vmem:[%s193 + $0x1e0] sm:%s185] %v314
                %v316 = vld [vmem:[%s192 + $0x3d0] sm:%s185]
                %317 = vst [vmem:[%s193 + $0x1e8] sm:%s185] %v316
                %v318 = vld [vmem:[%s192 + $0x3e0] sm:%s185]
                %319 = vst [vmem:[%s193 + $0x1f0] sm:%s185] %v318
                %v320 = vld [vmem:[%s192 + $0x3f0] sm:%s185]
                %321 = vst [vmem:[%s193 + $0x1f8] sm:%s185] %v320
              $region60: #{discriminator_forward.8} parent=54 // loop_footer
                %s191 = sadd.s32 1, %s187
              $region61: #{discriminator_forward.8} parent=54 // loop_footer_branch
                %186 = sbr.rel target = $region57
              $region62: #{discriminator_forward.8} parent=54 // loop_exit
                _
            $region55: #{discriminator_forward.8} parent=46 // pred_fallthru
              _
          $region47: #{discriminator_forward.8} parent=42 // pred_fallthru
            _
          %462 = vnop
        $region43: #{discriminator_forward.8} parent=15 // pred_fallthru
          _
      $region16: #{discriminator_forward.8} parent=5 // pred_fallthru
        _
      %p463 = scmp.le.s32.totalorder 1, %s8
      %p464 = scmp.lt.s32.totalorder %s8, 33
      %p465 = pnand %p463, %p464
      %p466 = pneg %p465
      // Predicated region
      $region78: #{discriminator_forward.8} parent=5 // pred_check
        _
      $region79: #{discriminator_forward.8} parent=5 // pred_check_branch
        %468 = sbr.rel (%p465) target = $region81
      $region80: #{discriminator_forward.8} parent=5 // pred_region
        %s469 = ssub.s32 %s8, 1
        %s470 = sand.u32 %s42, 1
        %s471 = sand.u32 %s42, 1
        %s472 = smul.addr %s471, 32
        %s473 = scalar_lea.vmem [#allocation3], %s472
        // Predicated region
        $region82: #{discriminator_forward.8} parent=80 // pred_check
          %p474 = pneg %p55
        $region83: #{discriminator_forward.8} parent=80 // pred_check_branch
          %476 = sbr.rel (%p474) target = $region85
        $region84: #{discriminator_forward.8} parent=80 // pred_region
          _
        $region85: #{discriminator_forward.8} parent=80 // pred_fallthru
          _
        %s477 = sand.u32 %s70, 1
        %s478 = sand.u32 %s70, 1
        %s479 = smul.addr %s478, 512
        %s480 = scalar_lea.vmem [#allocation4], %s479
        // Predicated region
        $region86: #{discriminator_forward.8} parent=80 // pred_check
          %p481 = pneg %p83
        $region87: #{discriminator_forward.8} parent=80 // pred_check_branch
          %483 = sbr.rel (%p481) target = $region89
        $region88: #{discriminator_forward.8} parent=80 // pred_region
          _
        $region89: #{discriminator_forward.8} parent=80 // pred_fallthru
          _
        %s484 = sand.u32 %s42, 1
        %s485 = sand.u32 %s42, 1
        %s486 = smul.addr %s485, 32
        %s487 = scalar_lea.vmem [#allocation3], %s486
        %p488 = pneg %p55
        %p489 = pneg %p52
        %s490 = sand.u32 %s70, 1
        %s491 = sand.u32 %s70, 1
        %s492 = smul.addr %s491, 512
        %s493 = scalar_lea.vmem [#allocation4], %s492
        %p494 = pneg %p83
        %p495 = pneg %p80
        %p496 = pneg %p111
        %p497 = pneg %p108
        %s498 = sand.u32 %s98, 1
        %s499 = sand.u32 %s98, 1
        %s500 = smul.addr %s499, 16
        %s501 = scalar_lea.vmem [#allocation5], %s500
        %s502 = smul.u32 4, %s20
        %s503 = smul.u32 64, %s20
        %s504 = smul.u32 2, %s19
        %s505 = smul.u32 2, %s19
        %p506 = scmp.eq.s32.totalorder %s20, 0
        // Predicated region
        $region90: #{discriminator_forward.8} parent=80 // pred_check
          %p507 = pneg %p506
        $region91: #{discriminator_forward.8} parent=80 // pred_check_branch
          %509 = sbr.rel (%p507) target = $region93
        $region92: #{discriminator_forward.8} parent=80 // pred_region
          %510 = vst [vmem:[#allocation2] sm:$0xff] 0.0
          %511 = vst [vmem:[#allocation2 + $0x8] sm:$0xff] 0.0
          %512 = vst [vmem:[#allocation2 + $0x10] sm:$0x1] 0.0
          %513 = vst [vmem:[#allocation2 + $0x18] sm:$0x1] 0.0
        $region93: #{discriminator_forward.8} parent=80 // pred_fallthru
          _
        %v514 = vld [vmem:[#allocation2] sm:$0xff]
        %v515 = vld [vmem:[#allocation2 + $0x8] sm:$0xff]
        %v516 = vld [vmem:[#allocation2 + $0x10] sm:$0x1]
        %v517 = vld [vmem:[#allocation2 + $0x18] sm:$0x1]
        %v518 = vld [vmem:[%s473] sm:$0xff]
        %v519 = vld [vmem:[%s473 + $0x8] sm:$0xff]
        %v520 = vld [vmem:[%s473 + $0x10] sm:$0x11]
        %v521 = vld [vmem:[%s473 + $0x18] sm:$0x11]
        %v522 = vld [vmem:[%s480] sm:$0xff]
        %v523 = vld [vmem:[%s480 + $0x8] sm:$0xff]
        %v524 = vld [vmem:[%s480 + $0x10] sm:$0xff]
        %v525 = vld [vmem:[%s480 + $0x18] sm:$0xff]
        %v526 = vld [vmem:[%s480 + $0x20] sm:$0xff]
        %v527 = vld [vmem:[%s480 + $0x28] sm:$0xff]
        %v528 = vld [vmem:[%s480 + $0x30] sm:$0xff]
        %v529 = vld [vmem:[%s480 + $0x38] sm:$0xff]
        %v530 = vld [vmem:[%s480 + $0x40] sm:$0xff]
        %v531 = vld [vmem:[%s480 + $0x48] sm:$0xff]
        %v532 = vld [vmem:[%s480 + $0x50] sm:$0xff]
        %v533 = vld [vmem:[%s480 + $0x58] sm:$0xff]
        %v534 = vld [vmem:[%s480 + $0x60] sm:$0xff]
        %v535 = vld [vmem:[%s480 + $0x68] sm:$0xff]
        %v536 = vld [vmem:[%s480 + $0x70] sm:$0xff]
        %v537 = vld [vmem:[%s480 + $0x78] sm:$0xff]
        %v538 = vld [vmem:[%s480 + $0x80] sm:$0xff]
        %v539 = vld [vmem:[%s480 + $0x88] sm:$0xff]
        %v540 = vld [vmem:[%s480 + $0x90] sm:$0xff]
        %v541 = vld [vmem:[%s480 + $0x98] sm:$0xff]
        %v542 = vld [vmem:[%s480 + $0xa0] sm:$0xff]
        %v543 = vld [vmem:[%s480 + $0xa8] sm:$0xff]
        %v544 = vld [vmem:[%s480 + $0xb0] sm:$0xff]
        %v545 = vld [vmem:[%s480 + $0xb8] sm:$0xff]
        %v546 = vld [vmem:[%s480 + $0xc0] sm:$0xff]
        %v547 = vld [vmem:[%s480 + $0xc8] sm:$0xff]
        %v548 = vld [vmem:[%s480 + $0xd0] sm:$0xff]
        %v549 = vld [vmem:[%s480 + $0xd8] sm:$0xff]
        %v550 = vld [vmem:[%s480 + $0xe0] sm:$0xff]
        %v551 = vld [vmem:[%s480 + $0xe8] sm:$0xff]
        %v552 = vld [vmem:[%s480 + $0xf0] sm:$0xff]
        %v553 = vld [vmem:[%s480 + $0xf8] sm:$0xff]
        %v554 = vld [vmem:[%s480 + $0x100] sm:$0xff]
        %v555 = vld [vmem:[%s480 + $0x108] sm:$0xff]
        %v556 = vld [vmem:[%s480 + $0x110] sm:$0xff]
        %v557 = vld [vmem:[%s480 + $0x118] sm:$0xff]
        %v558 = vld [vmem:[%s480 + $0x120] sm:$0xff]
        %v559 = vld [vmem:[%s480 + $0x128] sm:$0xff]
        %v560 = vld [vmem:[%s480 + $0x130] sm:$0xff]
        %v561 = vld [vmem:[%s480 + $0x138] sm:$0xff]
        %v562 = vld [vmem:[%s480 + $0x140] sm:$0xff]
        %v563 = vld [vmem:[%s480 + $0x148] sm:$0xff]
        %v564 = vld [vmem:[%s480 + $0x150] sm:$0xff]
        %v565 = vld [vmem:[%s480 + $0x158] sm:$0xff]
        %v566 = vld [vmem:[%s480 + $0x160] sm:$0xff]
        %v567 = vld [vmem:[%s480 + $0x168] sm:$0xff]
        %v568 = vld [vmem:[%s480 + $0x170] sm:$0xff]
        %v569 = vld [vmem:[%s480 + $0x178] sm:$0xff]
        %v570 = vld [vmem:[%s480 + $0x180] sm:$0xff]
        %v571 = vld [vmem:[%s480 + $0x188] sm:$0xff]
        %v572 = vld [vmem:[%s480 + $0x190] sm:$0xff]
        %v573 = vld [vmem:[%s480 + $0x198] sm:$0xff]
        %v574 = vld [vmem:[%s480 + $0x1a0] sm:$0xff]
        %v575 = vld [vmem:[%s480 + $0x1a8] sm:$0xff]
        %v576 = vld [vmem:[%s480 + $0x1b0] sm:$0xff]
        %v577 = vld [vmem:[%s480 + $0x1b8] sm:$0xff]
        %v578 = vld [vmem:[%s480 + $0x1c0] sm:$0xff]
        %v579 = vld [vmem:[%s480 + $0x1c8] sm:$0xff]
        %v580 = vld [vmem:[%s480 + $0x1d0] sm:$0xff]
        %v581 = vld [vmem:[%s480 + $0x1d8] sm:$0xff]
        %v582 = vld [vmem:[%s480 + $0x1e0] sm:$0xff]
        %v583 = vld [vmem:[%s480 + $0x1e8] sm:$0xff]
        %v584 = vld [vmem:[%s480 + $0x1f0] sm:$0xff]
        %v585 = vld [vmem:[%s480 + $0x1f8] sm:$0xff]
        %v590 = vunpack.c.l.b16 %v518
        %v591 = vunpack.c.h.b16 %v518
        %v592 = vunpack.c.l.b16 %v519
        %v593 = vunpack.c.h.b16 %v519
        %v594 = vunpack.c.l.b16 %v520
        %v595 = vunpack.c.h.b16 %v520
        %v596 = vunpack.c.l.b16 %v521
        %v597 = vunpack.c.h.b16 %v521
        %v598 = vpack.c.b16 %v594, %v590
        %v599 = vpack.c.b16 %v595, %v591
        %v600 = vpack.c.b16 %v596, %v592
        %v601 = vpack.c.b16 %v597, %v593
        %v670 = vunpack.c.l.b16 %v522
        %v671 = vunpack.c.h.b16 %v522
        %v672 = vunpack.c.l.b16 %v523
        %v673 = vunpack.c.h.b16 %v523
        %v674 = vunpack.c.l.b16 %v524
        %v675 = vunpack.c.h.b16 %v524
        %v676 = vunpack.c.l.b16 %v525
        %v677 = vunpack.c.h.b16 %v525
        %v678 = vunpack.c.l.b16 %v526
        %v679 = vunpack.c.h.b16 %v526
        %v680 = vunpack.c.l.b16 %v527
        %v681 = vunpack.c.h.b16 %v527
        %v682 = vunpack.c.l.b16 %v528
        %v683 = vunpack.c.h.b16 %v528
        %v684 = vunpack.c.l.b16 %v529
        %v685 = vunpack.c.h.b16 %v529
        %v686 = vunpack.c.l.b16 %v530
        %v687 = vunpack.c.h.b16 %v530
        %v688 = vunpack.c.l.b16 %v531
        %v689 = vunpack.c.h.b16 %v531
        %v690 = vunpack.c.l.b16 %v532
        %v691 = vunpack.c.h.b16 %v532
        %v692 = vunpack.c.l.b16 %v533
        %v693 = vunpack.c.h.b16 %v533
        %v694 = vunpack.c.l.b16 %v534
        %v695 = vunpack.c.h.b16 %v534
        %v696 = vunpack.c.l.b16 %v535
        %v697 = vunpack.c.h.b16 %v535
        %v698 = vunpack.c.l.b16 %v536
        %v699 = vunpack.c.h.b16 %v536
        %v700 = vunpack.c.l.b16 %v537
        %v701 = vunpack.c.h.b16 %v537
        %v702 = vunpack.c.l.b16 %v538
        %v703 = vunpack.c.h.b16 %v538
        %v704 = vunpack.c.l.b16 %v539
        %v705 = vunpack.c.h.b16 %v539
        %v706 = vunpack.c.l.b16 %v540
        %v707 = vunpack.c.h.b16 %v540
        %v708 = vunpack.c.l.b16 %v541
        %v709 = vunpack.c.h.b16 %v541
        %v710 = vunpack.c.l.b16 %v542
        %v711 = vunpack.c.h.b16 %v542
        %v712 = vunpack.c.l.b16 %v543
        %v713 = vunpack.c.h.b16 %v543
        %v714 = vunpack.c.l.b16 %v544
        %v715 = vunpack.c.h.b16 %v544
        %v716 = vunpack.c.l.b16 %v545
        %v717 = vunpack.c.h.b16 %v545
        %v718 = vunpack.c.l.b16 %v546
        %v719 = vunpack.c.h.b16 %v546
        %v720 = vunpack.c.l.b16 %v547
        %v721 = vunpack.c.h.b16 %v547
        %v722 = vunpack.c.l.b16 %v548
        %v723 = vunpack.c.h.b16 %v548
        %v724 = vunpack.c.l.b16 %v549
        %v725 = vunpack.c.h.b16 %v549
        %v726 = vunpack.c.l.b16 %v550
        %v727 = vunpack.c.h.b16 %v550
        %v728 = vunpack.c.l.b16 %v551
        %v729 = vunpack.c.h.b16 %v551
        %v730 = vunpack.c.l.b16 %v552
        %v731 = vunpack.c.h.b16 %v552
        %v732 = vunpack.c.l.b16 %v553
        %v733 = vunpack.c.h.b16 %v553
        %v734 = vunpack.c.l.b16 %v554
        %v735 = vunpack.c.h.b16 %v554
        %v736 = vunpack.c.l.b16 %v555
        %v737 = vunpack.c.h.b16 %v555
        %v738 = vunpack.c.l.b16 %v556
        %v739 = vunpack.c.h.b16 %v556
        %v740 = vunpack.c.l.b16 %v557
        %v741 = vunpack.c.h.b16 %v557
        %v742 = vunpack.c.l.b16 %v558
        %v743 = vunpack.c.h.b16 %v558
        %v744 = vunpack.c.l.b16 %v559
        %v745 = vunpack.c.h.b16 %v559
        %v746 = vunpack.c.l.b16 %v560
        %v747 = vunpack.c.h.b16 %v560
        %v748 = vunpack.c.l.b16 %v561
        %v749 = vunpack.c.h.b16 %v561
        %v750 = vunpack.c.l.b16 %v562
        %v751 = vunpack.c.h.b16 %v562
        %v752 = vunpack.c.l.b16 %v563
        %v753 = vunpack.c.h.b16 %v563
        %v754 = vunpack.c.l.b16 %v564
        %v755 = vunpack.c.h.b16 %v564
        %v756 = vunpack.c.l.b16 %v565
        %v757 = vunpack.c.h.b16 %v565
        %v758 = vunpack.c.l.b16 %v566
        %v759 = vunpack.c.h.b16 %v566
        %v760 = vunpack.c.l.b16 %v567
        %v761 = vunpack.c.h.b16 %v567
        %v762 = vunpack.c.l.b16 %v568
        %v763 = vunpack.c.h.b16 %v568
        %v764 = vunpack.c.l.b16 %v569
        %v765 = vunpack.c.h.b16 %v569
        %v766 = vunpack.c.l.b16 %v570
        %v767 = vunpack.c.h.b16 %v570
        %v768 = vunpack.c.l.b16 %v571
        %v769 = vunpack.c.h.b16 %v571
        %v770 = vunpack.c.l.b16 %v572
        %v771 = vunpack.c.h.b16 %v572
        %v772 = vunpack.c.l.b16 %v573
        %v773 = vunpack.c.h.b16 %v573
        %v774 = vunpack.c.l.b16 %v574
        %v775 = vunpack.c.h.b16 %v574
        %v776 = vunpack.c.l.b16 %v575
        %v777 = vunpack.c.h.b16 %v575
        %v778 = vunpack.c.l.b16 %v576
        %v779 = vunpack.c.h.b16 %v576
        %v780 = vunpack.c.l.b16 %v577
        %v781 = vunpack.c.h.b16 %v577
        %v782 = vunpack.c.l.b16 %v578
        %v783 = vunpack.c.h.b16 %v578
        %v784 = vunpack.c.l.b16 %v579
        %v785 = vunpack.c.h.b16 %v579
        %v786 = vunpack.c.l.b16 %v580
        %v787 = vunpack.c.h.b16 %v580
        %v788 = vunpack.c.l.b16 %v581
        %v789 = vunpack.c.h.b16 %v581
        %v790 = vunpack.c.l.b16 %v582
        %v791 = vunpack.c.h.b16 %v582
        %v792 = vunpack.c.l.b16 %v583
        %v793 = vunpack.c.h.b16 %v583
        %v794 = vunpack.c.l.b16 %v584
        %v795 = vunpack.c.h.b16 %v584
        %v796 = vunpack.c.l.b16 %v585
        %v797 = vunpack.c.h.b16 %v585
        %v798 = vpack.c.b16 %v672, %v670
        %v799 = vpack.c.b16 %v673, %v671
        %v800 = vpack.c.b16 %v676, %v674
        %v801 = vpack.c.b16 %v677, %v675
        %v802 = vpack.c.b16 %v680, %v678
        %v803 = vpack.c.b16 %v681, %v679
        %v804 = vpack.c.b16 %v684, %v682
        %v805 = vpack.c.b16 %v685, %v683
        %v806 = vpack.c.b16 %v688, %v686
        %v807 = vpack.c.b16 %v689, %v687
        %v808 = vpack.c.b16 %v692, %v690
        %v809 = vpack.c.b16 %v693, %v691
        %v810 = vpack.c.b16 %v696, %v694
        %v811 = vpack.c.b16 %v697, %v695
        %v812 = vpack.c.b16 %v700, %v698
        %v813 = vpack.c.b16 %v701, %v699
        %v814 = vpack.c.b16 %v704, %v702
        %v815 = vpack.c.b16 %v705, %v703
        %v816 = vpack.c.b16 %v708, %v706
        %v817 = vpack.c.b16 %v709, %v707
        %v818 = vpack.c.b16 %v712, %v710
        %v819 = vpack.c.b16 %v713, %v711
        %v820 = vpack.c.b16 %v716, %v714
        %v821 = vpack.c.b16 %v717, %v715
        %v822 = vpack.c.b16 %v720, %v718
        %v823 = vpack.c.b16 %v721, %v719
        %v824 = vpack.c.b16 %v724, %v722
        %v825 = vpack.c.b16 %v725, %v723
        %v826 = vpack.c.b16 %v728, %v726
        %v827 = vpack.c.b16 %v729, %v727
        %v828 = vpack.c.b16 %v732, %v730
        %v829 = vpack.c.b16 %v733, %v731
        %v830 = vpack.c.b16 %v736, %v734
        %v831 = vpack.c.b16 %v737, %v735
        %v832 = vpack.c.b16 %v740, %v738
        %v833 = vpack.c.b16 %v741, %v739
        %v834 = vpack.c.b16 %v744, %v742
        %v835 = vpack.c.b16 %v745, %v743
        %v836 = vpack.c.b16 %v748, %v746
        %v837 = vpack.c.b16 %v749, %v747
        %v838 = vpack.c.b16 %v752, %v750
        %v839 = vpack.c.b16 %v753, %v751
        %v840 = vpack.c.b16 %v756, %v754
        %v841 = vpack.c.b16 %v757, %v755
        %v842 = vpack.c.b16 %v760, %v758
        %v843 = vpack.c.b16 %v761, %v759
        %v844 = vpack.c.b16 %v764, %v762
        %v845 = vpack.c.b16 %v765, %v763
        %v846 = vpack.c.b16 %v768, %v766
        %v847 = vpack.c.b16 %v769, %v767
        %v848 = vpack.c.b16 %v772, %v770
        %v849 = vpack.c.b16 %v773, %v771
        %v850 = vpack.c.b16 %v776, %v774
        %v851 = vpack.c.b16 %v777, %v775
        %v852 = vpack.c.b16 %v780, %v778
        %v853 = vpack.c.b16 %v781, %v779
        %v854 = vpack.c.b16 %v784, %v782
        %v855 = vpack.c.b16 %v785, %v783
        %v856 = vpack.c.b16 %v788, %v786
        %v857 = vpack.c.b16 %v789, %v787
        %v858 = vpack.c.b16 %v792, %v790
        %v859 = vpack.c.b16 %v793, %v791
        %v860 = vpack.c.b16 %v796, %v794
        %v861 = vpack.c.b16 %v797, %v795
        %926 = vmatprep.subr.bf16.mxu0 %v813
        %927 = vmatpush1.bf16.msra.mxu0 %v812
        %928 = vmatprep.subr.bf16.mxu0 %v811
        %929 = vmatpush1.bf16.msra.mxu0 %v810
        %930 = vmatprep.subr.bf16.mxu0 %v809
        %931 = vmatpush1.bf16.msra.mxu0 %v808
        %932 = vmatprep.subr.bf16.mxu0 %v807
        %933 = vmatpush1.bf16.msra.mxu0 %v806
        %934 = vmatprep.subr.bf16.mxu0 %v805
        %935 = vmatpush1.bf16.msra.mxu0 %v804
        %936 = vmatprep.subr.bf16.mxu0 %v803
        %937 = vmatpush1.bf16.msra.mxu0 %v802
        %938 = vmatprep.subr.bf16.mxu0 %v801
        %939 = vmatpush1.bf16.msra.mxu0 %v800
        %940 = vmatprep.subr.bf16.mxu0 %v799
        %941 = vmatpush1.bf16.msra.mxu0 %v798
        %942 = vmatprep.subr.bf16.mxu0 %v829
        %943 = vmatpush2.bf16.msra.mxu0 %v828
        %944 = vmatprep.subr.bf16.mxu0 %v827
        %945 = vmatpush2.bf16.msra.mxu0 %v826
        %946 = vmatprep.subr.bf16.mxu0 %v825
        %947 = vmatpush2.bf16.msra.mxu0 %v824
        %948 = vmatprep.subr.bf16.mxu0 %v823
        %949 = vmatpush2.bf16.msra.mxu0 %v822
        %950 = vmatprep.subr.bf16.mxu0 %v821
        %951 = vmatpush2.bf16.msra.mxu0 %v820
        %952 = vmatprep.subr.bf16.mxu0 %v819
        %953 = vmatpush2.bf16.msra.mxu0 %v818
        %954 = vmatprep.subr.bf16.mxu0 %v817
        %955 = vmatpush2.bf16.msra.mxu0 %v816
        %956 = vmatprep.subr.bf16.mxu0 %v815
        %957 = vmatpush2.bf16.msra.mxu0 %v814
        %958 = vmatprep.mubr.bf16.mxu0 %v599
        %959 = vmatmul.mubr.bf16.gmra.mxu0 %v598
        %v960 = vpop.f32.mrf.mxu0
        %v961 = vadd.f32 0.0, %v960
        %v962 = vpop.f32.mrf.mxu0
        %v963 = vadd.f32 0.0, %v962
        %v964 = vpop.f32.mrf.mxu0
        %v965 = vadd.f32 0.0, %v964
        %v966 = vpop.f32.mrf.mxu0
        %v967 = vadd.f32 0.0, %v966
        %968 = vdwg.mxu0
        %969 = vmatprep.subr.bf16.mxu0 %v845
        %970 = vmatpush1.bf16.msra.mxu0 %v844
        %971 = vmatprep.subr.bf16.mxu0 %v843
        %972 = vmatpush1.bf16.msra.mxu0 %v842
        %973 = vmatprep.subr.bf16.mxu0 %v841
        %974 = vmatpush1.bf16.msra.mxu0 %v840
        %975 = vmatprep.subr.bf16.mxu0 %v839
        %976 = vmatpush1.bf16.msra.mxu0 %v838
        %977 = vmatprep.subr.bf16.mxu0 %v837
        %978 = vmatpush1.bf16.msra.mxu0 %v836
        %979 = vmatprep.subr.bf16.mxu0 %v835
        %980 = vmatpush1.bf16.msra.mxu0 %v834
        %981 = vmatprep.subr.bf16.mxu0 %v833
        %982 = vmatpush1.bf16.msra.mxu0 %v832
        %983 = vmatprep.subr.bf16.mxu0 %v831
        %984 = vmatpush1.bf16.msra.mxu0 %v830
        %985 = vmatprep.subr.bf16.mxu0 %v861
        %986 = vmatpush2.bf16.msra.mxu0 %v860
        %987 = vmatprep.subr.bf16.mxu0 %v859
        %988 = vmatpush2.bf16.msra.mxu0 %v858
        %989 = vmatprep.subr.bf16.mxu0 %v857
        %990 = vmatpush2.bf16.msra.mxu0 %v856
        %991 = vmatprep.subr.bf16.mxu0 %v855
        %992 = vmatpush2.bf16.msra.mxu0 %v854
        %993 = vmatprep.subr.bf16.mxu0 %v853
        %994 = vmatpush2.bf16.msra.mxu0 %v852
        %995 = vmatprep.subr.bf16.mxu0 %v851
        %996 = vmatpush2.bf16.msra.mxu0 %v850
        %997 = vmatprep.subr.bf16.mxu0 %v849
        %998 = vmatpush2.bf16.msra.mxu0 %v848
        %999 = vmatprep.subr.bf16.mxu0 %v847
        %1000 = vmatpush2.bf16.msra.mxu0 %v846
        %1001 = vmatprep.mubr.bf16.mxu0 %v601
        %1002 = vmatmul.mubr.bf16.gmra.mxu0 %v600
        %v1003 = vpop.f32.mrf.mxu0
        %v1004 = vadd.f32 %v961, %v1003
        %v1005 = vpop.f32.mrf.mxu0
        %v1006 = vadd.f32 %v963, %v1005
        %v1007 = vpop.f32.mrf.mxu0
        %v1008 = vadd.f32 %v965, %v1007
        %v1009 = vpop.f32.mrf.mxu0
        %v1010 = vadd.f32 %v967, %v1009
        %1011 = vdwg.mxu0
        %v1012 = vadd.f32 %v514, %v1004
        %v1013 = vadd.f32 %v515, %v1006
        %v1014 = vadd.f32 %v516, %v1008
        %v1015 = vadd.f32 %v517, %v1010
        %1016 = vst [vmem:[#allocation2] sm:$0xff] %v1012
        %1017 = vst [vmem:[#allocation2 + $0x8] sm:$0xff] %v1013
        %1018 = vst [vmem:[#allocation2 + $0x10] sm:$0x1] %v1014
        %1019 = vst [vmem:[#allocation2 + $0x18] sm:$0x1] %v1015
        %p1020 = scmp.eq.s32.totalorder %s20, 7
        // Predicated region
        $region94: #{discriminator_forward.8} parent=80 // pred_check
          %p1021 = pneg %p1020
        $region95: #{discriminator_forward.8} parent=80 // pred_check_branch
          %1023 = sbr.rel (%p1021) target = $region97
        $region96: #{discriminator_forward.8} parent=80 // pred_region
          %v1024 = vld [vmem:[#allocation2] sm:$0xff]
          %v1025 = vld [vmem:[#allocation2 + $0x8] sm:$0xff]
          %v1026 = vld [vmem:[#allocation2 + $0x10] sm:$0x1]
          %v1027 = vld [vmem:[#allocation2 + $0x18] sm:$0x1]
          %vm1028 = vcmask 1040384
          %v1029 = vsel %vm1028, %v1026, 0.0
          %v1030 = vadd.f32 %v1024, %v1029
          %v1031 = vrot.slane %v1030, 4
          %v1032 = vadd.f32 %v1030, %v1031
          %v1033 = vrot.slane %v1032, 2
          %v1034 = vadd.f32 %v1032, %v1033
          %v1035 = vrot.slane %v1034, 1
          %v1036 = vadd.f32 %v1034, %v1035
          %v1037 = vsel %vm1028, %v1027, 0.0
          %v1038 = vadd.f32 %v1025, %v1037
          %v1039 = vrot.slane %v1038, 4
          %v1040 = vadd.f32 %v1038, %v1039
          %v1041 = vrot.slane %v1040, 2
          %v1042 = vadd.f32 %v1040, %v1041
          %v1043 = vrot.slane %v1042, 1
          %v1044 = vadd.f32 %v1042, %v1043
          %v1045 = vrcp.pop 9.0
          %v1046 = vmul.f32 %v1036, %v1045
          %v1047 = vmul.f32 %v1044, %v1045
          %v1048 = vsub.f32 %v1024, %v1046
          %v1049 = vsub.f32 %v1025, %v1047
          %v1050 = vsub.f32 %v1026, %v1046
          %v1051 = vsub.f32 %v1027, %v1047
          %v1052 = vmul.f32 %v1048, %v1048
          %v1053 = vmul.f32 %v1049, %v1049
          %v1054 = vmul.f32 %v1050, %v1050
          %v1055 = vmul.f32 %v1051, %v1051
          %v1056 = vsel %vm1028, %v1054, 0.0
          %v1057 = vadd.f32 %v1052, %v1056
          %v1058 = vrot.slane %v1057, 4
          %v1059 = vadd.f32 %v1057, %v1058
          %v1060 = vrot.slane %v1059, 2
          %v1061 = vadd.f32 %v1059, %v1060
          %v1062 = vrot.slane %v1061, 1
          %v1063 = vadd.f32 %v1061, %v1062
          %v1064 = vsel %vm1028, %v1055, 0.0
          %v1065 = vadd.f32 %v1053, %v1064
          %v1066 = vrot.slane %v1065, 4
          %v1067 = vadd.f32 %v1065, %v1066
          %v1068 = vrot.slane %v1067, 2
          %v1069 = vadd.f32 %v1067, %v1068
          %v1070 = vrot.slane %v1069, 1
          %v1071 = vadd.f32 %v1069, %v1070
          %v1072 = vmul.f32 %v1063, %v1045
          %v1073 = vmul.f32 %v1071, %v1045
          %v1074 = vadd.f32 %v1072, 1e-05
          %v1075 = vadd.f32 %v1073, 1e-05
          %v1076 = vrsqrt.pop %v1074
          %v1077 = vrsqrt.pop %v1075
          %v1078 = vmul.f32 %v1048, %v1076
          %v1079 = vmul.f32 %v1049, %v1077
          %v1080 = vmul.f32 %v1050, %v1076
          %v1081 = vmul.f32 %v1051, %v1077
          %vm1082 = vcmp.ge.f32.partialorder %v1078, 0.0
          %vm1083 = vcmp.ge.f32.partialorder %v1079, 0.0
          %vm1084 = vcmp.ge.f32.partialorder %v1080, 0.0
          %vm1085 = vcmp.ge.f32.partialorder %v1081, 0.0
          %v1086 = vmul.f32 %v1078, 0.2
          %v1087 = vmul.f32 %v1079, 0.2
          %v1088 = vmul.f32 %v1080, 0.2
          %v1089 = vmul.f32 %v1081, 0.2
          %v1090 = vsel %vm1082, %v1078, %v1086
          %v1091 = vsel %vm1083, %v1079, %v1087
          %v1092 = vsel %vm1084, %v1080, %v1088
          %v1093 = vsel %vm1085, %v1081, %v1089
          %v1094 = vpack.c.bf16 %v1092, %v1090
          %v1095 = vpack.c.bf16 %v1093, %v1091
          %v1098 = vunpack.c.l.b16 %v1094
          %v1099 = vunpack.c.l.b16 %v1095
          %v1100 = vunpack.c.h.b16 %v1094
          %v1101 = vunpack.c.h.b16 %v1095
          %v1102 = vpack.c.b16 %v1099, %v1098
          %v1103 = vpack.c.b16 %v1101, %v1100
          %1106 = vst [vmem:[%s501] sm:$0xff] %v1102
          %vm1107 = vcmask 1040384
          %vm1108 = vsmask.f32 256
          %vm1109 = vmand %vm1107, %vm1108
          %vm1110 = vcmask 1044484
          %vm1111 = vsmask.f32 4352
          %vm1112 = vmand %vm1110, %vm1111
          %vm1113 = vmor %vm1112, %vm1109
          %v1114 = vld [vmem:[%s501 + $0x8] sm:$0x11]
          %v1115 = vsel %vm1113, %v1103, %v1114
          %1116 = vst [vmem:[%s501 + $0x8] sm:$0x11] %v1115
        $region97: #{discriminator_forward.8} parent=80 // pred_fallthru
          _
        %s1117 = sand.u32 %s98, 1
        %s1118 = sand.u32 %s98, 1
        %s1119 = smul.addr %s1118, 16
        %s1120 = scalar_lea.vmem [#allocation5], %s1119
        // Predicated region
        $region98: #{discriminator_forward.8} parent=80 // pred_check
          %p1121 = pneg %p108
        $region99: #{discriminator_forward.8} parent=80 // pred_check_branch
          %1123 = sbr.rel (%p1121) target = $region101
        $region100: #{discriminator_forward.8} parent=80 // pred_region
          %s1124 = smul.u32 2, %s19
          %s1125 = smul.addr %s18, 8
          %s1126 = sadd.s32 %s1124, %s1125
          %s1127 = smul.addr %s1126, 4
          %s1128 = scalar_lea.vmem %s2, %s1127
          // Predicated region
          $region102: #{discriminator_forward.8} parent=100 // pred_check
            _
          $region103: #{discriminator_forward.8} parent=100 // pred_check_branch
            %1130 = sbr.rel (0) target = $region105
          $region104: #{discriminator_forward.8} parent=100 // pred_region
            // Predicated region
            $region106: #{discriminator_forward.8} parent=104 // pred_check
              _
            $region107: #{discriminator_forward.8} parent=104 // pred_check_branch
              %1132 = sbr.rel (0) target = $region109
            $region108: #{discriminator_forward.8} parent=104 // pred_region
              // Predicated region
              $region121: #{discriminator_forward.8} parent=108 // pred_check
                _
              $region122: #{discriminator_forward.8} parent=108 // pred_check_branch
                %1150 = sbr.rel (0) target = $region124
              $region123: #{discriminator_forward.8} parent=108 // pred_region
                loop: start=0, step=1, limit=1
                $region125: #{discriminator_forward.8} parent=123 // loop_pre_header
                  _
                $region126: #{discriminator_forward.8} parent=123 // loop_header
                  %s1152 = sphi 0, %s1156
                  %p1153 = scmp.ge.s32.totalorder %s1152, 1
                  %s1157 = sphi %s1120, %s1120
                  %s1158 = sphi %s1128, %s1128
                $region127: #{discriminator_forward.8} parent=123 // loop_header_branch
                  %1155 = sbr.rel (%p1153) target = $region131
                $region128: #{discriminator_forward.8} parent=123 // loop_body
                  %v1159 = vld [vmem:[%s1157] sm:$0xff]
                  %1160 = vst [vmem:[%s1158] sm:$0xff] %v1159
                  %v1161 = vld [vmem:[%s1157 + $0x8] sm:$0xff]
                  %1162 = vst [vmem:[%s1158 + $0x10] sm:$0xff] %v1161
                $region129: #{discriminator_forward.8} parent=123 // loop_footer
                  %s1156 = sadd.s32 1, %s1152
                $region130: #{discriminator_forward.8} parent=123 // loop_footer_branch
                  %1151 = sbr.rel target = $region126
                $region131: #{discriminator_forward.8} parent=123 // loop_exit
                  _
              $region124: #{discriminator_forward.8} parent=108 // pred_fallthru
                _
              // Predicated region
              $region132: #{discriminator_forward.8} parent=108 // pred_check
                _
              $region133: #{discriminator_forward.8} parent=108 // pred_check_branch
                %1164 = sbr.rel target = $region135
              $region134: #{discriminator_forward.8} parent=108 // pred_region
                _
              $region135: #{discriminator_forward.8} parent=108 // pred_fallthru
                _
            $region109: #{discriminator_forward.8} parent=104 // pred_fallthru
              _
            // Predicated region
            $region110: #{discriminator_forward.8} parent=104 // pred_check
              _
            $region111: #{discriminator_forward.8} parent=104 // pred_check_branch
              %1134 = sbr.rel target = $region113
            $region112: #{discriminator_forward.8} parent=104 // pred_region
              %s1136 = ssub.s32 256, 1
              loop: start=0, step=1, limit=1
              $region114: #{discriminator_forward.8} parent=112 // loop_pre_header
                _
              $region115: #{discriminator_forward.8} parent=112 // loop_header
                %s1138 = sphi 0, %s1142
                %p1139 = scmp.ge.s32.totalorder %s1138, 1
                %s1143 = sphi %s1120, %s1120
                %s1144 = sphi %s1128, %s1128
              $region116: #{discriminator_forward.8} parent=112 // loop_header_branch
                %1141 = sbr.rel (%p1139) target = $region120
              $region117: #{discriminator_forward.8} parent=112 // loop_body
                %v1145 = vld [vmem:[%s1143] sm:%s1136]
                %1146 = vst [vmem:[%s1144] sm:%s1136] %v1145
                %v1147 = vld [vmem:[%s1143 + $0x8] sm:%s1136]
                %1148 = vst [vmem:[%s1144 + $0x10] sm:%s1136] %v1147
              $region118: #{discriminator_forward.8} parent=112 // loop_footer
                %s1142 = sadd.s32 1, %s1138
              $region119: #{discriminator_forward.8} parent=112 // loop_footer_branch
                %1137 = sbr.rel target = $region115
              $region120: #{discriminator_forward.8} parent=112 // loop_exit
                _
            $region113: #{discriminator_forward.8} parent=104 // pred_fallthru
              _
          $region105: #{discriminator_forward.8} parent=100 // pred_fallthru
            _
          %1165 = vnop
        $region101: #{discriminator_forward.8} parent=80 // pred_fallthru
          _
      $region81: #{discriminator_forward.8} parent=5 // pred_fallthru
        _
      %p1166 = scmp.le.s32.totalorder 2, %s8
      // Predicated region
      $region136: #{discriminator_forward.8} parent=5 // pred_check
        %p1167 = pneg %p1166
      $region137: #{discriminator_forward.8} parent=5 // pred_check_branch
        %1169 = sbr.rel (%p1167) target = $region139
      $region138: #{discriminator_forward.8} parent=5 // pred_region
        %s1170 = ssub.s32 %s8, 2
        // Predicated region
        $region140: #{discriminator_forward.8} parent=138 // pred_check
          %p1171 = pneg %p114
        $region141: #{discriminator_forward.8} parent=138 // pred_check_branch
          %1173 = sbr.rel (%p1171) target = $region143
        $region142: #{discriminator_forward.8} parent=138 // pred_region
          %s1174 = sand.u32 %s99, 1
          %s1175 = sand.u32 %s99, 1
          %s1176 = smul.addr %s1175, 16
          %s1177 = scalar_lea.vmem [#allocation5], %s1176
        $region143: #{discriminator_forward.8} parent=138 // pred_fallthru
          _
      $region139: #{discriminator_forward.8} parent=5 // pred_fallthru
        _
    $region6: #{discriminator_forward.8} parent=1 // loop_footer
      %s12 = sadd.s32 1, %s8
    $region7: #{discriminator_forward.8} parent=1 // loop_footer_branch
      %7 = sbr.rel target = $region3
    $region8: #{discriminator_forward.8} parent=1 // loop_exit
      _

// kernel: discriminator_forward.9
$region0: #{discriminator_forward.9}
  #allocation0 [shape = 'u32[]', space=smem, size = 0x4, offset = 0x4, fixed_abs, tag = 'smem constant byte address 0x4 - core index']
  #allocation1 [shape = 'u32[144,128]{1,0:T(1,128)}', space=vmem, size = 0x12000, scoped, tag = 'internal scratch']
  #allocation2 [shape = 'f32[8,128]{1,0:T(8,128)}', space=vmem, size = 0x1000, scoped, tag = 'scratch operand']
  %s0 = inlined_call_operand.vmem [shape: bf16[8,8192], index: 0, kind: input, shape index: {}]
  %s1 = inlined_call_operand.vmem [shape: bf16[8192,128], index: 1, kind: input, shape index: {}]
  %s2 = inlined_call_operand.vmem [shape: f32[1,128], index: 2, kind: input, shape index: {}]
  %s3 = inlined_call_operand.vmem [shape: f32[8,128], index: 3, kind: output, shape index: {}]
  %s4 = sld [smem:[#allocation0]]
  $region53: #{discriminator_forward.9} parent=0
    _
  %s6 = ssub.s32 1, %s4
  %s7 = scalar_select 0, %s6, %s4
  loop: start=0, step=1, limit=18
  $region2: #{discriminator_forward.9} parent=0 // loop_pre_header
    _
  $region3: #{discriminator_forward.9} parent=0 // loop_header
    %s9 = sphi 0, %s13
    %p10 = scmp.ge.s32.totalorder %s9, 18
    %s16 = sphi 0, %s35
    %s17 = sphi 0, %s31
    %s18 = sphi 0, %s27
    %s19 = sphi 0, %s16
    %s20 = sphi 0, %s17
    %s21 = sphi 0, %s18
    %s22 = sphi 0, %s19
    %s23 = sphi 0, %s20
    %s24 = sphi 0, %s21
    %s40 = sphi 0, %s42
    %s43 = sphi 0, %s40
    %s44 = sphi 0, %s43
    %s60 = sphi 0, %s44
    %s68 = sphi 0, %s70
    %s71 = sphi 0, %s68
    %s72 = sphi 0, %s71
    %s88 = sphi 0, %s72
    %s94 = sphi 0, %s96
    %s97 = sphi 0, %s94
    %s98 = sphi 0, %s97
    %s114 = sphi 0, %s98
    %s122 = sphi 0, %s124
    %s125 = sphi 0, %s122
    %s126 = sphi 0, %s125
    %s142 = sphi 0, %s126
  $region4: #{discriminator_forward.9} parent=0 // loop_header_branch
    %12 = sbr.rel (%p10) target = $region8
  $region5: #{discriminator_forward.9} parent=0 // loop_body
    %s14 = ssub.s32 %s9, 1
    %s15 = ssub.s32 %s9, 2
    %s25 = sadd.s32 1, %s18
    %p26 = scmp.ge.s32.totalorder %s25, 16
    %s27 = scalar_select %p26, 0, %s25
    %s28 = sadd.s32 1, %s17
    %s29 = scalar_select %p26, %s28, %s17
    %p30 = scmp.ge.s32.totalorder %s29, 1
    %s31 = scalar_select %p30, 0, %s29
    %s32 = sadd.s32 1, %s16
    %s33 = scalar_select %p30, %s32, %s16
    %p34 = scmp.ge.s32.totalorder %s33, 1
    %s35 = scalar_select %p34, 0, %s33
    %s36 = ssub.s32 %s16, %s35
    %s37 = ssub.s32 %s18, %s27
    %s38 = sor.u32 %s36, %s37
    %p39 = scmp.eq.s32.totalorder %s38, 0
    %s41 = sadd.s32 %s40, 1
    %s42 = scalar_select %p39, %s40, %s41
    %p45 = pneg %p39
    %p46 = scmp.eq.s32.totalorder %s9, 15
    %p47 = por %p45, %p46
    %p48 = scmp.ne.s32.totalorder %s40, %s43
    %p49 = scmp.eq.s32.totalorder %s9, 0
    %p50 = por %p48, %p49
    %p51 = scmp.ne.s32.totalorder %s40, %s43
    %p52 = scmp.eq.s32.totalorder %s14, 15
    %p53 = por %p51, %p52
    %p54 = scmp.ne.s32.totalorder %s43, %s44
    %p55 = scmp.eq.s32.totalorder %s14, 0
    %p56 = por %p54, %p55
    %p57 = scmp.ne.s32.totalorder %s43, %s44
    %p58 = scmp.eq.s32.totalorder %s15, 15
    %p59 = por %p57, %p58
    %p61 = scmp.ne.s32.totalorder %s44, %s60
    %p62 = scmp.eq.s32.totalorder %s15, 0
    %p63 = por %p61, %p62
    %s64 = ssub.s32 %s18, %s27
    %s65 = ssub.s32 %s17, %s31
    %s66 = sor.u32 %s64, %s65
    %p67 = scmp.eq.s32.totalorder %s66, 0
    %s69 = sadd.s32 %s68, 1
    %s70 = scalar_select %p67, %s68, %s69
    %p73 = pneg %p67
    %p74 = scmp.eq.s32.totalorder %s9, 15
    %p75 = por %p73, %p74
    %p76 = scmp.ne.s32.totalorder %s68, %s71
    %p77 = scmp.eq.s32.totalorder %s9, 0
    %p78 = por %p76, %p77
    %p79 = scmp.ne.s32.totalorder %s68, %s71
    %p80 = scmp.eq.s32.totalorder %s14, 15
    %p81 = por %p79, %p80
    %p82 = scmp.ne.s32.totalorder %s71, %s72
    %p83 = scmp.eq.s32.totalorder %s14, 0
    %p84 = por %p82, %p83
    %p85 = scmp.ne.s32.totalorder %s71, %s72
    %p86 = scmp.eq.s32.totalorder %s15, 15
    %p87 = por %p85, %p86
    %p89 = scmp.ne.s32.totalorder %s72, %s88
    %p90 = scmp.eq.s32.totalorder %s15, 0
    %p91 = por %p89, %p90
    %s92 = ssub.s32 %s17, %s31
    %p93 = scmp.eq.s32.totalorder %s92, 0
    %s95 = sadd.s32 %s94, 1
    %s96 = scalar_select %p93, %s94, %s95
    %p99 = pneg %p93
    %p100 = scmp.eq.s32.totalorder %s9, 15
    %p101 = por %p99, %p100
    %p102 = scmp.ne.s32.totalorder %s94, %s97
    %p103 = scmp.eq.s32.totalorder %s9, 0
    %p104 = por %p102, %p103
    %p105 = scmp.ne.s32.totalorder %s94, %s97
    %p106 = scmp.eq.s32.totalorder %s14, 15
    %p107 = por %p105, %p106
    %p108 = scmp.ne.s32.totalorder %s97, %s98
    %p109 = scmp.eq.s32.totalorder %s14, 0
    %p110 = por %p108, %p109
    %p111 = scmp.ne.s32.totalorder %s97, %s98
    %p112 = scmp.eq.s32.totalorder %s15, 15
    %p113 = por %p111, %p112
    %p115 = scmp.ne.s32.totalorder %s98, %s114
    %p116 = scmp.eq.s32.totalorder %s15, 0
    %p117 = por %p115, %p116
    %s118 = ssub.s32 %s16, %s35
    %s119 = ssub.s32 %s17, %s31
    %s120 = sor.u32 %s118, %s119
    %p121 = scmp.eq.s32.totalorder %s120, 0
    %s123 = sadd.s32 %s122, 1
    %s124 = scalar_select %p121, %s122, %s123
    %p127 = pneg %p121
    %p128 = scmp.eq.s32.totalorder %s9, 15
    %p129 = por %p127, %p128
    %p130 = scmp.ne.s32.totalorder %s122, %s125
    %p131 = scmp.eq.s32.totalorder %s9, 0
    %p132 = por %p130, %p131
    %p133 = scmp.ne.s32.totalorder %s122, %s125
    %p134 = scmp.eq.s32.totalorder %s14, 15
    %p135 = por %p133, %p134
    %p136 = scmp.ne.s32.totalorder %s125, %s126
    %p137 = scmp.eq.s32.totalorder %s14, 0
    %p138 = por %p136, %p137
    %p139 = scmp.ne.s32.totalorder %s125, %s126
    %p140 = scmp.eq.s32.totalorder %s15, 15
    %p141 = por %p139, %p140
    %p143 = scmp.ne.s32.totalorder %s126, %s142
    %p144 = scmp.eq.s32.totalorder %s15, 0
    %p145 = por %p143, %p144
    %p146 = scmp.le.s32.totalorder 1, %s9
    %p147 = scmp.lt.s32.totalorder %s9, 17
    %p148 = pnand %p146, %p147
    %p149 = pneg %p148
    // Predicated region
    $region9: #{discriminator_forward.9} parent=5 // pred_check
      _
    $region10: #{discriminator_forward.9} parent=5 // pred_check_branch
      %151 = sbr.rel (%p148) target = $region12
    $region11: #{discriminator_forward.9} parent=5 // pred_region
      %s152 = ssub.s32 %s9, 1
      // Predicated region
      $region13: #{discriminator_forward.9} parent=11 // pred_check
        %p153 = pneg %p110
      $region14: #{discriminator_forward.9} parent=11 // pred_check_branch
        %155 = sbr.rel (%p153) target = $region16
      $region15: #{discriminator_forward.9} parent=11 // pred_region
        %p156 = scmp.lt.s32.totalorder %s20, 0
        %s157 = scalar_select %p156, %s20, 0
        %s158 = scalar_lea.vmem %s2, %s157
      $region16: #{discriminator_forward.9} parent=11 // pred_fallthru
        _
    $region12: #{discriminator_forward.9} parent=5 // pred_fallthru
      _
    %p159 = scmp.lt.s32.totalorder %s9, 16
    // Predicated region
    $region17: #{discriminator_forward.9} parent=5 // pred_check
      %p160 = pneg %p159
    $region18: #{discriminator_forward.9} parent=5 // pred_check_branch
      %162 = sbr.rel (%p160) target = $region20
    $region19: #{discriminator_forward.9} parent=5 // pred_region
      // Predicated region
      $region21: #{discriminator_forward.9} parent=19 // pred_check
        %p163 = pneg %p50
      $region22: #{discriminator_forward.9} parent=19 // pred_check_branch
        %165 = sbr.rel (%p163) target = $region24
      $region23: #{discriminator_forward.9} parent=19 // pred_region
        %s166 = smul.u32 4, %s18
        %p167 = scmp.lt.s32.totalorder %s16, 0
        %s168 = scalar_select %p167, %s16, 0
        %p169 = scmp.lt.s32.totalorder %s166, 63
        %s170 = scalar_select %p169, %s166, 63
        %s171 = smul.addr %s168, 64
        %s172 = sadd.s32 %s170, %s171
        %s173 = smul.addr %s172, 4
        %s174 = scalar_lea.vmem %s0, %s173
        %s175 = smul.u32 4, %s18
      $region24: #{discriminator_forward.9} parent=19 // pred_fallthru
        _
      // Predicated region
      $region25: #{discriminator_forward.9} parent=19 // pred_check
        %p176 = pneg %p78
      $region26: #{discriminator_forward.9} parent=19 // pred_check_branch
        %178 = sbr.rel (%p176) target = $region28
      $region27: #{discriminator_forward.9} parent=19 // pred_region
        %s179 = smul.u32 64, %s18
        %p180 = scmp.lt.s32.totalorder %s179, 1023
        %s181 = scalar_select %p180, %s179, 1023
        %p182 = scmp.lt.s32.totalorder %s17, 0
        %s183 = scalar_select %p182, %s17, 0
        %s184 = sadd.s32 %s183, %s181
        %s185 = smul.addr %s184, 4
        %s186 = scalar_lea.vmem %s1, %s185
        %s187 = smul.u32 64, %s18
      $region28: #{discriminator_forward.9} parent=19 // pred_fallthru
        _
    $region20: #{discriminator_forward.9} parent=5 // pred_fallthru
      _
    %p188 = scmp.le.s32.totalorder 1, %s9
    %p189 = scmp.lt.s32.totalorder %s9, 17
    %p190 = pnand %p188, %p189
    %p191 = pneg %p190
    // Predicated region
    $region29: #{discriminator_forward.9} parent=5 // pred_check
      _
    $region30: #{discriminator_forward.9} parent=5 // pred_check_branch
      %193 = sbr.rel (%p190) target = $region32
    $region31: #{discriminator_forward.9} parent=5 // pred_region
      %s194 = ssub.s32 %s9, 1
      %s195 = smul.u32 4, %s21
      %p196 = scmp.lt.s32.totalorder %s19, 0
      %s197 = scalar_select %p196, %s19, 0
      %p198 = scmp.lt.s32.totalorder %s195, 63
      %s199 = scalar_select %p198, %s195, 63
      %s200 = smul.addr %s197, 64
      %s201 = sadd.s32 %s199, %s200
      %s202 = smul.addr %s201, 4
      %s203 = scalar_lea.vmem %s0, %s202
      %p204 = pneg %p56
      %p205 = pneg %p53
      %s206 = smul.u32 64, %s21
      %p207 = scmp.lt.s32.totalorder %s206, 1023
      %s208 = scalar_select %p207, %s206, 1023
      %p209 = scmp.lt.s32.totalorder %s20, 0
      %s210 = scalar_select %p209, %s20, 0
      %s211 = sadd.s32 %s210, %s208
      %s212 = smul.addr %s211, 4
      %s213 = scalar_lea.vmem %s1, %s212
      %p214 = pneg %p84
      %p215 = pneg %p81
      %p216 = scmp.lt.s32.totalorder %s20, 0
      %s217 = scalar_select %p216, %s20, 0
      %s218 = scalar_lea.vmem %s2, %s217
      %p219 = pneg %p110
      %p220 = pneg %p107
      %p221 = pneg %p138
      %p222 = pneg %p135
      %p223 = scmp.lt.s32.totalorder %s19, 0
      %s224 = scalar_select %p223, %s19, 0
      %p225 = scmp.lt.s32.totalorder %s20, 0
      %s226 = scalar_select %p225, %s20, 0
      %s227 = sadd.s32 %s226, %s224
      %s228 = smul.addr %s227, 8
      %s229 = scalar_lea.vmem %s3, %s228
      %s230 = smul.u32 4, %s21
      %p231 = scmp.lt.s32.totalorder %s19, 0
      %s232 = scalar_select %p231, %s19, 0
      %p233 = scmp.lt.s32.totalorder %s230, 63
      %s234 = scalar_select %p233, %s230, 63
      %s235 = smul.addr %s232, 64
      %s236 = sadd.s32 %s234, %s235
      %s237 = smul.addr %s236, 4
      %s238 = scalar_lea.vmem %s0, %s237
      %s239 = smul.u32 4, %s21
      %s240 = smul.u32 64, %s21
      %p241 = scmp.lt.s32.totalorder %s240, 1023
      %s242 = scalar_select %p241, %s240, 1023
      %p243 = scmp.lt.s32.totalorder %s20, 0
      %s244 = scalar_select %p243, %s20, 0
      %s245 = sadd.s32 %s244, %s242
      %s246 = smul.addr %s245, 4
      %s247 = scalar_lea.vmem %s1, %s246
      %s248 = smul.u32 64, %s21
      %p249 = scmp.lt.s32.totalorder %s20, 0
      %s250 = scalar_select %p249, %s20, 0
      %s251 = scalar_lea.vmem %s2, %s250
      %p252 = scmp.lt.s32.totalorder %s19, 0
      %s253 = scalar_select %p252, %s19, 0
      %p254 = scmp.lt.s32.totalorder %s20, 0
      %s255 = scalar_select %p254, %s20, 0
      %s256 = sadd.s32 %s255, %s253
      %s257 = smul.addr %s256, 8
      %s258 = scalar_lea.vmem %s3, %s257
      %p260 = scmp.eq.s32.totalorder %s21, 0
      // Predicated region
      $region33: #{discriminator_forward.9} parent=31 // pred_check
        %p261 = pneg %p260
      $region34: #{discriminator_forward.9} parent=31 // pred_check_branch
        %263 = sbr.rel (%p261) target = $region36
      $region35: #{discriminator_forward.9} parent=31 // pred_region
        %264 = vst [vmem:[#allocation2] sm:$0xff] 0.0
      $region36: #{discriminator_forward.9} parent=31 // pred_fallthru
        _
      %v265 = vld [vmem:[#allocation2] sm:$0xff]
      %v266 = vld [vmem:[%s238] sm:$0xff]
      %v267 = vld [vmem:[%s238 + $0x8] sm:$0xff]
      %v268 = vld [vmem:[%s247] sm:$0xf]
      %v269 = vld [vmem:[%s247 + $0x4] sm:$0xf]
      %v270 = vld [vmem:[%s247 + $0x8] sm:$0xf]
      %v271 = vld [vmem:[%s247 + $0xc] sm:$0xf]
      %v272 = vld [vmem:[%s247 + $0x10] sm:$0xf]
      %v273 = vld [vmem:[%s247 + $0x14] sm:$0xf]
      %v274 = vld [vmem:[%s247 + $0x18] sm:$0xf]
      %v275 = vld [vmem:[%s247 + $0x1c] sm:$0xf]
      %v276 = vld [vmem:[%s247 + $0x20] sm:$0xf]
      %v277 = vld [vmem:[%s247 + $0x24] sm:$0xf]
      %v278 = vld [vmem:[%s247 + $0x28] sm:$0xf]
      %v279 = vld [vmem:[%s247 + $0x2c] sm:$0xf]
      %v280 = vld [vmem:[%s247 + $0x30] sm:$0xf]
      %v281 = vld [vmem:[%s247 + $0x34] sm:$0xf]
      %v282 = vld [vmem:[%s247 + $0x38] sm:$0xf]
      %v283 = vld [vmem:[%s247 + $0x3c] sm:$0xf]
      %v284 = vld [vmem:[%s247 + $0x40] sm:$0xf]
      %v285 = vld [vmem:[%s247 + $0x44] sm:$0xf]
      %v286 = vld [vmem:[%s247 + $0x48] sm:$0xf]
      %v287 = vld [vmem:[%s247 + $0x4c] sm:$0xf]
      %v288 = vld [vmem:[%s247 + $0x50] sm:$0xf]
      %v289 = vld [vmem:[%s247 + $0x54] sm:$0xf]
      %v290 = vld [vmem:[%s247 + $0x58] sm:$0xf]
      %v291 = vld [vmem:[%s247 + $0x5c] sm:$0xf]
      %v292 = vld [vmem:[%s247 + $0x60] sm:$0xf]
      %v293 = vld [vmem:[%s247 + $0x64] sm:$0xf]
      %v294 = vld [vmem:[%s247 + $0x68] sm:$0xf]
      %v295 = vld [vmem:[%s247 + $0x6c] sm:$0xf]
      %v296 = vld [vmem:[%s247 + $0x70] sm:$0xf]
      %v297 = vld [vmem:[%s247 + $0x74] sm:$0xf]
      %v298 = vld [vmem:[%s247 + $0x78] sm:$0xf]
      %v299 = vld [vmem:[%s247 + $0x7c] sm:$0xf]
      %v300 = vld [vmem:[%s247 + $0x80] sm:$0xf]
      %v301 = vld [vmem:[%s247 + $0x84] sm:$0xf]
      %v302 = vld [vmem:[%s247 + $0x88] sm:$0xf]
      %v303 = vld [vmem:[%s247 + $0x8c] sm:$0xf]
      %v304 = vld [vmem:[%s247 + $0x90] sm:$0xf]
      %v305 = vld [vmem:[%s247 + $0x94] sm:$0xf]
      %v306 = vld [vmem:[%s247 + $0x98] sm:$0xf]
      %v307 = vld [vmem:[%s247 + $0x9c] sm:$0xf]
      %v308 = vld [vmem:[%s247 + $0xa0] sm:$0xf]
      %v309 = vld [vmem:[%s247 + $0xa4] sm:$0xf]
      %v310 = vld [vmem:[%s247 + $0xa8] sm:$0xf]
      %v311 = vld [vmem:[%s247 + $0xac] sm:$0xf]
      %v312 = vld [vmem:[%s247 + $0xb0] sm:$0xf]
      %v313 = vld [vmem:[%s247 + $0xb4] sm:$0xf]
      %v314 = vld [vmem:[%s247 + $0xb8] sm:$0xf]
      %v315 = vld [vmem:[%s247 + $0xbc] sm:$0xf]
      %v316 = vld [vmem:[%s247 + $0xc0] sm:$0xf]
      %v317 = vld [vmem:[%s247 + $0xc4] sm:$0xf]
      %v318 = vld [vmem:[%s247 + $0xc8] sm:$0xf]
      %v319 = vld [vmem:[%s247 + $0xcc] sm:$0xf]
      %v320 = vld [vmem:[%s247 + $0xd0] sm:$0xf]
      %v321 = vld [vmem:[%s247 + $0xd4] sm:$0xf]
      %v322 = vld [vmem:[%s247 + $0xd8] sm:$0xf]
      %v323 = vld [vmem:[%s247 + $0xdc] sm:$0xf]
      %v324 = vld [vmem:[%s247 + $0xe0] sm:$0xf]
      %v325 = vld [vmem:[%s247 + $0xe4] sm:$0xf]
      %v326 = vld [vmem:[%s247 + $0xe8] sm:$0xf]
      %v327 = vld [vmem:[%s247 + $0xec] sm:$0xf]
      %v328 = vld [vmem:[%s247 + $0xf0] sm:$0xf]
      %v329 = vld [vmem:[%s247 + $0xf4] sm:$0xf]
      %v330 = vld [vmem:[%s247 + $0xf8] sm:$0xf]
      %v331 = vld [vmem:[%s247 + $0xfc] sm:$0xf]
      %v334 = vunpack.c.l.b16 %v266
      %v335 = vunpack.c.h.b16 %v266
      %v336 = vunpack.c.l.b16 %v267
      %v337 = vunpack.c.h.b16 %v267
      %v338 = vpack.c.b16 %v334, %v334
      %v339 = vpack.c.b16 %v335, %v335
      %v340 = vpack.c.b16 %v336, %v336
      %v341 = vpack.c.b16 %v337, %v337
      %v410 = vunpack.c.l.b16 %v268
      %v411 = vunpack.c.l.b16 %v269
      %v412 = vunpack.c.l.b16 %v270
      %v413 = vunpack.c.l.b16 %v271
      %v414 = vunpack.c.l.b16 %v272
      %v415 = vunpack.c.l.b16 %v273
      %v416 = vunpack.c.l.b16 %v274
      %v417 = vunpack.c.l.b16 %v275
      %v418 = vunpack.c.l.b16 %v276
      %v419 = vunpack.c.l.b16 %v277
      %v420 = vunpack.c.l.b16 %v278
      %v421 = vunpack.c.l.b16 %v279
      %v422 = vunpack.c.l.b16 %v280
      %v423 = vunpack.c.l.b16 %v281
      %v424 = vunpack.c.l.b16 %v282
      %v425 = vunpack.c.l.b16 %v283
      %v426 = vunpack.c.l.b16 %v284
      %v427 = vunpack.c.l.b16 %v285
      %v428 = vunpack.c.l.b16 %v286
      %v429 = vunpack.c.l.b16 %v287
      %v430 = vunpack.c.l.b16 %v288
      %v431 = vunpack.c.l.b16 %v289
      %v432 = vunpack.c.l.b16 %v290
      %v433 = vunpack.c.l.b16 %v291
      %v434 = vunpack.c.l.b16 %v292
      %v435 = vunpack.c.l.b16 %v293
      %v436 = vunpack.c.l.b16 %v294
      %v437 = vunpack.c.l.b16 %v295
      %v438 = vunpack.c.l.b16 %v296
      %v439 = vunpack.c.l.b16 %v297
      %v440 = vunpack.c.l.b16 %v298
      %v441 = vunpack.c.l.b16 %v299
      %v442 = vunpack.c.l.b16 %v300
      %v443 = vunpack.c.l.b16 %v301
      %v444 = vunpack.c.l.b16 %v302
      %v445 = vunpack.c.l.b16 %v303
      %v446 = vunpack.c.l.b16 %v304
      %v447 = vunpack.c.l.b16 %v305
      %v448 = vunpack.c.l.b16 %v306
      %v449 = vunpack.c.l.b16 %v307
      %v450 = vunpack.c.l.b16 %v308
      %v451 = vunpack.c.l.b16 %v309
      %v452 = vunpack.c.l.b16 %v310
      %v453 = vunpack.c.l.b16 %v311
      %v454 = vunpack.c.l.b16 %v312
      %v455 = vunpack.c.l.b16 %v313
      %v456 = vunpack.c.l.b16 %v314
      %v457 = vunpack.c.l.b16 %v315
      %v458 = vunpack.c.l.b16 %v316
      %v459 = vunpack.c.l.b16 %v317
      %v460 = vunpack.c.l.b16 %v318
      %v461 = vunpack.c.l.b16 %v319
      %v462 = vunpack.c.l.b16 %v320
      %v463 = vunpack.c.l.b16 %v321
      %v464 = vunpack.c.l.b16 %v322
      %v465 = vunpack.c.l.b16 %v323
      %v466 = vunpack.c.l.b16 %v324
      %v467 = vunpack.c.l.b16 %v325
      %v468 = vunpack.c.l.b16 %v326
      %v469 = vunpack.c.l.b16 %v327
      %v470 = vunpack.c.l.b16 %v328
      %v471 = vunpack.c.l.b16 %v329
      %v472 = vunpack.c.l.b16 %v330
      %v473 = vunpack.c.l.b16 %v331
      %v474 = vpack.c.b16 %v411, %v410
      %v475 = vpack.c.b16 %v413, %v412
      %v476 = vpack.c.b16 %v415, %v414
      %v477 = vpack.c.b16 %v417, %v416
      %v478 = vpack.c.b16 %v419, %v418
      %v479 = vpack.c.b16 %v421, %v420
      %v480 = vpack.c.b16 %v423, %v422
      %v481 = vpack.c.b16 %v425, %v424
      %v482 = vpack.c.b16 %v427, %v426
      %v483 = vpack.c.b16 %v429, %v428
      %v484 = vpack.c.b16 %v431, %v430
      %v485 = vpack.c.b16 %v433, %v432
      %v486 = vpack.c.b16 %v435, %v434
      %v487 = vpack.c.b16 %v437, %v436
      %v488 = vpack.c.b16 %v439, %v438
      %v489 = vpack.c.b16 %v441, %v440
      %v490 = vpack.c.b16 %v443, %v442
      %v491 = vpack.c.b16 %v445, %v444
      %v492 = vpack.c.b16 %v447, %v446
      %v493 = vpack.c.b16 %v449, %v448
      %v494 = vpack.c.b16 %v451, %v450
      %v495 = vpack.c.b16 %v453, %v452
      %v496 = vpack.c.b16 %v455, %v454
      %v497 = vpack.c.b16 %v457, %v456
      %v498 = vpack.c.b16 %v459, %v458
      %v499 = vpack.c.b16 %v461, %v460
      %v500 = vpack.c.b16 %v463, %v462
      %v501 = vpack.c.b16 %v465, %v464
      %v502 = vpack.c.b16 %v467, %v466
      %v503 = vpack.c.b16 %v469, %v468
      %v504 = vpack.c.b16 %v471, %v470
      %v505 = vpack.c.b16 %v473, %v472
      %538 = vmatprep.subr.bf16.mxu0 0
      %539 = vmatpush1.bf16.msra.mxu0 %v481
      %540 = vmatprep.subr.bf16.mxu0 0
      %541 = vmatpush1.bf16.msra.mxu0 %v480
      %542 = vmatprep.subr.bf16.mxu0 0
      %543 = vmatpush1.bf16.msra.mxu0 %v479
      %544 = vmatprep.subr.bf16.mxu0 0
      %545 = vmatpush1.bf16.msra.mxu0 %v478
      %546 = vmatprep.subr.bf16.mxu0 0
      %547 = vmatpush1.bf16.msra.mxu0 %v477
      %548 = vmatprep.subr.bf16.mxu0 0
      %549 = vmatpush1.bf16.msra.mxu0 %v476
      %550 = vmatprep.subr.bf16.mxu0 0
      %551 = vmatpush1.bf16.msra.mxu0 %v475
      %552 = vmatprep.subr.bf16.mxu0 0
      %553 = vmatpush1.bf16.msra.mxu0 %v474
      %554 = vmatprep.subr.bf16.mxu0 0
      %555 = vmatpush2.bf16.msra.mxu0 %v489
      %556 = vmatprep.subr.bf16.mxu0 0
      %557 = vmatpush2.bf16.msra.mxu0 %v488
      %558 = vmatprep.subr.bf16.mxu0 0
      %559 = vmatpush2.bf16.msra.mxu0 %v487
      %560 = vmatprep.subr.bf16.mxu0 0
      %561 = vmatpush2.bf16.msra.mxu0 %v486
      %562 = vmatprep.subr.bf16.mxu0 0
      %563 = vmatpush2.bf16.msra.mxu0 %v485
      %564 = vmatprep.subr.bf16.mxu0 0
      %565 = vmatpush2.bf16.msra.mxu0 %v484
      %566 = vmatprep.subr.bf16.mxu0 0
      %567 = vmatpush2.bf16.msra.mxu0 %v483
      %568 = vmatprep.subr.bf16.mxu0 0
      %569 = vmatpush2.bf16.msra.mxu0 %v482
      %570 = vmatprep.mubr.bf16.mxu0 %v339
      %571 = vmatmul.mubr.bf16.gmra.mxu0 %v338
      %v572 = vpop.f32.mrf.mxu0
      %v573 = vadd.f32 0.0, %v572
      %v574 = vpop.f32.mrf.mxu0
      %v575 = vpop.f32.mrf.mxu0
      %v576 = vpop.f32.mrf.mxu0
      %577 = vdwg.mxu0
      %578 = vmatprep.subr.bf16.mxu0 0
      %579 = vmatpush1.bf16.msra.mxu0 %v497
      %580 = vmatprep.subr.bf16.mxu0 0
      %581 = vmatpush1.bf16.msra.mxu0 %v496
      %582 = vmatprep.subr.bf16.mxu0 0
      %583 = vmatpush1.bf16.msra.mxu0 %v495
      %584 = vmatprep.subr.bf16.mxu0 0
      %585 = vmatpush1.bf16.msra.mxu0 %v494
      %586 = vmatprep.subr.bf16.mxu0 0
      %587 = vmatpush1.bf16.msra.mxu0 %v493
      %588 = vmatprep.subr.bf16.mxu0 0
      %589 = vmatpush1.bf16.msra.mxu0 %v492
      %590 = vmatprep.subr.bf16.mxu0 0
      %591 = vmatpush1.bf16.msra.mxu0 %v491
      %592 = vmatprep.subr.bf16.mxu0 0
      %593 = vmatpush1.bf16.msra.mxu0 %v490
      %594 = vmatprep.subr.bf16.mxu0 0
      %595 = vmatpush2.bf16.msra.mxu0 %v505
      %596 = vmatprep.subr.bf16.mxu0 0
      %597 = vmatpush2.bf16.msra.mxu0 %v504
      %598 = vmatprep.subr.bf16.mxu0 0
      %599 = vmatpush2.bf16.msra.mxu0 %v503
      %600 = vmatprep.subr.bf16.mxu0 0
      %601 = vmatpush2.bf16.msra.mxu0 %v502
      %602 = vmatprep.subr.bf16.mxu0 0
      %603 = vmatpush2.bf16.msra.mxu0 %v501
      %604 = vmatprep.subr.bf16.mxu0 0
      %605 = vmatpush2.bf16.msra.mxu0 %v500
      %606 = vmatprep.subr.bf16.mxu0 0
      %607 = vmatpush2.bf16.msra.mxu0 %v499
      %608 = vmatprep.subr.bf16.mxu0 0
      %609 = vmatpush2.bf16.msra.mxu0 %v498
      %610 = vmatprep.mubr.bf16.mxu0 %v341
      %611 = vmatmul.mubr.bf16.gmra.mxu0 %v340
      %v612 = vpop.f32.mrf.mxu0
      %v613 = vadd.f32 %v573, %v612
      %v614 = vpop.f32.mrf.mxu0
      %v615 = vpop.f32.mrf.mxu0
      %v616 = vpop.f32.mrf.mxu0
      %617 = vdwg.mxu0
      %v618 = vadd.f32 %v265, %v613
      %619 = vst [vmem:[#allocation2] sm:$0xff] %v618
      %p620 = scmp.eq.s32.totalorder %s21, 15
      // Predicated region
      $region37: #{discriminator_forward.9} parent=31 // pred_check
        %p621 = pneg %p620
      $region38: #{discriminator_forward.9} parent=31 // pred_check_branch
        %623 = sbr.rel (%p621) target = $region40
      $region39: #{discriminator_forward.9} parent=31 // pred_region
        %v624 = vld [vmem:[#allocation2] sm:$0xff]
        %v625 = vld [vmem:[%s251] sm:$0x1]
        %v627 = vlaneseq
        %v628 = vshrl.u32 %v627, 7
        %v629 = vsub.s32 0, %v628
        %v630 = vrot.slane %v625, %v629
        %v632 = vadd.f32 %v624, %v630
        %633 = vst [vmem:[%s258] sm:$0xff] %v632
      $region40: #{discriminator_forward.9} parent=31 // pred_fallthru
        _
      %p634 = scmp.lt.s32.totalorder %s19, 0
      %s635 = scalar_select %p634, %s19, 0
      %p636 = scmp.lt.s32.totalorder %s20, 0
      %s637 = scalar_select %p636, %s20, 0
      %s638 = sadd.s32 %s637, %s635
      %s639 = smul.addr %s638, 8
      %s640 = scalar_lea.vmem %s3, %s639
      // Predicated region
      $region41: #{discriminator_forward.9} parent=31 // pred_check
        %p641 = pneg %p135
      $region42: #{discriminator_forward.9} parent=31 // pred_check_branch
        %643 = sbr.rel (%p641) target = $region44
      $region43: #{discriminator_forward.9} parent=31 // pred_region
        _
      $region44: #{discriminator_forward.9} parent=31 // pred_fallthru
        _
      // Predicated region
      $region45: #{discriminator_forward.9} parent=31 // pred_check
        %p644 = pneg %p135
      $region46: #{discriminator_forward.9} parent=31 // pred_check_branch
        %646 = sbr.rel (%p644) target = $region48
      $region47: #{discriminator_forward.9} parent=31 // pred_region
        %p647 = scmp.lt.s32.totalorder %s19, 0
        %s648 = scalar_select %p647, %s19, 0
        %p649 = scmp.lt.s32.totalorder %s20, 0
        %s650 = scalar_select %p649, %s20, 0
        %s651 = sadd.s32 %s650, %s648
        %s652 = smul.addr %s651, 8
        %s653 = scalar_lea.vmem %s3, %s652
      $region48: #{discriminator_forward.9} parent=31 // pred_fallthru
        _
    $region32: #{discriminator_forward.9} parent=5 // pred_fallthru
      _
    %p654 = scmp.le.s32.totalorder 2, %s9
    // Predicated region
    $region49: #{discriminator_forward.9} parent=5 // pred_check
      %p655 = pneg %p654
    $region50: #{discriminator_forward.9} parent=5 // pred_check_branch
      %657 = sbr.rel (%p655) target = $region52
    $region51: #{discriminator_forward.9} parent=5 // pred_region
      %s658 = ssub.s32 %s9, 2
    $region52: #{discriminator_forward.9} parent=5 // pred_fallthru
      _
  $region6: #{discriminator_forward.9} parent=0 // loop_footer
    %s13 = sadd.s32 1, %s9
  $region7: #{discriminator_forward.9} parent=0 // loop_footer_branch
    %8 = sbr.rel target = $region3
  $region8: #{discriminator_forward.9} parent=0 // loop_exit
    _

</llo_original>
